<compile_context>
chip_gen: v6e
topology: v6e:2x2x1
jax: 0.10.0
libtpu: 0.0.40
codegen_flags: <defaults>
</compile_context>

<pallas_src>
import math
import functools

import jax
import jax.numpy as jnp
from jax import lax
from jax.experimental import pallas as pl
from jax.experimental.pallas import tpu as pltpu


# ------------------------- VMEM budgeting / tiling --------------------------

def _vmem_caps():
    """Per-generation working-set budget and scoped VMEM limit for pallas_call."""
    try:
        cap = int(pltpu.get_tpu_info().vmem_capacity_bytes)   # 128 MiB v5e/v6e, 64 MiB v7x
    except Exception:
        cap = 64 * 1024 * 1024                                # conservative default (v7x)
    budget = min(int(cap * 0.60), 96 * 1024 * 1024)
    limit = min(int(cap * 0.85), 112 * 1024 * 1024)
    return budget, limit


_VMEM_BUDGET, _VMEM_LIMIT = _vmem_caps()

_ROW_TILES = (256, 128, 64, 32, 16, 8)     # sublane-dim tile candidates
_COL_TILES = (512, 256, 128)               # lane-dim tile candidates (MXU friendly)
_FF_TILES = (512, 256, 128)                # d_ff tile candidates
_ATTN_TILES = (128, 64, 32, 16, 8)         # q/kv tiles (keeps f32 score block modest)


def _divs(dim, cands):
    out = [c for c in cands if c <= dim and dim % c == 0]
    return out or [dim]


def _pick_tile(dim, cands):
    return _divs(dim, cands)[0]


def _mm_tiles(M, K, N, x_bytes, out_bytes):
    """Pick (tm, tn) for the K-resident matmul kernels within the VMEM budget."""
    tms, tns = _divs(M, _ROW_TILES), _divs(N, _COL_TILES)
    for tm in tms:
        for tn in tns:
            est = (2 * tm * K * x_bytes              # x blocks (double buffered)
                   + 2 * K * tn * 2                  # bf16 weight blocks
                   + 2 * tm * tn * (out_bytes + 4)   # out (+ residual) blocks
                   + tm * K * 2)                     # bf16 xn scratch (rmsnorm variant)
            if est <= _VMEM_BUDGET:
                return tm, tn
    return tms[-1], tns[-1]


def _ffn_tiles(M, D, F):
    tms, tfs = _divs(M, _ROW_TILES), _divs(F, _FF_TILES)
    for tm in tms:
        for tf in tfs:
            est = (4 * tm * D * 4                    # x + out blocks (double buffered, f32)
                   + tm * D * 4 + tm * D * 2         # acc (f32) + xn (bf16) scratch
                   + 6 * D * tf * 2)                 # w1/w3/w2 bf16 tiles (double buffered)
            if est <= _VMEM_BUDGET:
                return tm, tf
    return tms[-1], tfs[-1]


# ----------------------- fused RMSNorm + matmul kernel -----------------------

def _rmsnorm_matmul_kernel(x_ref, g_ref, w_ref, o_ref, xn_ref, *, eps):
    # RMSNorm is computed once per row block (j == 0) and cached in a bf16 VMEM
    # scratch; every output tile along j reuses it (j axis is "arbitrary").
    @pl.when(pl.program_id(1) == 0)
    def _():
        x = x_ref[...].astype(jnp.float32)
        inv = lax.rsqrt(jnp.mean(x * x, axis=-1, keepdims=True) + eps)   # EUP rsqrt
        xn_ref[...] = (x * inv * g_ref[...]).astype(jnp.bfloat16)

    o_ref[...] = jnp.dot(
        xn_ref[...], w_ref[...], preferred_element_type=jnp.float32
    ).astype(o_ref.dtype)


def rmsnorm_matmul(x, gain, w, *, eps=1e-5, out_dtype=jnp.bfloat16):
    """RMSNorm(x) @ w.  x: [M, D] f32, gain: [D] f32, w: [D, N] bf16 -> [M, N]."""
    M, D = x.shape
    _, N = w.shape
    tm, tn = _mm_tiles(M, D, N, 4, jnp.dtype(out_dtype).itemsize)
    return pl.pallas_call(
        functools.partial(_rmsnorm_matmul_kernel, eps=eps),
        out_shape=jax.ShapeDtypeStruct((M, N), out_dtype),
        grid=(M // tm, N // tn),
        in_specs=[
            pl.BlockSpec((tm, D), lambda i, j: (i, 0)),     # x rows (fetched once per i)
            pl.BlockSpec((1, D), lambda i, j: (0, 0)),      # gain
            pl.BlockSpec((D, tn), lambda i, j: (0, j)),     # weight column tile
        ],
        out_specs=pl.BlockSpec((tm, tn), lambda i, j: (i, j)),
        scratch_shapes=[pltpu.VMEM((tm, D), jnp.bfloat16)],
        compiler_params=pltpu.CompilerParams(
            dimension_semantics=("parallel", "arbitrary"),
            vmem_limit_bytes=_VMEM_LIMIT),
    )(x, gain.reshape(1, D), w)


# --------------------- matmul with fused residual add ------------------------

def _matmul_residual_kernel(x_ref, w_ref, r_ref, o_ref):
    o_ref[...] = (
        jnp.dot(x_ref[...], w_ref[...], preferred_element_type=jnp.float32)
        + r_ref[...]
    ).astype(o_ref.dtype)


def matmul_residual(x, w, residual):
    """x @ w + residual.  x: [M, K] bf16, w: [K, N] bf16, residual: [M, N] f32."""
    M, K = x.shape
    _, N = w.shape
    tm, tn = _mm_tiles(M, K, N, x.dtype.itemsize, 4)
    # TODO(synk): re-introduce K tiling (3-D grid + f32 accumulator) if K ever grows
    # past what a (tm, K) + (K, tn) resident working set allows.
    return pl.pallas_call(
        _matmul_residual_kernel,
        out_shape=jax.ShapeDtypeStruct((M, N), jnp.float32),
        grid=(M // tm, N // tn),
        in_specs=[
            pl.BlockSpec((tm, K), lambda i, j: (i, 0)),
            pl.BlockSpec((K, tn), lambda i, j: (0, j)),
            pl.BlockSpec((tm, tn), lambda i, j: (i, j)),
        ],
        out_specs=pl.BlockSpec((tm, tn), lambda i, j: (i, j)),
        compiler_params=pltpu.CompilerParams(
            dimension_semantics=("parallel", "parallel"),
            vmem_limit_bytes=_VMEM_LIMIT),
    )(x, w, residual)


# ------------- causal flash attention fused with head split + RoPE -----------

def _attention_kernel(q_ref, k_ref, v_ref, sq_ref, cq_ref, sk_ref, ck_ref, o_ref,
                      q_scr, m_scr, l_scr, acc_scr, *, num_heads, d_head):
    qi = pl.program_id(1)
    kv = pl.program_id(2)
    half = d_head // 2

    def rope(xh, sin_sgn, cos2):
        # rotate-half RoPE on a per-head (evens | odds) column layout:
        #   out = x * [cos|cos] + roll(x, Dh/2) * [-sin|sin]
        x32 = xh.astype(jnp.float32)
        rot = pltpu.roll(x32, shift=half, axis=1)            # XLU, off the VALU
        return (x32 * cos2 + rot * sin_sgn).astype(jnp.bfloat16)

    @pl.when(kv == 0)
    def _():
        m_scr[...] = jnp.full_like(m_scr, -jnp.inf)
        l_scr[...] = jnp.zeros_like(l_scr)
        acc_scr[...] = jnp.zeros_like(acc_scr)
        sin_q, cos_q = sq_ref[...], cq_ref[...]
        for h in range(num_heads):
            # 1/sqrt(Dh) scale was folded into wq at init; rotate + cast once per row
            # block and cache in VMEM so the kv loop never redoes it.
            q_scr[h] = rope(q_ref[0, :, h * d_head:(h + 1) * d_head], sin_q, cos_q)

    @pl.when(kv <= qi)        # blocks strictly above the diagonal contribute nothing
    def _():
        tq, tk = q_ref.shape[1], k_ref.shape[1]
        # Causal mask computed once per block and shared by all heads; it only
        # actually bites on the diagonal block (all-True below the diagonal).
        row = qi * tq + lax.broadcasted_iota(jnp.int32, (tq, tk), 0)
        col = kv * tk + lax.broadcasted_iota(jnp.int32, (tq, tk), 1)
        causal = col <= row
        sin_k, cos_k = sk_ref[...], ck_ref[...]
        for h in range(num_heads):
            sl = slice(h * d_head, (h + 1) * d_head)
            k_rot = rope(k_ref[0, :, sl], sin_k, cos_k)                 # (tk, Dh) bf16
            s = lax.dot_general(q_scr[h], k_rot, (((1,), (1,)), ((), ())),
                                preferred_element_type=jnp.float32)     # (tq, tk) f32
            s = jnp.where(causal, s, -1e30)
            m_prev = m_scr[h]
            m_new = jnp.maximum(m_prev, jnp.max(s, axis=-1, keepdims=True))
            alpha = jnp.exp(m_prev - m_new)
            p = jnp.exp(s - m_new)
            l_scr[h] = alpha * l_scr[h] + jnp.sum(p, axis=-1, keepdims=True)
            acc_scr[h] = alpha * acc_scr[h] + jnp.dot(
                p.astype(jnp.bfloat16), v_ref[0, :, sl],
                preferred_element_type=jnp.float32)
            m_scr[h] = m_new

    @pl.when(kv == pl.num_programs(2) - 1)
    def _():
        for h in range(num_heads):
            inv_l = pl.reciprocal(l_scr[h])          # exact reciprocal, epilogue only
            o_ref[0, :, h * d_head:(h + 1) * d_head] = (
                acc_scr[h] * inv_l).astype(o_ref.dtype)


def fused_attention(qkv, sin_sgn, cos2, *, num_heads):
    """Causal MHA straight from the packed QKV activations.

    qkv: [B, S, 3*D] bf16 (per-head q/k columns in (evens | odds) order, q pre-scaled),
    sin_sgn / cos2: [S, Dh] f32 rotate-half RoPE tables.  Returns [B, S, D] bf16 in
    (s, h*Dh) layout, ready for the output projection with no head transposes in HBM.
    Requires d_model % 128 == 0 (lane-aligned per-role column blocks).
    """
    B, S, three_d = qkv.shape
    D = three_d // 3
    Dh = D // num_heads
    t = _pick_tile(S, _ATTN_TILES)
    n = S // t

    q_map = lambda b, i, j: (b, i, 0)
    # Clamped maps: causally skipped (above-diagonal) steps reuse the resident tile,
    # so no K/V (or RoPE table) DMA is issued for them -> ~2x less K/V HBM traffic.
    k_map = lambda b, i, j: (b, jnp.minimum(i, j), 1)
    v_map = lambda b, i, j: (b, jnp.minimum(i, j), 2)
    rq_map = lambda b, i, j: (i, 0)
    rk_map = lambda b, i, j: (jnp.minimum(i, j), 0)

    return pl.pallas_call(
        functools.partial(_attention_kernel, num_heads=num_heads, d_head=Dh),
        out_shape=jax.ShapeDtypeStruct((B, S, D), jnp.bfloat16),
        grid=(B, n, n),
        in_specs=[
            pl.BlockSpec((1, t, D), q_map),          # q columns  [0, D)
            pl.BlockSpec((1, t, D), k_map),          # k columns  [D, 2D)
            pl.BlockSpec((1, t, D), v_map),          # v columns  [2D, 3D)
            pl.BlockSpec((t, Dh), rq_map),           # sin (signed) for q rows
            pl.BlockSpec((t, Dh), rq_map),           # cos for q rows
            pl.BlockSpec((t, Dh), rk_map),           # sin (signed) for k rows
            pl.BlockSpec((t, Dh), rk_map),           # cos for k rows
        ],
        out_specs=pl.BlockSpec((1, t, D), q_map),
        scratch_shapes=[
            pltpu.VMEM((num_heads, t, Dh), jnp.bfloat16),   # RoPE'd q (cached per row blk)
            pltpu.VMEM((num_heads, t, 1), jnp.float32),     # running max
            pltpu.VMEM((num_heads, t, 1), jnp.float32),     # running denom
            pltpu.VMEM((num_heads, t, Dh), jnp.float32),    # output accumulator
        ],
        compiler_params=pltpu.CompilerParams(
            dimension_semantics=("parallel", "parallel", "arbitrary"),
            vmem_limit_bytes=_VMEM_LIMIT),
    )(qkv, qkv, qkv, sin_sgn, cos2, sin_sgn, cos2)


# --------------- fused RMSNorm + SwiGLU + residual (FFN sublayer) ---------------

def _ffn_kernel(x_ref, g_ref, w1_ref, w3_ref, w2_ref, o_ref, acc_ref, xn_ref, *, eps):
    f = pl.program_id(1)

    @pl.when(f == 0)
    def _():
        x = x_ref[...]
        inv = lax.rsqrt(jnp.mean(x * x, axis=-1, keepdims=True) + eps)
        xn_ref[...] = (x * inv * g_ref[...]).astype(jnp.bfloat16)
        acc_ref[...] = jnp.zeros_like(acc_ref)

    xn = xn_ref[...]                                                     # (tm, D) bf16
    a = jnp.dot(xn, w1_ref[...], preferred_element_type=jnp.float32)     # (tm, tf)
    b = jnp.dot(xn, w3_ref[...], preferred_element_type=jnp.float32)     # (tm, tf)
    h = (a * jax.nn.sigmoid(a)) * b                                      # SiLU(xw1)*(xw3)
    acc_ref[...] += jnp.dot(h.astype(jnp.bfloat16), w2_ref[...],
                            preferred_element_type=jnp.float32)

    @pl.when(f == pl.num_programs(1) - 1)
    def _():
        o_ref[...] = (x_ref[...] + acc_ref[...]).astype(o_ref.dtype)     # fused residual


def ffn_fused(x, gain, w1, w3, w2, *, eps=1e-5):
    """x + w2(SiLU(RMSNorm(x) w1) * (RMSNorm(x) w3)).  x: [M, D] f32 -> [M, D] f32."""
    M, D = x.shape
    F = w1.shape[1]
    tm, tf = _ffn_tiles(M, D, F)
    return pl.pallas_call(
        functools.partial(_ffn_kernel, eps=eps),
        out_shape=jax.ShapeDtypeStruct((M, D), jnp.float32),
        grid=(M // tm, F // tf),
        in_specs=[
            pl.BlockSpec((tm, D), lambda i, f: (i, 0)),     # x rows (reused over f)
            pl.BlockSpec((1, D), lambda i, f: (0, 0)),      # ln2 gain
            pl.BlockSpec((D, tf), lambda i, f: (0, f)),     # w1 tile
            pl.BlockSpec((D, tf), lambda i, f: (0, f)),     # w3 tile
            pl.BlockSpec((tf, D), lambda i, f: (f, 0)),     # w2 tile
        ],
        out_specs=pl.BlockSpec((tm, D), lambda i, f: (i, 0)),
        scratch_shapes=[
            pltpu.VMEM((tm, D), jnp.float32),               # w2 accumulator
            pltpu.VMEM((tm, D), jnp.bfloat16),              # normalized activations
        ],
        compiler_params=pltpu.CompilerParams(
            dimension_semantics=("parallel", "arbitrary"),
            vmem_limit_bytes=_VMEM_LIMIT),
    )(x, gain.reshape(1, D), w1, w3, w2)


# -------------------------------- JAX glue -----------------------------------

def make_rope_tables(theta, d_head, max_seq_len):
    """Rotate-half RoPE tables for the per-head (evens | odds) column layout."""
    half = d_head // 2
    inv = jnp.power(theta, -2.0 * jnp.arange(half, dtype=jnp.float32) / d_head)
    ang = jnp.arange(max_seq_len, dtype=jnp.float32)[:, None] * inv[None, :]
    sin, cos = jnp.sin(ang), jnp.cos(ang)
    # out = x * [cos|cos] + roll(x, half) * [-sin|sin]
    return jnp.concatenate([-sin, sin], axis=-1), jnp.concatenate([cos, cos], axis=-1)


def _rope_perm(num_heads, d_head):
    """Per-head column permutation: interleaved (0,1,2,3,...) -> (evens | odds)."""
    half = d_head // 2
    idx = []
    for h in range(num_heads):
        base = h * d_head
        idx.extend(base + 2 * i for i in range(half))
        idx.extend(base + 2 * i + 1 for i in range(half))
    return jnp.array(idx, dtype=jnp.int32)


def trunc_linear(key, d_in, d_out):
    # matches _truncated_normal_init: std = sqrt(2/(fan_in+fan_out)), clipped at +-3*std
    std = (2.0 / (d_in + d_out)) ** 0.5
    return std * jax.random.truncated_normal(key, -3.0, 3.0, (d_in, d_out), jnp.float32)


def init_params(key, cfg):
    D, F, V, L = cfg["d_model"], cfg["d_ff"], cfg["vocab_size"], cfg["num_layers"]
    H = cfg["num_heads"]
    Dh = D // H
    assert D % H == 0 and Dh % 2 == 0
    perm = _rope_perm(H, Dh)
    keys = jax.random.split(key, 2 + L)
    params = {}
    # Embedding: trunc_normal(std=1, a=-3, b=3)
    params["embed"] = jax.random.truncated_normal(keys[0], -3.0, 3.0, (V, D), jnp.float32)
    layers = []
    for l in range(L):
        lk = jax.random.split(keys[2 + l], 7)
        # Fold the 1/sqrt(Dh) attention scale into wq (free), and permute q/k columns
        # (per head) so interleaved RoPE == rotate-half RoPE; attention scores are
        # invariant to this shared head-dim permutation.
        wq = trunc_linear(lk[0], D, D) * (Dh ** -0.5)
        wk = trunc_linear(lk[1], D, D)
        wv = trunc_linear(lk[2], D, D)
        wqkv = jnp.concatenate([wq[:, perm], wk[:, perm], wv], axis=1)
        layers.append(
            dict(
                ln1=jnp.ones((D,), jnp.float32),
                ln2=jnp.ones((D,), jnp.float32),
                wqkv=wqkv.astype(jnp.bfloat16),
                wo=trunc_linear(lk[3], D, D).astype(jnp.bfloat16),
                w1=trunc_linear(lk[4], D, F).astype(jnp.bfloat16),
                w3=trunc_linear(lk[5], D, F).astype(jnp.bfloat16),
                w2=trunc_linear(lk[6], F, D).astype(jnp.bfloat16),
            )
        )
    params["layers"] = layers
    params["ln_final"] = jnp.ones((D,), jnp.float32)
    params["lm_head"] = trunc_linear(keys[1], D, V).astype(jnp.bfloat16)
    sin_sgn, cos2 = make_rope_tables(cfg["rope_theta"], Dh, cfg["context_length"])
    params["rope_sin"] = sin_sgn
    params["rope_cos"] = cos2
    return params


def transformer_lm_forward(params, token_ids, cfg):
    B, S = token_ids.shape
    D, H, V = cfg["d_model"], cfg["num_heads"], cfg["vocab_size"]
    M = B * S

    # Token embedding (gather == the reference one-hot matmul).
    x = params["embed"][token_ids].astype(jnp.float32)        # [B, S, D]
    sin = params["rope_sin"][:S]
    cos = params["rope_cos"][:S]

    xf = x.reshape(M, D)                                       # residual stream (f32)
    for layer in params["layers"]:
        # ---- attention sublayer: y = x + wo(attn(rope(qkv(ln1(x))))) ----
        qkv = rmsnorm_matmul(xf, layer["ln1"], layer["wqkv"],
                             out_dtype=jnp.bfloat16)           # [M, 3D] bf16
        attn = fused_attention(qkv.reshape(B, S, 3 * D), sin, cos,
                               num_heads=H)                    # [B, S, D] bf16
        xf = matmul_residual(attn.reshape(M, D), layer["wo"], xf)    # x + attn @ wo

        # ---- feed-forward sublayer: z = y + SwiGLU(ln2(y)) (fully fused) ----
        xf = ffn_fused(xf, layer["ln2"], layer["w1"], layer["w3"], layer["w2"])

    # final norm + lm head, tiled over the vocab axis (norm cached across tiles).
    logits = rmsnorm_matmul(xf, params["ln_final"], params["lm_head"],
                            out_dtype=jnp.float32)             # [M, V]
    return logits.reshape(B, S, V)


if __name__ == "__main__":
    cfg = dict(
        d_model=128,            # multiple of 128: lane-aligned q/k/v column blocks
        num_heads=2,
        d_ff=256,
        rope_theta=10000.0,
        vocab_size=256,
        context_length=32,
        num_layers=2,
    )
    key = jax.random.PRNGKey(0)
    params = init_params(key, cfg)
    token_ids = jax.random.randint(
        jax.random.fold_in(key, 999), (2, 16), 0, cfg["vocab_size"], dtype=jnp.int32
    )
    fwd = jax.jit(functools.partial(transformer_lm_forward, cfg=cfg))
    logits = fwd(params, token_ids)
    jax.block_until_ready(logits)
    assert logits.shape == (2, 16, cfg["vocab_size"])
    assert logits.dtype == jnp.float32
    assert bool(jnp.all(jnp.isfinite(logits)))
    print("KERNEL_OK")
</pallas_src>

<mosaic_0001>
module attributes {stable_mosaic.version = 11 : i64} {
  func.func @_matmul_residual_kernel(%arg0: i32, %arg1: i32, %arg2: memref<32x128xbf16, #tpu.memory_space<vmem>>, %arg3: memref<128x128xbf16, #tpu.memory_space<vmem>>, %arg4: memref<32x128xf32, #tpu.memory_space<vmem>>, %arg5: memref<32x128xf32, #tpu.memory_space<vmem>>) attributes {dimension_semantics = [#tpu.dimension_semantics<parallel>, #tpu.dimension_semantics<parallel>], iteration_bounds = array<i64: 1, 1>, scalar_prefetch = 0 : i64, scratch_operands = 0 : i64, tpu.core_type = #tpu.core_type<tc>, window_params = [{transform_indices = @transform_0, window_bounds = array<i64: 32, 128>}, {transform_indices = @transform_1, window_bounds = array<i64: 128, 128>}, {transform_indices = @transform_2, window_bounds = array<i64: 32, 128>}, {transform_indices = @transform_3, window_bounds = array<i64: 32, 128>}]} {
    %c0 = arith.constant 0 : index
    %c0_0 = arith.constant 0 : index
    %0 = vector.load %arg2[%c0, %c0_0] : memref<32x128xbf16, #tpu.memory_space<vmem>>, vector<32x128xbf16>
    %c0_1 = arith.constant 0 : index
    %c0_2 = arith.constant 0 : index
    %1 = vector.load %arg3[%c0_1, %c0_2] : memref<128x128xbf16, #tpu.memory_space<vmem>>, vector<128x128xbf16>
    %cst = arith.constant dense<0.000000e+00> : vector<32x128xf32>
    %2 = tpu.matmul %0, %1, %cst {dimension_numbers = #tpu.dot_dimension_numbers<[1], [0], [0], [1], [0, 0, 1, 1], [], []>} : vector<32x128xbf16>, vector<128x128xbf16>, vector<32x128xf32> -> vector<32x128xf32>
    %c0_3 = arith.constant 0 : index
    %c0_4 = arith.constant 0 : index
    %3 = vector.load %arg4[%c0_3, %c0_4] : memref<32x128xf32, #tpu.memory_space<vmem>>, vector<32x128xf32>
    %4 = arith.addf %2, %3 : vector<32x128xf32>
    %c0_5 = arith.constant 0 : index
    %c0_6 = arith.constant 0 : index
    %5 = vector.load %arg5[%c0_5, %c0_6] : memref<32x128xf32, #tpu.memory_space<vmem>>, vector<32x128xf32>
    tpu.vector_store %arg5[%c0_5, %c0_6], %4 {strides = array<i32>} : memref<32x128xf32, #tpu.memory_space<vmem>>, vector<32x128xf32>,
    return
  }
  func.func @transform_0(%arg0: i32, %arg1: i32) -> (i32, i32) {
    %c0_i32 = arith.constant 0 : i32
    %c0_i32_0 = arith.constant 0 : i32
    return %arg0, %c0_i32 : i32, i32
  }
  func.func @transform_1(%arg0: i32, %arg1: i32) -> (i32, i32) {
    %c0_i32 = arith.constant 0 : i32
    %c0_i32_0 = arith.constant 0 : i32
    return %c0_i32, %arg1 : i32, i32
  }
  func.func @transform_2(%arg0: i32, %arg1: i32) -> (i32, i32) {
    %c0_i32 = arith.constant 0 : i32
    return %arg0, %arg1 : i32, i32
  }
  func.func @transform_3(%arg0: i32, %arg1: i32) -> (i32, i32) {
    %c0_i32 = arith.constant 0 : i32
    return %arg0, %arg1 : i32, i32
  }
}

module attributes {stable_mosaic.version = 11 : i64} {
  func.func @_rmsnorm_matmul_kernel(%arg0: i32, %arg1: i32, %arg2: memref<32x128xf32, #tpu.memory_space<vmem>>, %arg3: memref<1x128xf32, #tpu.memory_space<vmem>>, %arg4: memref<128x128xbf16, #tpu.memory_space<vmem>>, %arg5: memref<32x128xbf16, #tpu.memory_space<vmem>>, %arg6: memref<32x128xbf16, #tpu.memory_space<vmem>>) attributes {dimension_semantics = [#tpu.dimension_semantics<parallel>, #tpu.dimension_semantics<arbitrary>], iteration_bounds = array<i64: 1, 3>, scalar_prefetch = 0 : i64, scratch_operands = 1 : i64, tpu.core_type = #tpu.core_type<tc>, window_params = [{transform_indices = @transform_0, window_bounds = array<i64: 32, 128>}, {pipeline_mode = #tpu.pipeline_mode<synchronous>, transform_indices = @transform_1, window_bounds = array<i64: 1, 128>}, {transform_indices = @transform_2, window_bounds = array<i64: 128, 128>}, {transform_indices = @transform_3, window_bounds = array<i64: 32, 128>}]} {
    %c0_i32 = arith.constant 0 : i32
    %0 = arith.cmpi eq, %arg1, %c0_i32 : i32
    %1 = arith.extui %0 : i1 to i32
    %c0_i32_0 = arith.constant 0 : i32
    %2 = arith.cmpi ne, %1, %c0_i32_0 : i32
    scf.if %2 {
      %c0_6 = arith.constant 0 : index
      %c0_7 = arith.constant 0 : index
      %8 = vector.load %arg2[%c0_6, %c0_7] : memref<32x128xf32, #tpu.memory_space<vmem>>, vector<32x128xf32>
      %9 = arith.mulf %8, %8 : vector<32x128xf32>
      %cst_8 = arith.constant dense<0.000000e+00> : vector<32xf32>
      %10 = vector.multi_reduction <add>, %9, %cst_8 [1] : vector<32x128xf32> to vector<32xf32>
      %11 = vector.shape_cast %10 : vector<32xf32> to vector<32x1xf32>
      %cst_9 = arith.constant 1.280000e+02 : f32
      %12 = vector.broadcast %cst_9 : f32 to vector<32x1xf32>
      %13 = arith.divf %11, %12 : vector<32x1xf32>
      %cst_10 = arith.constant 9.99999974E-6 : f32
      %14 = vector.broadcast %cst_10 : f32 to vector<32x1xf32>
      %15 = arith.addf %13, %14 : vector<32x1xf32>
      %16 = math.rsqrt %15 : vector<32x1xf32>
      %17 = vector.broadcast %16 : vector<32x1xf32> to vector<32x128xf32>
      %18 = arith.mulf %8, %17 : vector<32x128xf32>
      %c0_11 = arith.constant 0 : index
      %c0_12 = arith.constant 0 : index
      %19 = vector.load %arg3[%c0_11, %c0_12] : memref<1x128xf32, #tpu.memory_space<vmem>>, vector<1x128xf32>
      %20 = vector.broadcast %19 : vector<1x128xf32> to vector<32x128xf32>
      %21 = arith.mulf %18, %20 : vector<32x128xf32>
      %22 = arith.truncf %21 : vector<32x128xf32> to vector<32x128xbf16>
      %c0_13 = arith.constant 0 : index
      %c0_14 = arith.constant 0 : index
      %23 = vector.load %arg6[%c0_13, %c0_14] : memref<32x128xbf16, #tpu.memory_space<vmem>>, vector<32x128xbf16>
      tpu.vector_store %arg6[%c0_13, %c0_14], %22 {strides = array<i32>} : memref<32x128xbf16, #tpu.memory_space<vmem>>, vector<32x128xbf16>,
    } else {
    }
    %c0 = arith.constant 0 : index
    %c0_1 = arith.constant 0 : index
    %3 = vector.load %arg6[%c0, %c0_1] : memref<32x128xbf16, #tpu.memory_space<vmem>>, vector<32x128xbf16>
    %c0_2 = arith.constant 0 : index
    %c0_3 = arith.constant 0 : index
    %4 = vector.load %arg4[%c0_2, %c0_3] : memref<128x128xbf16, #tpu.memory_space<vmem>>, vector<128x128xbf16>
    %cst = arith.constant dense<0.000000e+00> : vector<32x128xf32>
    %5 = tpu.matmul %3, %4, %cst {dimension_numbers = #tpu.dot_dimension_numbers<[1], [0], [0], [1], [0, 0, 1, 1], [], []>} : vector<32x128xbf16>, vector<128x128xbf16>, vector<32x128xf32> -> vector<32x128xf32>
    %6 = arith.truncf %5 : vector<32x128xf32> to vector<32x128xbf16>
    %c0_4 = arith.constant 0 : index
    %c0_5 = arith.constant 0 : index
    %7 = vector.load %arg5[%c0_4, %c0_5] : memref<32x128xbf16, #tpu.memory_space<vmem>>, vector<32x128xbf16>
    tpu.vector_store %arg5[%c0_4, %c0_5], %6 {strides = array<i32>} : memref<32x128xbf16, #tpu.memory_space<vmem>>, vector<32x128xbf16>,
    return
  }
  func.func @transform_0(%arg0: i32, %arg1: i32) -> (i32, i32) {
    %c0_i32 = arith.constant 0 : i32
    %c0_i32_0 = arith.constant 0 : i32
    return %arg0, %c0_i32 : i32, i32
  }
  func.func @transform_1(%arg0: i32, %arg1: i32) -> (i32, i32) {
    %c0_i32 = arith.constant 0 : i32
    %c0_i32_0 = arith.constant 0 : i32
    %c0_i32_1 = arith.constant 0 : i32
    return %c0_i32, %c0_i32_0 : i32, i32
  }
  func.func @transform_2(%arg0: i32, %arg1: i32) -> (i32, i32) {
    %c0_i32 = arith.constant 0 : i32
    %c0_i32_0 = arith.constant 0 : i32
    return %c0_i32, %arg1 : i32, i32
  }
  func.func @transform_3(%arg0: i32, %arg1: i32) -> (i32, i32) {
    %c0_i32 = arith.constant 0 : i32
    return %arg0, %arg1 : i32, i32
  }
}

module attributes {stable_mosaic.version = 11 : i64} {
  func.func @_attention_kernel(%arg0: i32, %arg1: i32, %arg2: i32, %arg3: memref<1x16x128xbf16, #tpu.memory_space<vmem>>, %arg4: memref<1x16x128xbf16, #tpu.memory_space<vmem>>, %arg5: memref<1x16x128xbf16, #tpu.memory_space<vmem>>, %arg6: memref<16x64xf32, #tpu.memory_space<vmem>>, %arg7: memref<16x64xf32, #tpu.memory_space<vmem>>, %arg8: memref<16x64xf32, #tpu.memory_space<vmem>>, %arg9: memref<16x64xf32, #tpu.memory_space<vmem>>, %arg10: memref<1x16x128xbf16, #tpu.memory_space<vmem>>, %arg11: memref<2x16x64xbf16, #tpu.memory_space<vmem>>, %arg12: memref<2x16x1xf32, #tpu.memory_space<vmem>>, %arg13: memref<2x16x1xf32, #tpu.memory_space<vmem>>, %arg14: memref<2x16x64xf32, #tpu.memory_space<vmem>>) attributes {dimension_semantics = [#tpu.dimension_semantics<parallel>, #tpu.dimension_semantics<parallel>, #tpu.dimension_semantics<arbitrary>], iteration_bounds = array<i64: 2, 1, 1>, scalar_prefetch = 0 : i64, scratch_operands = 4 : i64, tpu.core_type = #tpu.core_type<tc>, window_params = [{transform_indices = @transform_0, window_bounds = array<i64: 1, 16, 128>}, {transform_indices = @transform_1, window_bounds = array<i64: 1, 16, 128>}, {transform_indices = @transform_2, window_bounds = array<i64: 1, 16, 128>}, {transform_indices = @transform_3, window_bounds = array<i64: 16, 64>}, {transform_indices = @transform_4, window_bounds = array<i64: 16, 64>}, {transform_indices = @transform_5, window_bounds = array<i64: 16, 64>}, {transform_indices = @transform_6, window_bounds = array<i64: 16, 64>}, {transform_indices = @transform_7, window_bounds = array<i64: 1, 16, 128>}]} {
    %c0_i32 = arith.constant 0 : i32
    %0 = arith.cmpi eq, %arg2, %c0_i32 : i32
    %1 = arith.extui %0 : i1 to i32
    %c0_i32_0 = arith.constant 0 : i32
    %2 = arith.cmpi ne, %1, %c0_i32_0 : i32
    scf.if %2 {
      %cst = arith.constant 0xFF800000 : f32
      %9 = vector.broadcast %cst : f32 to vector<2x16x1xf32>
      %c0 = arith.constant 0 : index
      %c0_4 = arith.constant 0 : index
      %c0_5 = arith.constant 0 : index
      %10 = vector.load %arg12[%c0, %c0_4, %c0_5] : memref<2x16x1xf32, #tpu.memory_space<vmem>>, vector<2x16x1xf32>
      tpu.vector_store %arg12[%c0, %c0_4, %c0_5], %9 {strides = array<i32>} : memref<2x16x1xf32, #tpu.memory_space<vmem>>, vector<2x16x1xf32>,
      %cst_6 = arith.constant 0.000000e+00 : f32
      %11 = vector.broadcast %cst_6 : f32 to vector<2x16x1xf32>
      %c0_7 = arith.constant 0 : index
      %c0_8 = arith.constant 0 : index
      %c0_9 = arith.constant 0 : index
      %12 = vector.load %arg13[%c0_7, %c0_8, %c0_9] : memref<2x16x1xf32, #tpu.memory_space<vmem>>, vector<2x16x1xf32>
      tpu.vector_store %arg13[%c0_7, %c0_8, %c0_9], %11 {strides = array<i32>} : memref<2x16x1xf32, #tpu.memory_space<vmem>>, vector<2x16x1xf32>,
      %cst_10 = arith.constant 0.000000e+00 : f32
      %13 = vector.broadcast %cst_10 : f32 to vector<2x16x64xf32>
      %c0_11 = arith.constant 0 : index
      %c0_12 = arith.constant 0 : index
      %c0_13 = arith.constant 0 : index
      %14 = vector.load %arg14[%c0_11, %c0_12, %c0_13] : memref<2x16x64xf32, #tpu.memory_space<vmem>>, vector<2x16x64xf32>
      tpu.vector_store %arg14[%c0_11, %c0_12, %c0_13], %13 {strides = array<i32>} : memref<2x16x64xf32, #tpu.memory_space<vmem>>, vector<2x16x64xf32>,
      %c0_14 = arith.constant 0 : index
      %c0_15 = arith.constant 0 : index
      %15 = vector.load %arg6[%c0_14, %c0_15] : memref<16x64xf32, #tpu.memory_space<vmem>>, vector<16x64xf32>
      %c0_16 = arith.constant 0 : index
      %c0_17 = arith.constant 0 : index
      %16 = vector.load %arg7[%c0_16, %c0_17] : memref<16x64xf32, #tpu.memory_space<vmem>>, vector<16x64xf32>
      %c0_18 = arith.constant 0 : index
      %c0_19 = arith.constant 0 : index
      %c0_20 = arith.constant 0 : index
      %17 = vector.load %arg3[%c0_18, %c0_19, %c0_20] : memref<1x16x128xbf16, #tpu.memory_space<vmem>>, vector<1x16x64xbf16>
      %18 = vector.shape_cast %17 : vector<1x16x64xbf16> to vector<16x64xbf16>
      %19 = arith.extf %18 : vector<16x64xbf16> to vector<16x64xf32>
      %c32_i32 = arith.constant 32 : i32
      %20 = tpu.dynamic_rotate %19 by %c32_i32 dim 1 : vector<16x64xf32>, i32 -> vector<16x64xf32>
      %21 = arith.mulf %19, %16 : vector<16x64xf32>
      %22 = arith.mulf %20, %15 : vector<16x64xf32>
      %23 = arith.addf %21, %22 : vector<16x64xf32>
      %24 = arith.truncf %23 : vector<16x64xf32> to vector<16x64xbf16>
      %c0_21 = arith.constant 0 : index
      %c0_22 = arith.constant 0 : index
      %c0_23 = arith.constant 0 : index
      %25 = vector.load %arg11[%c0_21, %c0_22, %c0_23] : memref<2x16x64xbf16, #tpu.memory_space<vmem>>, vector<1x16x64xbf16>
      %26 = vector.shape_cast %25 : vector<1x16x64xbf16> to vector<16x64xbf16>
      %27 = vector.shape_cast %24 : vector<16x64xbf16> to vector<1x16x64xbf16>
      tpu.vector_store %arg11[%c0_21, %c0_22, %c0_23], %27 {strides = array<i32>} : memref<2x16x64xbf16, #tpu.memory_space<vmem>>, vector<1x16x64xbf16>,
      %c0_24 = arith.constant 0 : index
      %c0_25 = arith.constant 0 : index
      %c64 = arith.constant 64 : index
      %28 = vector.load %arg3[%c0_24, %c0_25, %c64] : memref<1x16x128xbf16, #tpu.memory_space<vmem>>, vector<1x16x64xbf16>
      %29 = vector.shape_cast %28 : vector<1x16x64xbf16> to vector<16x64xbf16>
      %30 = arith.extf %29 : vector<16x64xbf16> to vector<16x64xf32>
      %c32_i32_26 = arith.constant 32 : i32
      %31 = tpu.dynamic_rotate %30 by %c32_i32_26 dim 1 : vector<16x64xf32>, i32 -> vector<16x64xf32>
      %32 = arith.mulf %30, %16 : vector<16x64xf32>
      %33 = arith.mulf %31, %15 : vector<16x64xf32>
      %34 = arith.addf %32, %33 : vector<16x64xf32>
      %35 = arith.truncf %34 : vector<16x64xf32> to vector<16x64xbf16>
      %c1 = arith.constant 1 : index
      %c0_27 = arith.constant 0 : index
      %c0_28 = arith.constant 0 : index
      %36 = vector.load %arg11[%c1, %c0_27, %c0_28] : memref<2x16x64xbf16, #tpu.memory_space<vmem>>, vector<1x16x64xbf16>
      %37 = vector.shape_cast %36 : vector<1x16x64xbf16> to vector<16x64xbf16>
      %38 = vector.shape_cast %35 : vector<16x64xbf16> to vector<1x16x64xbf16>
      tpu.vector_store %arg11[%c1, %c0_27, %c0_28], %38 {strides = array<i32>} : memref<2x16x64xbf16, #tpu.memory_space<vmem>>, vector<1x16x64xbf16>,
    } else {
    }
    %3 = arith.cmpi sle, %arg2, %arg1 : i32
    %4 = arith.extui %3 : i1 to i32
    %c0_i32_1 = arith.constant 0 : i32
    %5 = arith.cmpi ne, %4, %c0_i32_1 : i32
    scf.if %5 {
      %c16_i32 = arith.constant 16 : i32
      %9 = arith.muli %arg1, %c16_i32 : i32
      %10 = tpu.iota {dimensions = array<i32: 0>} : vector<16x16xi32>
      %11 = vector.broadcast %9 : i32 to vector<16x16xi32>
      %12 = arith.addi %11, %10 : vector<16x16xi32>
      %c16_i32_4 = arith.constant 16 : i32
      %13 = arith.muli %arg2, %c16_i32_4 : i32
      %14 = tpu.iota {dimensions = array<i32: 1>} : vector<16x16xi32>
      %15 = vector.broadcast %13 : i32 to vector<16x16xi32>
      %16 = arith.addi %15, %14 : vector<16x16xi32>
      %17 = arith.cmpi sle, %16, %12 : vector<16x16xi32>
      %c0 = arith.constant 0 : index
      %c0_5 = arith.constant 0 : index
      %18 = vector.load %arg8[%c0, %c0_5] : memref<16x64xf32, #tpu.memory_space<vmem>>, vector<16x64xf32>
      %c0_6 = arith.constant 0 : index
      %c0_7 = arith.constant 0 : index
      %19 = vector.load %arg9[%c0_6, %c0_7] : memref<16x64xf32, #tpu.memory_space<vmem>>, vector<16x64xf32>
      %c0_8 = arith.constant 0 : index
      %c0_9 = arith.constant 0 : index
      %c0_10 = arith.constant 0 : index
      %20 = vector.load %arg4[%c0_8, %c0_9, %c0_10] : memref<1x16x128xbf16, #tpu.memory_space<vmem>>, vector<1x16x64xbf16>
      %21 = vector.shape_cast %20 : vector<1x16x64xbf16> to vector<16x64xbf16>
      %22 = arith.extf %21 : vector<16x64xbf16> to vector<16x64xf32>
      %c32_i32 = arith.constant 32 : i32
      %23 = tpu.dynamic_rotate %22 by %c32_i32 dim 1 : vector<16x64xf32>, i32 -> vector<16x64xf32>
      %24 = arith.mulf %22, %19 : vector<16x64xf32>
      %25 = arith.mulf %23, %18 : vector<16x64xf32>
      %26 = arith.addf %24, %25 : vector<16x64xf32>
      %27 = arith.truncf %26 : vector<16x64xf32> to vector<16x64xbf16>
      %c0_11 = arith.constant 0 : index
      %c0_12 = arith.constant 0 : index
      %c0_13 = arith.constant 0 : index
      %28 = vector.load %arg11[%c0_11, %c0_12, %c0_13] : memref<2x16x64xbf16, #tpu.memory_space<vmem>>, vector<1x16x64xbf16>
      %29 = vector.shape_cast %28 : vector<1x16x64xbf16> to vector<16x64xbf16>
      %cst = arith.constant dense<0.000000e+00> : vector<16x16xf32>
      %30 = tpu.matmul %29, %27, %cst {dimension_numbers = #tpu.dot_dimension_numbers<[1], [1], [0], [0], [0, 0, 1, 0], [], []>} : vector<16x64xbf16>, vector<16x64xbf16>, vector<16x16xf32> -> vector<16x16xf32>
      %cst_14 = arith.constant -1.000000e+30 : f32
      %31 = vector.broadcast %cst_14 : f32 to vector<16x16xf32>
      %32 = arith.select %17, %30, %31 : vector<16x16xi1>, vector<16x16xf32>
      %c0_15 = arith.constant 0 : index
      %c0_16 = arith.constant 0 : index
      %c0_17 = arith.constant 0 : index
      %33 = vector.load %arg12[%c0_15, %c0_16, %c0_17] : memref<2x16x1xf32, #tpu.memory_space<vmem>>, vector<1x16x1xf32>
      %34 = vector.shape_cast %33 : vector<1x16x1xf32> to vector<16x1xf32>
      %cst_18 = arith.constant dense<0xFF800000> : vector<16xf32>
      %35 = vector.multi_reduction <maximumf>, %32, %cst_18 [1] : vector<16x16xf32> to vector<16xf32>
      %36 = vector.shape_cast %35 : vector<16xf32> to vector<16x1xf32>
      %37 = arith.maximumf %34, %36 : vector<16x1xf32>
      %38 = arith.subf %34, %37 : vector<16x1xf32>
      %39 = math.exp %38 : vector<16x1xf32>
      %40 = vector.broadcast %37 : vector<16x1xf32> to vector<16x16xf32>
      %41 = arith.subf %32, %40 : vector<16x16xf32>
      %42 = math.exp %41 : vector<16x16xf32>
      %c0_19 = arith.constant 0 : index
      %c0_20 = arith.constant 0 : index
      %c0_21 = arith.constant 0 : index
      %43 = vector.load %arg13[%c0_19, %c0_20, %c0_21] : memref<2x16x1xf32, #tpu.memory_space<vmem>>, vector<1x16x1xf32>
      %44 = vector.shape_cast %43 : vector<1x16x1xf32> to vector<16x1xf32>
      %45 = arith.mulf %39, %44 : vector<16x1xf32>
      %cst_22 = arith.constant dense<0.000000e+00> : vector<16xf32>
      %46 = vector.multi_reduction <add>, %42, %cst_22 [1] : vector<16x16xf32> to vector<16xf32>
      %47 = vector.shape_cast %46 : vector<16xf32> to vector<16x1xf32>
      %48 = arith.addf %45, %47 : vector<16x1xf32>
      %c0_23 = arith.constant 0 : index
      %c0_24 = arith.constant 0 : index
      %c0_25 = arith.constant 0 : index
      %49 = vector.load %arg13[%c0_23, %c0_24, %c0_25] : memref<2x16x1xf32, #tpu.memory_space<vmem>>, vector<1x16x1xf32>
      %50 = vector.shape_cast %49 : vector<1x16x1xf32> to vector<16x1xf32>
      %51 = vector.shape_cast %48 : vector<16x1xf32> to vector<1x16x1xf32>
      tpu.vector_store %arg13[%c0_23, %c0_24, %c0_25], %51 {strides = array<i32>} : memref<2x16x1xf32, #tpu.memory_space<vmem>>, vector<1x16x1xf32>,
      %c0_26 = arith.constant 0 : index
      %c0_27 = arith.constant 0 : index
      %c0_28 = arith.constant 0 : index
      %52 = vector.load %arg14[%c0_26, %c0_27, %c0_28] : memref<2x16x64xf32, #tpu.memory_space<vmem>>, vector<1x16x64xf32>
      %53 = vector.shape_cast %52 : vector<1x16x64xf32> to vector<16x64xf32>
      %54 = vector.broadcast %39 : vector<16x1xf32> to vector<16x64xf32>
      %55 = arith.mulf %54, %53 : vector<16x64xf32>
      %56 = arith.truncf %42 : vector<16x16xf32> to vector<16x16xbf16>
      %c0_29 = arith.constant 0 : index
      %c0_30 = arith.constant 0 : index
      %c0_31 = arith.constant 0 : index
      %57 = vector.load %arg5[%c0_29, %c0_30, %c0_31] : memref<1x16x128xbf16, #tpu.memory_space<vmem>>, vector<1x16x64xbf16>
      %58 = vector.shape_cast %57 : vector<1x16x64xbf16> to vector<16x64xbf16>
      %cst_32 = arith.constant dense<0.000000e+00> : vector<16x64xf32>
      %59 = tpu.matmul %56, %58, %cst_32 {dimension_numbers = #tpu.dot_dimension_numbers<[1], [0], [0], [1], [0, 0, 1, 1], [], []>} : vector<16x16xbf16>, vector<16x64xbf16>, vector<16x64xf32> -> vector<16x64xf32>
      %60 = arith.addf %55, %59 : vector<16x64xf32>
      %c0_33 = arith.constant 0 : index
      %c0_34 = arith.constant 0 : index
      %c0_35 = arith.constant 0 : index
      %61 = vector.load %arg14[%c0_33, %c0_34, %c0_35] : memref<2x16x64xf32, #tpu.memory_space<vmem>>, vector<1x16x64xf32>
      %62 = vector.shape_cast %61 : vector<1x16x64xf32> to vector<16x64xf32>
      %63 = vector.shape_cast %60 : vector<16x64xf32> to vector<1x16x64xf32>
      tpu.vector_store %arg14[%c0_33, %c0_34, %c0_35], %63 {strides = array<i32>} : memref<2x16x64xf32, #tpu.memory_space<vmem>>, vector<1x16x64xf32>,
      %c0_36 = arith.constant 0 : index
      %c0_37 = arith.constant 0 : index
      %c0_38 = arith.constant 0 : index
      %64 = vector.load %arg12[%c0_36, %c0_37, %c0_38] : memref<2x16x1xf32, #tpu.memory_space<vmem>>, vector<1x16x1xf32>
      %65 = vector.shape_cast %64 : vector<1x16x1xf32> to vector<16x1xf32>
      %66 = vector.shape_cast %37 : vector<16x1xf32> to vector<1x16x1xf32>
      tpu.vector_store %arg12[%c0_36, %c0_37, %c0_38], %66 {strides = array<i32>} : memref<2x16x1xf32, #tpu.memory_space<vmem>>, vector<1x16x1xf32>,
      %c0_39 = arith.constant 0 : index
      %c0_40 = arith.constant 0 : index
      %c64 = arith.constant 64 : index
      %67 = vector.load %arg4[%c0_39, %c0_40, %c64] : memref<1x16x128xbf16, #tpu.memory_space<vmem>>, vector<1x16x64xbf16>
      %68 = vector.shape_cast %67 : vector<1x16x64xbf16> to vector<16x64xbf16>
      %69 = arith.extf %68 : vector<16x64xbf16> to vector<16x64xf32>
      %c32_i32_41 = arith.constant 32 : i32
      %70 = tpu.dynamic_rotate %69 by %c32_i32_41 dim 1 : vector<16x64xf32>, i32 -> vector<16x64xf32>
      %71 = arith.mulf %69, %19 : vector<16x64xf32>
      %72 = arith.mulf %70, %18 : vector<16x64xf32>
      %73 = arith.addf %71, %72 : vector<16x64xf32>
      %74 = arith.truncf %73 : vector<16x64xf32> to vector<16x64xbf16>
      %c1 = arith.constant 1 : index
      %c0_42 = arith.constant 0 : index
      %c0_43 = arith.constant 0 : index
      %75 = vector.load %arg11[%c1, %c0_42, %c0_43] : memref<2x16x64xbf16, #tpu.memory_space<vmem>>, vector<1x16x64xbf16>
      %76 = vector.shape_cast %75 : vector<1x16x64xbf16> to vector<16x64xbf16>
      %cst_44 = arith.constant dense<0.000000e+00> : vector<16x16xf32>
      %77 = tpu.matmul %76, %74, %cst_44 {dimension_numbers = #tpu.dot_dimension_numbers<[1], [1], [0], [0], [0, 0, 1, 0], [], []>} : vector<16x64xbf16>, vector<16x64xbf16>, vector<16x16xf32> -> vector<16x16xf32>
      %cst_45 = arith.constant -1.000000e+30 : f32
      %78 = vector.broadcast %cst_45 : f32 to vector<16x16xf32>
      %79 = arith.select %17, %77, %78 : vector<16x16xi1>, vector<16x16xf32>
      %c1_46 = arith.constant 1 : index
      %c0_47 = arith.constant 0 : index
      %c0_48 = arith.constant 0 : index
      %80 = vector.load %arg12[%c1_46, %c0_47, %c0_48] : memref<2x16x1xf32, #tpu.memory_space<vmem>>, vector<1x16x1xf32>
      %81 = vector.shape_cast %80 : vector<1x16x1xf32> to vector<16x1xf32>
      %cst_49 = arith.constant dense<0xFF800000> : vector<16xf32>
      %82 = vector.multi_reduction <maximumf>, %79, %cst_49 [1] : vector<16x16xf32> to vector<16xf32>
      %83 = vector.shape_cast %82 : vector<16xf32> to vector<16x1xf32>
      %84 = arith.maximumf %81, %83 : vector<16x1xf32>
      %85 = arith.subf %81, %84 : vector<16x1xf32>
      %86 = math.exp %85 : vector<16x1xf32>
      %87 = vector.broadcast %84 : vector<16x1xf32> to vector<16x16xf32>
      %88 = arith.subf %79, %87 : vector<16x16xf32>
      %89 = math.exp %88 : vector<16x16xf32>
      %c1_50 = arith.constant 1 : index
      %c0_51 = arith.constant 0 : index
      %c0_52 = arith.constant 0 : index
      %90 = vector.load %arg13[%c1_50, %c0_51, %c0_52] : memref<2x16x1xf32, #tpu.memory_space<vmem>>, vector<1x16x1xf32>
      %91 = vector.shape_cast %90 : vector<1x16x1xf32> to vector<16x1xf32>
      %92 = arith.mulf %86, %91 : vector<16x1xf32>
      %cst_53 = arith.constant dense<0.000000e+00> : vector<16xf32>
      %93 = vector.multi_reduction <add>, %89, %cst_53 [1] : vector<16x16xf32> to vector<16xf32>
      %94 = vector.shape_cast %93 : vector<16xf32> to vector<16x1xf32>
      %95 = arith.addf %92, %94 : vector<16x1xf32>
      %c1_54 = arith.constant 1 : index
      %c0_55 = arith.constant 0 : index
      %c0_56 = arith.constant 0 : index
      %96 = vector.load %arg13[%c1_54, %c0_55, %c0_56] : memref<2x16x1xf32, #tpu.memory_space<vmem>>, vector<1x16x1xf32>
      %97 = vector.shape_cast %96 : vector<1x16x1xf32> to vector<16x1xf32>
      %98 = vector.shape_cast %95 : vector<16x1xf32> to vector<1x16x1xf32>
      tpu.vector_store %arg13[%c1_54, %c0_55, %c0_56], %98 {strides = array<i32>} : memref<2x16x1xf32, #tpu.memory_space<vmem>>, vector<1x16x1xf32>,
      %c1_57 = arith.constant 1 : index
      %c0_58 = arith.constant 0 : index
      %c0_59 = arith.constant 0 : index
      %99 = vector.load %arg14[%c1_57, %c0_58, %c0_59] : memref<2x16x64xf32, #tpu.memory_space<vmem>>, vector<1x16x64xf32>
      %100 = vector.shape_cast %99 : vector<1x16x64xf32> to vector<16x64xf32>
      %101 = vector.broadcast %86 : vector<16x1xf32> to vector<16x64xf32>
      %102 = arith.mulf %101, %100 : vector<16x64xf32>
      %103 = arith.truncf %89 : vector<16x16xf32> to vector<16x16xbf16>
      %c0_60 = arith.constant 0 : index
      %c0_61 = arith.constant 0 : index
      %c64_62 = arith.constant 64 : index
      %104 = vector.load %arg5[%c0_60, %c0_61, %c64_62] : memref<1x16x128xbf16, #tpu.memory_space<vmem>>, vector<1x16x64xbf16>
      %105 = vector.shape_cast %104 : vector<1x16x64xbf16> to vector<16x64xbf16>
      %cst_63 = arith.constant dense<0.000000e+00> : vector<16x64xf32>
      %106 = tpu.matmul %103, %105, %cst_63 {dimension_numbers = #tpu.dot_dimension_numbers<[1], [0], [0], [1], [0, 0, 1, 1], [], []>} : vector<16x16xbf16>, vector<16x64xbf16>, vector<16x64xf32> -> vector<16x64xf32>
      %107 = arith.addf %102, %106 : vector<16x64xf32>
      %c1_64 = arith.constant 1 : index
      %c0_65 = arith.constant 0 : index
      %c0_66 = arith.constant 0 : index
      %108 = vector.load %arg14[%c1_64, %c0_65, %c0_66] : memref<2x16x64xf32, #tpu.memory_space<vmem>>, vector<1x16x64xf32>
      %109 = vector.shape_cast %108 : vector<1x16x64xf32> to vector<16x64xf32>
      %110 = vector.shape_cast %107 : vector<16x64xf32> to vector<1x16x64xf32>
      tpu.vector_store %arg14[%c1_64, %c0_65, %c0_66], %110 {strides = array<i32>} : memref<2x16x64xf32, #tpu.memory_space<vmem>>, vector<1x16x64xf32>,
      %c1_67 = arith.constant 1 : index
      %c0_68 = arith.constant 0 : index
      %c0_69 = arith.constant 0 : index
      %111 = vector.load %arg12[%c1_67, %c0_68, %c0_69] : memref<2x16x1xf32, #tpu.memory_space<vmem>>, vector<1x16x1xf32>
      %112 = vector.shape_cast %111 : vector<1x16x1xf32> to vector<16x1xf32>
      %113 = vector.shape_cast %84 : vector<16x1xf32> to vector<1x16x1xf32>
      tpu.vector_store %arg12[%c1_67, %c0_68, %c0_69], %113 {strides = array<i32>} : memref<2x16x1xf32, #tpu.memory_space<vmem>>, vector<1x16x1xf32>,
    } else {
    }
    %c0_i32_2 = arith.constant 0 : i32
    %6 = arith.cmpi eq, %arg2, %c0_i32_2 : i32
    %7 = arith.extui %6 : i1 to i32
    %c0_i32_3 = arith.constant 0 : i32
    %8 = arith.cmpi ne, %7, %c0_i32_3 : i32
    scf.if %8 {
      %c0 = arith.constant 0 : index
      %c0_4 = arith.constant 0 : index
      %c0_5 = arith.constant 0 : index
      %9 = vector.load %arg13[%c0, %c0_4, %c0_5] : memref<2x16x1xf32, #tpu.memory_space<vmem>>, vector<1x16x1xf32>
      %10 = vector.shape_cast %9 : vector<1x16x1xf32> to vector<16x1xf32>
      %11 = tpu.reciprocal %10 : vector<16x1xf32> -> vector<16x1xf32>
      %c0_6 = arith.constant 0 : index
      %c0_7 = arith.constant 0 : index
      %c0_8 = arith.constant 0 : index
      %12 = vector.load %arg14[%c0_6, %c0_7, %c0_8] : memref<2x16x64xf32, #tpu.memory_space<vmem>>, vector<1x16x64xf32>
      %13 = vector.shape_cast %12 : vector<1x16x64xf32> to vector<16x64xf32>
      %14 = vector.broadcast %11 : vector<16x1xf32> to vector<16x64xf32>
      %15 = arith.mulf %13, %14 : vector<16x64xf32>
      %16 = arith.truncf %15 : vector<16x64xf32> to vector<16x64xbf16>
      %c0_9 = arith.constant 0 : index
      %c0_10 = arith.constant 0 : index
      %c0_11 = arith.constant 0 : index
      %17 = vector.load %arg10[%c0_9, %c0_10, %c0_11] : memref<1x16x128xbf16, #tpu.memory_space<vmem>>, vector<1x16x64xbf16>
      %18 = vector.shape_cast %17 : vector<1x16x64xbf16> to vector<16x64xbf16>
      %19 = vector.shape_cast %16 : vector<16x64xbf16> to vector<1x16x64xbf16>
      tpu.vector_store %arg10[%c0_9, %c0_10, %c0_11], %19 {strides = array<i32>} : memref<1x16x128xbf16, #tpu.memory_space<vmem>>, vector<1x16x64xbf16>,
      %c1 = arith.constant 1 : index
      %c0_12 = arith.constant 0 : index
      %c0_13 = arith.constant 0 : index
      %20 = vector.load %arg13[%c1, %c0_12, %c0_13] : memref<2x16x1xf32, #tpu.memory_space<vmem>>, vector<1x16x1xf32>
      %21 = vector.shape_cast %20 : vector<1x16x1xf32> to vector<16x1xf32>
      %22 = tpu.reciprocal %21 : vector<16x1xf32> -> vector<16x1xf32>
      %c1_14 = arith.constant 1 : index
      %c0_15 = arith.constant 0 : index
      %c0_16 = arith.constant 0 : index
      %23 = vector.load %arg14[%c1_14, %c0_15, %c0_16] : memref<2x16x64xf32, #tpu.memory_space<vmem>>, vector<1x16x64xf32>
      %24 = vector.shape_cast %23 : vector<1x16x64xf32> to vector<16x64xf32>
      %25 = vector.broadcast %22 : vector<16x1xf32> to vector<16x64xf32>
      %26 = arith.mulf %24, %25 : vector<16x64xf32>
      %27 = arith.truncf %26 : vector<16x64xf32> to vector<16x64xbf16>
      %c0_17 = arith.constant 0 : index
      %c0_18 = arith.constant 0 : index
      %c64 = arith.constant 64 : index
      %28 = vector.load %arg10[%c0_17, %c0_18, %c64] : memref<1x16x128xbf16, #tpu.memory_space<vmem>>, vector<1x16x64xbf16>
      %29 = vector.shape_cast %28 : vector<1x16x64xbf16> to vector<16x64xbf16>
      %30 = vector.shape_cast %27 : vector<16x64xbf16> to vector<1x16x64xbf16>
      tpu.vector_store %arg10[%c0_17, %c0_18, %c64], %30 {strides = array<i32>} : memref<1x16x128xbf16, #tpu.memory_space<vmem>>, vector<1x16x64xbf16>,
    } else {
    }
    return
  }
  func.func @transform_0(%arg0: i32, %arg1: i32, %arg2: i32) -> (i32, i32, i32) {
    %c0_i32 = arith.constant 0 : i32
    %c0_i32_0 = arith.constant 0 : i32
    return %arg0, %arg1, %c0_i32 : i32, i32, i32
  }
  func.func @transform_1(%arg0: i32, %arg1: i32, %arg2: i32) -> (i32, i32, i32) {
    %0 = arith.minsi %arg1, %arg2 : i32
    %c1_i32 = arith.constant 1 : i32
    %c0_i32 = arith.constant 0 : i32
    return %arg0, %0, %c1_i32 : i32, i32, i32
  }
  func.func @transform_2(%arg0: i32, %arg1: i32, %arg2: i32) -> (i32, i32, i32) {
    %0 = arith.minsi %arg1, %arg2 : i32
    %c2_i32 = arith.constant 2 : i32
    %c0_i32 = arith.constant 0 : i32
    return %arg0, %0, %c2_i32 : i32, i32, i32
  }
  func.func @transform_3(%arg0: i32, %arg1: i32, %arg2: i32) -> (i32, i32) {
    %c0_i32 = arith.constant 0 : i32
    %c0_i32_0 = arith.constant 0 : i32
    return %arg1, %c0_i32 : i32, i32
  }
  func.func @transform_4(%arg0: i32, %arg1: i32, %arg2: i32) -> (i32, i32) {
    %c0_i32 = arith.constant 0 : i32
    %c0_i32_0 = arith.constant 0 : i32
    return %arg1, %c0_i32 : i32, i32
  }
  func.func @transform_5(%arg0: i32, %arg1: i32, %arg2: i32) -> (i32, i32) {
    %0 = arith.minsi %arg1, %arg2 : i32
    %c0_i32 = arith.constant 0 : i32
    %c0_i32_0 = arith.constant 0 : i32
    return %0, %c0_i32 : i32, i32
  }
  func.func @transform_6(%arg0: i32, %arg1: i32, %arg2: i32) -> (i32, i32) {
    %0 = arith.minsi %arg1, %arg2 : i32
    %c0_i32 = arith.constant 0 : i32
    %c0_i32_0 = arith.constant 0 : i32
    return %0, %c0_i32 : i32, i32
  }
  func.func @transform_7(%arg0: i32, %arg1: i32, %arg2: i32) -> (i32, i32, i32) {
    %c0_i32 = arith.constant 0 : i32
    %c0_i32_0 = arith.constant 0 : i32
    return %arg0, %arg1, %c0_i32 : i32, i32, i32
  }
}

module attributes {stable_mosaic.version = 11 : i64} {
  func.func @_ffn_kernel(%arg0: i32, %arg1: i32, %arg2: memref<32x128xf32, #tpu.memory_space<vmem>>, %arg3: memref<1x128xf32, #tpu.memory_space<vmem>>, %arg4: memref<128x256xbf16, #tpu.memory_space<vmem>>, %arg5: memref<128x256xbf16, #tpu.memory_space<vmem>>, %arg6: memref<256x128xbf16, #tpu.memory_space<vmem>>, %arg7: memref<32x128xf32, #tpu.memory_space<vmem>>, %arg8: memref<32x128xf32, #tpu.memory_space<vmem>>, %arg9: memref<32x128xbf16, #tpu.memory_space<vmem>>) attributes {dimension_semantics = [#tpu.dimension_semantics<parallel>, #tpu.dimension_semantics<arbitrary>], iteration_bounds = array<i64: 1, 1>, scalar_prefetch = 0 : i64, scratch_operands = 2 : i64, tpu.core_type = #tpu.core_type<tc>, window_params = [{transform_indices = @transform_0, window_bounds = array<i64: 32, 128>}, {pipeline_mode = #tpu.pipeline_mode<synchronous>, transform_indices = @transform_1, window_bounds = array<i64: 1, 128>}, {transform_indices = @transform_2, window_bounds = array<i64: 128, 256>}, {transform_indices = @transform_3, window_bounds = array<i64: 128, 256>}, {transform_indices = @transform_4, window_bounds = array<i64: 256, 128>}, {transform_indices = @transform_5, window_bounds = array<i64: 32, 128>}]} {
    %c0_i32 = arith.constant 0 : i32
    %0 = arith.cmpi eq, %arg1, %c0_i32 : i32
    %1 = arith.extui %0 : i1 to i32
    %c0_i32_0 = arith.constant 0 : i32
    %2 = arith.cmpi ne, %1, %c0_i32_0 : i32
    scf.if %2 {
      %c0_17 = arith.constant 0 : index
      %c0_18 = arith.constant 0 : index
      %24 = vector.load %arg2[%c0_17, %c0_18] : memref<32x128xf32, #tpu.memory_space<vmem>>, vector<32x128xf32>
      %25 = arith.mulf %24, %24 : vector<32x128xf32>
      %cst_19 = arith.constant dense<0.000000e+00> : vector<32xf32>
      %26 = vector.multi_reduction <add>, %25, %cst_19 [1] : vector<32x128xf32> to vector<32xf32>
      %27 = vector.shape_cast %26 : vector<32xf32> to vector<32x1xf32>
      %cst_20 = arith.constant 1.280000e+02 : f32
      %28 = vector.broadcast %cst_20 : f32 to vector<32x1xf32>
      %29 = arith.divf %27, %28 : vector<32x1xf32>
      %cst_21 = arith.constant 9.99999974E-6 : f32
      %30 = vector.broadcast %cst_21 : f32 to vector<32x1xf32>
      %31 = arith.addf %29, %30 : vector<32x1xf32>
      %32 = math.rsqrt %31 : vector<32x1xf32>
      %33 = vector.broadcast %32 : vector<32x1xf32> to vector<32x128xf32>
      %34 = arith.mulf %24, %33 : vector<32x128xf32>
      %c0_22 = arith.constant 0 : index
      %c0_23 = arith.constant 0 : index
      %35 = vector.load %arg3[%c0_22, %c0_23] : memref<1x128xf32, #tpu.memory_space<vmem>>, vector<1x128xf32>
      %36 = vector.broadcast %35 : vector<1x128xf32> to vector<32x128xf32>
      %37 = arith.mulf %34, %36 : vector<32x128xf32>
      %38 = arith.truncf %37 : vector<32x128xf32> to vector<32x128xbf16>
      %c0_24 = arith.constant 0 : index
      %c0_25 = arith.constant 0 : index
      %39 = vector.load %arg9[%c0_24, %c0_25] : memref<32x128xbf16, #tpu.memory_space<vmem>>, vector<32x128xbf16>
      tpu.vector_store %arg9[%c0_24, %c0_25], %38 {strides = array<i32>} : memref<32x128xbf16, #tpu.memory_space<vmem>>, vector<32x128xbf16>,
      %cst_26 = arith.constant 0.000000e+00 : f32
      %40 = vector.broadcast %cst_26 : f32 to vector<32x128xf32>
      %c0_27 = arith.constant 0 : index
      %c0_28 = arith.constant 0 : index
      %41 = vector.load %arg8[%c0_27, %c0_28] : memref<32x128xf32, #tpu.memory_space<vmem>>, vector<32x128xf32>
      tpu.vector_store %arg8[%c0_27, %c0_28], %40 {strides = array<i32>} : memref<32x128xf32, #tpu.memory_space<vmem>>, vector<32x128xf32>,
    } else {
    }
    %c0 = arith.constant 0 : index
    %c0_1 = arith.constant 0 : index
    %3 = vector.load %arg9[%c0, %c0_1] : memref<32x128xbf16, #tpu.memory_space<vmem>>, vector<32x128xbf16>
    %c0_2 = arith.constant 0 : index
    %c0_3 = arith.constant 0 : index
    %4 = vector.load %arg4[%c0_2, %c0_3] : memref<128x256xbf16, #tpu.memory_space<vmem>>, vector<128x256xbf16>
    %cst = arith.constant dense<0.000000e+00> : vector<32x256xf32>
    %5 = tpu.matmul %3, %4, %cst {dimension_numbers = #tpu.dot_dimension_numbers<[1], [0], [0], [1], [0, 0, 1, 1], [], []>} : vector<32x128xbf16>, vector<128x256xbf16>, vector<32x256xf32> -> vector<32x256xf32>
    %c0_4 = arith.constant 0 : index
    %c0_5 = arith.constant 0 : index
    %6 = vector.load %arg5[%c0_4, %c0_5] : memref<128x256xbf16, #tpu.memory_space<vmem>>, vector<128x256xbf16>
    %cst_6 = arith.constant dense<0.000000e+00> : vector<32x256xf32>
    %7 = tpu.matmul %3, %6, %cst_6 {dimension_numbers = #tpu.dot_dimension_numbers<[1], [0], [0], [1], [0, 0, 1, 1], [], []>} : vector<32x128xbf16>, vector<128x256xbf16>, vector<32x256xf32> -> vector<32x256xf32>
    %8 = arith.negf %5 : vector<32x256xf32>
    %9 = math.exp %8 : vector<32x256xf32>
    %cst_7 = arith.constant 1.000000e+00 : f32
    %10 = vector.broadcast %cst_7 : f32 to vector<32x256xf32>
    %11 = arith.addf %10, %9 : vector<32x256xf32>
    %12 = arith.divf %10, %11 : vector<32x256xf32>
    %13 = arith.mulf %5, %12 : vector<32x256xf32>
    %14 = arith.mulf %13, %7 : vector<32x256xf32>
    %c0_8 = arith.constant 0 : index
    %c0_9 = arith.constant 0 : index
    %15 = vector.load %arg8[%c0_8, %c0_9] : memref<32x128xf32, #tpu.memory_space<vmem>>, vector<32x128xf32>
    %16 = arith.truncf %14 : vector<32x256xf32> to vector<32x256xbf16>
    %c0_10 = arith.constant 0 : index
    %c0_11 = arith.constant 0 : index
    %17 = vector.load %arg6[%c0_10, %c0_11] : memref<256x128xbf16, #tpu.memory_space<vmem>>, vector<256x128xbf16>
    %cst_12 = arith.constant dense<0.000000e+00> : vector<32x128xf32>
    %18 = tpu.matmul %16, %17, %cst_12 {dimension_numbers = #tpu.dot_dimension_numbers<[1], [0], [0], [1], [0, 0, 1, 1], [], []>} : vector<32x256xbf16>, vector<256x128xbf16>, vector<32x128xf32> -> vector<32x128xf32>
    %19 = arith.addf %15, %18 : vector<32x128xf32>
    %c0_13 = arith.constant 0 : index
    %c0_14 = arith.constant 0 : index
    %20 = vector.load %arg8[%c0_13, %c0_14] : memref<32x128xf32, #tpu.memory_space<vmem>>, vector<32x128xf32>
    tpu.vector_store %arg8[%c0_13, %c0_14], %19 {strides = array<i32>} : memref<32x128xf32, #tpu.memory_space<vmem>>, vector<32x128xf32>,
    %c0_i32_15 = arith.constant 0 : i32
    %21 = arith.cmpi eq, %arg1, %c0_i32_15 : i32
    %22 = arith.extui %21 : i1 to i32
    %c0_i32_16 = arith.constant 0 : i32
    %23 = arith.cmpi ne, %22, %c0_i32_16 : i32
    scf.if %23 {
      %c0_17 = arith.constant 0 : index
      %c0_18 = arith.constant 0 : index
      %24 = vector.load %arg2[%c0_17, %c0_18] : memref<32x128xf32, #tpu.memory_space<vmem>>, vector<32x128xf32>
      %c0_19 = arith.constant 0 : index
      %c0_20 = arith.constant 0 : index
      %25 = vector.load %arg8[%c0_19, %c0_20] : memref<32x128xf32, #tpu.memory_space<vmem>>, vector<32x128xf32>
      %26 = arith.addf %24, %25 : vector<32x128xf32>
      %c0_21 = arith.constant 0 : index
      %c0_22 = arith.constant 0 : index
      %27 = vector.load %arg7[%c0_21, %c0_22] : memref<32x128xf32, #tpu.memory_space<vmem>>, vector<32x128xf32>
      tpu.vector_store %arg7[%c0_21, %c0_22], %26 {strides = array<i32>} : memref<32x128xf32, #tpu.memory_space<vmem>>, vector<32x128xf32>,
    } else {
    }
    return
  }
  func.func @transform_0(%arg0: i32, %arg1: i32) -> (i32, i32) {
    %c0_i32 = arith.constant 0 : i32
    %c0_i32_0 = arith.constant 0 : i32
    return %arg0, %c0_i32 : i32, i32
  }
  func.func @transform_1(%arg0: i32, %arg1: i32) -> (i32, i32) {
    %c0_i32 = arith.constant 0 : i32
    %c0_i32_0 = arith.constant 0 : i32
    %c0_i32_1 = arith.constant 0 : i32
    return %c0_i32, %c0_i32_0 : i32, i32
  }
  func.func @transform_2(%arg0: i32, %arg1: i32) -> (i32, i32) {
    %c0_i32 = arith.constant 0 : i32
    %c0_i32_0 = arith.constant 0 : i32
    return %c0_i32, %arg1 : i32, i32
  }
  func.func @transform_3(%arg0: i32, %arg1: i32) -> (i32, i32) {
    %c0_i32 = arith.constant 0 : i32
    %c0_i32_0 = arith.constant 0 : i32
    return %c0_i32, %arg1 : i32, i32
  }
  func.func @transform_4(%arg0: i32, %arg1: i32) -> (i32, i32) {
    %c0_i32 = arith.constant 0 : i32
    %c0_i32_0 = arith.constant 0 : i32
    return %arg1, %c0_i32 : i32, i32
  }
  func.func @transform_5(%arg0: i32, %arg1: i32) -> (i32, i32) {
    %c0_i32 = arith.constant 0 : i32
    %c0_i32_0 = arith.constant 0 : i32
    return %arg0, %c0_i32 : i32, i32
  }
}

module attributes {stable_mosaic.version = 11 : i64} {
  func.func @_rmsnorm_matmul_kernel(%arg0: i32, %arg1: i32, %arg2: memref<32x128xf32, #tpu.memory_space<vmem>>, %arg3: memref<1x128xf32, #tpu.memory_space<vmem>>, %arg4: memref<128x256xbf16, #tpu.memory_space<vmem>>, %arg5: memref<32x256xf32, #tpu.memory_space<vmem>>, %arg6: memref<32x128xbf16, #tpu.memory_space<vmem>>) attributes {dimension_semantics = [#tpu.dimension_semantics<parallel>, #tpu.dimension_semantics<arbitrary>], iteration_bounds = array<i64: 1, 1>, scalar_prefetch = 0 : i64, scratch_operands = 1 : i64, tpu.core_type = #tpu.core_type<tc>, window_params = [{transform_indices = @transform_0, window_bounds = array<i64: 32, 128>}, {pipeline_mode = #tpu.pipeline_mode<synchronous>, transform_indices = @transform_1, window_bounds = array<i64: 1, 128>}, {transform_indices = @transform_2, window_bounds = array<i64: 128, 256>}, {transform_indices = @transform_3, window_bounds = array<i64: 32, 256>}]} {
    %c0_i32 = arith.constant 0 : i32
    %0 = arith.cmpi eq, %arg1, %c0_i32 : i32
    %1 = arith.extui %0 : i1 to i32
    %c0_i32_0 = arith.constant 0 : i32
    %2 = arith.cmpi ne, %1, %c0_i32_0 : i32
    scf.if %2 {
      %c0_6 = arith.constant 0 : index
      %c0_7 = arith.constant 0 : index
      %7 = vector.load %arg2[%c0_6, %c0_7] : memref<32x128xf32, #tpu.memory_space<vmem>>, vector<32x128xf32>
      %8 = arith.mulf %7, %7 : vector<32x128xf32>
      %cst_8 = arith.constant dense<0.000000e+00> : vector<32xf32>
      %9 = vector.multi_reduction <add>, %8, %cst_8 [1] : vector<32x128xf32> to vector<32xf32>
      %10 = vector.shape_cast %9 : vector<32xf32> to vector<32x1xf32>
      %cst_9 = arith.constant 1.280000e+02 : f32
      %11 = vector.broadcast %cst_9 : f32 to vector<32x1xf32>
      %12 = arith.divf %10, %11 : vector<32x1xf32>
      %cst_10 = arith.constant 9.99999974E-6 : f32
      %13 = vector.broadcast %cst_10 : f32 to vector<32x1xf32>
      %14 = arith.addf %12, %13 : vector<32x1xf32>
      %15 = math.rsqrt %14 : vector<32x1xf32>
      %16 = vector.broadcast %15 : vector<32x1xf32> to vector<32x128xf32>
      %17 = arith.mulf %7, %16 : vector<32x128xf32>
      %c0_11 = arith.constant 0 : index
      %c0_12 = arith.constant 0 : index
      %18 = vector.load %arg3[%c0_11, %c0_12] : memref<1x128xf32, #tpu.memory_space<vmem>>, vector<1x128xf32>
      %19 = vector.broadcast %18 : vector<1x128xf32> to vector<32x128xf32>
      %20 = arith.mulf %17, %19 : vector<32x128xf32>
      %21 = arith.truncf %20 : vector<32x128xf32> to vector<32x128xbf16>
      %c0_13 = arith.constant 0 : index
      %c0_14 = arith.constant 0 : index
      %22 = vector.load %arg6[%c0_13, %c0_14] : memref<32x128xbf16, #tpu.memory_space<vmem>>, vector<32x128xbf16>
      tpu.vector_store %arg6[%c0_13, %c0_14], %21 {strides = array<i32>} : memref<32x128xbf16, #tpu.memory_space<vmem>>, vector<32x128xbf16>,
    } else {
    }
    %c0 = arith.constant 0 : index
    %c0_1 = arith.constant 0 : index
    %3 = vector.load %arg6[%c0, %c0_1] : memref<32x128xbf16, #tpu.memory_space<vmem>>, vector<32x128xbf16>
    %c0_2 = arith.constant 0 : index
    %c0_3 = arith.constant 0 : index
    %4 = vector.load %arg4[%c0_2, %c0_3] : memref<128x256xbf16, #tpu.memory_space<vmem>>, vector<128x256xbf16>
    %cst = arith.constant dense<0.000000e+00> : vector<32x256xf32>
    %5 = tpu.matmul %3, %4, %cst {dimension_numbers = #tpu.dot_dimension_numbers<[1], [0], [0], [1], [0, 0, 1, 1], [], []>} : vector<32x128xbf16>, vector<128x256xbf16>, vector<32x256xf32> -> vector<32x256xf32>
    %c0_4 = arith.constant 0 : index
    %c0_5 = arith.constant 0 : index
    %6 = vector.load %arg5[%c0_4, %c0_5] : memref<32x256xf32, #tpu.memory_space<vmem>>, vector<32x256xf32>
    tpu.vector_store %arg5[%c0_4, %c0_5], %5 {strides = array<i32>} : memref<32x256xf32, #tpu.memory_space<vmem>>, vector<32x256xf32>,
    return
  }
  func.func @transform_0(%arg0: i32, %arg1: i32) -> (i32, i32) {
    %c0_i32 = arith.constant 0 : i32
    %c0_i32_0 = arith.constant 0 : i32
    return %arg0, %c0_i32 : i32, i32
  }
  func.func @transform_1(%arg0: i32, %arg1: i32) -> (i32, i32) {
    %c0_i32 = arith.constant 0 : i32
    %c0_i32_0 = arith.constant 0 : i32
    %c0_i32_1 = arith.constant 0 : i32
    return %c0_i32, %c0_i32_0 : i32, i32
  }
  func.func @transform_2(%arg0: i32, %arg1: i32) -> (i32, i32) {
    %c0_i32 = arith.constant 0 : i32
    %c0_i32_0 = arith.constant 0 : i32
    return %c0_i32, %arg1 : i32, i32
  }
  func.func @transform_3(%arg0: i32, %arg1: i32) -> (i32, i32) {
    %c0_i32 = arith.constant 0 : i32
    return %arg0, %arg1 : i32, i32
  }
}

</mosaic_0001>

<llo_original>
// kernel: transformer_lm_forward.9
$region0: #{transformer_lm_forward.9}
  #allocation0 [shape = 'u32[]', space=smem, size = 0x4, offset = 0x4, fixed_abs, tag = 'smem constant byte address 0x4 - core index']
  #allocation1 [shape = 'u32[144,128]{1,0:T(1,128)}', space=vmem, size = 0x12000, scoped, tag = 'internal scratch']
  #allocation2 [shape = 'bf16[32,128]{1,0:T(8,128)(2,1)}', space=vmem, size = 0x2000, scoped, tag = 'scratch operand']
  %s0 = inlined_call_operand.vmem [shape: f32[32,128], index: 0, kind: input, shape index: {}]
  %s1 = inlined_call_operand.vmem [shape: f32[1,128], index: 1, kind: input, shape index: {}]
  %s2 = inlined_call_operand.vmem [shape: bf16[128,384], index: 2, kind: input, shape index: {}]
  %s3 = inlined_call_operand.vmem [shape: bf16[32,384], index: 3, kind: output, shape index: {}]
  %s4 = sld [smem:[#allocation0]]
  $region127: #{transformer_lm_forward.9} parent=0
    _
  %s6 = ssub.s32 1, %s4
  %s7 = scalar_select 0, %s6, %s4
  $region1: #{transformer_lm_forward.9} parent=0
    #allocation3 [shape = 'u8[65536]{0}', space=vmem, size = 0x10000, scoped, tag = 'input window, operand 2']
    #allocation4 [shape = 'u8[16384]{0}', space=vmem, size = 0x4000, scoped, tag = 'output window, operand 0']
    loop: start=0, step=1, limit=5
    $region2: #{transformer_lm_forward.9} parent=1 // loop_pre_header
      _
    $region3: #{transformer_lm_forward.9} parent=1 // loop_header
      %s9 = sphi 0, %s13
      %p10 = scmp.ge.s32.totalorder %s9, 5
      %s16 = sphi 0, %s28
      %s17 = sphi 0, %s24
      %s18 = sphi 0, %s16
      %s19 = sphi 0, %s17
      %s20 = sphi 0, %s18
      %s21 = sphi 0, %s19
      %s31 = sphi 0, %s33
      %s34 = sphi 0, %s31
      %s35 = sphi 0, %s34
      %s51 = sphi 0, %s35
      %s55 = sphi 0, %s55
      %s57 = sphi 0, %s55
      %s58 = sphi 0, %s57
      %s72 = sphi 0, %s58
      %s78 = sphi 0, %s80
      %s81 = sphi 0, %s78
      %s82 = sphi 0, %s81
      %s98 = sphi 0, %s82
      %s106 = sphi 0, %s108
      %s109 = sphi 0, %s106
      %s110 = sphi 0, %s109
      %s126 = sphi 0, %s110
    $region4: #{transformer_lm_forward.9} parent=1 // loop_header_branch
      %12 = sbr.rel (%p10) target = $region8
    $region5: #{transformer_lm_forward.9} parent=1 // loop_body
      %s14 = ssub.s32 %s9, 1
      %s15 = ssub.s32 %s9, 2
      %s22 = sadd.s32 1, %s17
      %p23 = scmp.ge.s32.totalorder %s22, 3
      %s24 = scalar_select %p23, 0, %s22
      %s25 = sadd.s32 1, %s16
      %s26 = scalar_select %p23, %s25, %s16
      %p27 = scmp.ge.s32.totalorder %s26, 1
      %s28 = scalar_select %p27, 0, %s26
      %s29 = ssub.s32 %s16, %s28
      %p30 = scmp.eq.s32.totalorder %s29, 0
      %s32 = sadd.s32 %s31, 1
      %s33 = scalar_select %p30, %s31, %s32
      %p36 = pneg %p30
      %p37 = scmp.eq.s32.totalorder %s9, 2
      %p38 = por %p36, %p37
      %p39 = scmp.ne.s32.totalorder %s31, %s34
      %p40 = scmp.eq.s32.totalorder %s9, 0
      %p41 = por %p39, %p40
      %p42 = scmp.ne.s32.totalorder %s31, %s34
      %p43 = scmp.eq.s32.totalorder %s14, 2
      %p44 = por %p42, %p43
      %p45 = scmp.ne.s32.totalorder %s34, %s35
      %p46 = scmp.eq.s32.totalorder %s14, 0
      %p47 = por %p45, %p46
      %p48 = scmp.ne.s32.totalorder %s34, %s35
      %p49 = scmp.eq.s32.totalorder %s15, 2
      %p50 = por %p48, %p49
      %p52 = scmp.ne.s32.totalorder %s35, %s51
      %p53 = scmp.eq.s32.totalorder %s15, 0
      %p54 = por %p52, %p53
      %s56 = sadd.s32 %s55, 1
      %p59 = scmp.eq.s32.totalorder %s9, 2
      %p60 = scmp.ne.s32.totalorder %s55, %s57
      %p61 = scmp.eq.s32.totalorder %s9, 0
      %p62 = por %p60, %p61
      %p63 = scmp.ne.s32.totalorder %s55, %s57
      %p64 = scmp.eq.s32.totalorder %s14, 2
      %p65 = por %p63, %p64
      %p66 = scmp.ne.s32.totalorder %s57, %s58
      %p67 = scmp.eq.s32.totalorder %s14, 0
      %p68 = por %p66, %p67
      %p69 = scmp.ne.s32.totalorder %s57, %s58
      %p70 = scmp.eq.s32.totalorder %s15, 2
      %p71 = por %p69, %p70
      %p73 = scmp.ne.s32.totalorder %s58, %s72
      %p74 = scmp.eq.s32.totalorder %s15, 0
      %p75 = por %p73, %p74
      %s76 = ssub.s32 %s17, %s24
      %p77 = scmp.eq.s32.totalorder %s76, 0
      %s79 = sadd.s32 %s78, 1
      %s80 = scalar_select %p77, %s78, %s79
      %p83 = pneg %p77
      %p84 = scmp.eq.s32.totalorder %s9, 2
      %p85 = por %p83, %p84
      %p86 = scmp.ne.s32.totalorder %s78, %s81
      %p87 = scmp.eq.s32.totalorder %s9, 0
      %p88 = por %p86, %p87
      %p89 = scmp.ne.s32.totalorder %s78, %s81
      %p90 = scmp.eq.s32.totalorder %s14, 2
      %p91 = por %p89, %p90
      %p92 = scmp.ne.s32.totalorder %s81, %s82
      %p93 = scmp.eq.s32.totalorder %s14, 0
      %p94 = por %p92, %p93
      %p95 = scmp.ne.s32.totalorder %s81, %s82
      %p96 = scmp.eq.s32.totalorder %s15, 2
      %p97 = por %p95, %p96
      %p99 = scmp.ne.s32.totalorder %s82, %s98
      %p100 = scmp.eq.s32.totalorder %s15, 0
      %p101 = por %p99, %p100
      %s102 = ssub.s32 %s16, %s28
      %s103 = ssub.s32 %s17, %s24
      %s104 = sor.u32 %s102, %s103
      %p105 = scmp.eq.s32.totalorder %s104, 0
      %s107 = sadd.s32 %s106, 1
      %s108 = scalar_select %p105, %s106, %s107
      %p111 = pneg %p105
      %p112 = scmp.eq.s32.totalorder %s9, 2
      %p113 = por %p111, %p112
      %p114 = scmp.ne.s32.totalorder %s106, %s109
      %p115 = scmp.eq.s32.totalorder %s9, 0
      %p116 = por %p114, %p115
      %p117 = scmp.ne.s32.totalorder %s106, %s109
      %p118 = scmp.eq.s32.totalorder %s14, 2
      %p119 = por %p117, %p118
      %p120 = scmp.ne.s32.totalorder %s109, %s110
      %p121 = scmp.eq.s32.totalorder %s14, 0
      %p122 = por %p120, %p121
      %p123 = scmp.ne.s32.totalorder %s109, %s110
      %p124 = scmp.eq.s32.totalorder %s15, 2
      %p125 = por %p123, %p124
      %p127 = scmp.ne.s32.totalorder %s110, %s126
      %p128 = scmp.eq.s32.totalorder %s15, 0
      %p129 = por %p127, %p128
      %p130 = scmp.le.s32.totalorder 1, %s9
      %p131 = scmp.lt.s32.totalorder %s9, 4
      %p132 = pnand %p130, %p131
      %p133 = pneg %p132
      // Predicated region
      $region9: #{transformer_lm_forward.9} parent=5 // pred_check
        _
      $region10: #{transformer_lm_forward.9} parent=5 // pred_check_branch
        %135 = sbr.rel (%p132) target = $region12
      $region11: #{transformer_lm_forward.9} parent=5 // pred_region
        %s136 = ssub.s32 %s9, 1
        // Predicated region
        $region13: #{transformer_lm_forward.9} parent=11 // pred_check
          %p137 = pneg %p47
        $region14: #{transformer_lm_forward.9} parent=11 // pred_check_branch
          %139 = sbr.rel (%p137) target = $region16
        $region15: #{transformer_lm_forward.9} parent=11 // pred_region
          %s140 = smul.u32 4, %s18
          %p141 = scmp.lt.s32.totalorder %s140, 3
          %s142 = scalar_select %p141, %s140, 3
          %s143 = smul.addr %s142, 8
          %s144 = scalar_lea.vmem %s0, %s143
          %s145 = smul.u32 4, %s18
        $region16: #{transformer_lm_forward.9} parent=11 // pred_fallthru
          _
        // Predicated region
        $region17: #{transformer_lm_forward.9} parent=11 // pred_check
          %p146 = pneg %p68
        $region18: #{transformer_lm_forward.9} parent=11 // pred_check_branch
          %148 = sbr.rel (%p146) target = $region20
        $region19: #{transformer_lm_forward.9} parent=11 // pred_region
          _
        $region20: #{transformer_lm_forward.9} parent=11 // pred_fallthru
          _
      $region12: #{transformer_lm_forward.9} parent=5 // pred_fallthru
        _
      %p149 = scmp.lt.s32.totalorder %s9, 3
      // Predicated region
      $region21: #{transformer_lm_forward.9} parent=5 // pred_check
        %p150 = pneg %p149
      $region22: #{transformer_lm_forward.9} parent=5 // pred_check_branch
        %152 = sbr.rel (%p150) target = $region24
      $region23: #{transformer_lm_forward.9} parent=5 // pred_region
        // Predicated region
        $region25: #{transformer_lm_forward.9} parent=23 // pred_check
          %p153 = pneg %p88
        $region26: #{transformer_lm_forward.9} parent=23 // pred_check_branch
          %155 = sbr.rel (%p153) target = $region28
        $region27: #{transformer_lm_forward.9} parent=23 // pred_region
          %s156 = sand.u32 %s78, 1
          %s157 = sand.u32 %s78, 1
          %s158 = smul.addr %s157, 64
          %s159 = scalar_lea.vmem [#allocation3], %s158
          %s160 = smul.addr %s17, 4
          %s161 = scalar_lea.vmem %s2, %s160
          // Predicated region
          $region29: #{transformer_lm_forward.9} parent=27 // pred_check
            _
          $region30: #{transformer_lm_forward.9} parent=27 // pred_check_branch
            %163 = sbr.rel (0) target = $region32
          $region31: #{transformer_lm_forward.9} parent=27 // pred_region
            // Predicated region
            $region33: #{transformer_lm_forward.9} parent=31 // pred_check
              _
            $region34: #{transformer_lm_forward.9} parent=31 // pred_check_branch
              %165 = sbr.rel target = $region36
            $region35: #{transformer_lm_forward.9} parent=31 // pred_region
              // Predicated region
              $region48: #{transformer_lm_forward.9} parent=35 // pred_check
                _
              $region49: #{transformer_lm_forward.9} parent=35 // pred_check_branch
                %211 = sbr.rel (0) target = $region51
              $region50: #{transformer_lm_forward.9} parent=35 // pred_region
                loop: start=0, step=1, limit=1
                $region52: #{transformer_lm_forward.9} parent=50 // loop_pre_header
                  _
                $region53: #{transformer_lm_forward.9} parent=50 // loop_header
                  %s213 = sphi 0, %s217
                  %p214 = scmp.ge.s32.totalorder %s213, 1
                  %s218 = sphi %s161, %s161
                  %s219 = sphi %s159, %s159
                $region54: #{transformer_lm_forward.9} parent=50 // loop_header_branch
                  %216 = sbr.rel (%p214) target = $region58
                $region55: #{transformer_lm_forward.9} parent=50 // loop_body
                  _
                $region56: #{transformer_lm_forward.9} parent=50 // loop_footer
                  %s217 = sadd.s32 1, %s213
                $region57: #{transformer_lm_forward.9} parent=50 // loop_footer_branch
                  %212 = sbr.rel target = $region53
                $region58: #{transformer_lm_forward.9} parent=50 // loop_exit
                  _
                %s221 = ssub.s32 16, 1
                loop: start=0, step=1, limit=1
                $region59: #{transformer_lm_forward.9} parent=50 // loop_pre_header
                  _
                $region60: #{transformer_lm_forward.9} parent=50 // loop_header
                  %s223 = sphi 0, %s227
                  %p224 = scmp.ge.s32.totalorder %s223, 1
                  %s228 = sphi %s161, %s161
                  %s229 = sphi %s159, %s159
                $region61: #{transformer_lm_forward.9} parent=50 // loop_header_branch
                  %226 = sbr.rel (%p224) target = $region65
                $region62: #{transformer_lm_forward.9} parent=50 // loop_body
                  %v230 = vld [vmem:[%s228] sm:%s221]
                  %231 = vst [vmem:[%s229] sm:%s221] %v230
                  %v232 = vld [vmem:[%s228 + $0xc] sm:%s221]
                  %233 = vst [vmem:[%s229 + $0x4] sm:%s221] %v232
                  %v234 = vld [vmem:[%s228 + $0x18] sm:%s221]
                  %235 = vst [vmem:[%s229 + $0x8] sm:%s221] %v234
                  %v236 = vld [vmem:[%s228 + $0x24] sm:%s221]
                  %237 = vst [vmem:[%s229 + $0xc] sm:%s221] %v236
                  %v238 = vld [vmem:[%s228 + $0x30] sm:%s221]
                  %239 = vst [vmem:[%s229 + $0x10] sm:%s221] %v238
                  %v240 = vld [vmem:[%s228 + $0x3c] sm:%s221]
                  %241 = vst [vmem:[%s229 + $0x14] sm:%s221] %v240
                  %v242 = vld [vmem:[%s228 + $0x48] sm:%s221]
                  %243 = vst [vmem:[%s229 + $0x18] sm:%s221] %v242
                  %v244 = vld [vmem:[%s228 + $0x54] sm:%s221]
                  %245 = vst [vmem:[%s229 + $0x1c] sm:%s221] %v244
                  %v246 = vld [vmem:[%s228 + $0x60] sm:%s221]
                  %247 = vst [vmem:[%s229 + $0x20] sm:%s221] %v246
                  %v248 = vld [vmem:[%s228 + $0x6c] sm:%s221]
                  %249 = vst [vmem:[%s229 + $0x24] sm:%s221] %v248
                  %v250 = vld [vmem:[%s228 + $0x78] sm:%s221]
                  %251 = vst [vmem:[%s229 + $0x28] sm:%s221] %v250
                  %v252 = vld [vmem:[%s228 + $0x84] sm:%s221]
                  %253 = vst [vmem:[%s229 + $0x2c] sm:%s221] %v252
                  %v254 = vld [vmem:[%s228 + $0x90] sm:%s221]
                  %255 = vst [vmem:[%s229 + $0x30] sm:%s221] %v254
                  %v256 = vld [vmem:[%s228 + $0x9c] sm:%s221]
                  %257 = vst [vmem:[%s229 + $0x34] sm:%s221] %v256
                  %v258 = vld [vmem:[%s228 + $0xa8] sm:%s221]
                  %259 = vst [vmem:[%s229 + $0x38] sm:%s221] %v258
                  %v260 = vld [vmem:[%s228 + $0xb4] sm:%s221]
                  %261 = vst [vmem:[%s229 + $0x3c] sm:%s221] %v260
                $region63: #{transformer_lm_forward.9} parent=50 // loop_footer
                  %s227 = sadd.s32 1, %s223
                $region64: #{transformer_lm_forward.9} parent=50 // loop_footer_branch
                  %222 = sbr.rel target = $region60
                $region65: #{transformer_lm_forward.9} parent=50 // loop_exit
                  _
              $region51: #{transformer_lm_forward.9} parent=35 // pred_fallthru
                _
            $region36: #{transformer_lm_forward.9} parent=31 // pred_fallthru
              _
            // Predicated region
            $region37: #{transformer_lm_forward.9} parent=31 // pred_check
              _
            $region38: #{transformer_lm_forward.9} parent=31 // pred_check_branch
              %167 = sbr.rel (0) target = $region40
            $region39: #{transformer_lm_forward.9} parent=31 // pred_region
              %s169 = ssub.s32 16, 1
              loop: start=0, step=1, limit=1
              $region41: #{transformer_lm_forward.9} parent=39 // loop_pre_header
                _
              $region42: #{transformer_lm_forward.9} parent=39 // loop_header
                %s171 = sphi 0, %s175
                %p172 = scmp.ge.s32.totalorder %s171, 1
                %s176 = sphi %s161, %s161
                %s177 = sphi %s159, %s159
              $region43: #{transformer_lm_forward.9} parent=39 // loop_header_branch
                %174 = sbr.rel (%p172) target = $region47
              $region44: #{transformer_lm_forward.9} parent=39 // loop_body
                %v178 = vld [vmem:[%s176] sm:%s169]
                %179 = vst [vmem:[%s177] sm:%s169] %v178
                %v180 = vld [vmem:[%s176 + $0xc] sm:%s169]
                %181 = vst [vmem:[%s177 + $0x4] sm:%s169] %v180
                %v182 = vld [vmem:[%s176 + $0x18] sm:%s169]
                %183 = vst [vmem:[%s177 + $0x8] sm:%s169] %v182
                %v184 = vld [vmem:[%s176 + $0x24] sm:%s169]
                %185 = vst [vmem:[%s177 + $0xc] sm:%s169] %v184
                %v186 = vld [vmem:[%s176 + $0x30] sm:%s169]
                %187 = vst [vmem:[%s177 + $0x10] sm:%s169] %v186
                %v188 = vld [vmem:[%s176 + $0x3c] sm:%s169]
                %189 = vst [vmem:[%s177 + $0x14] sm:%s169] %v188
                %v190 = vld [vmem:[%s176 + $0x48] sm:%s169]
                %191 = vst [vmem:[%s177 + $0x18] sm:%s169] %v190
                %v192 = vld [vmem:[%s176 + $0x54] sm:%s169]
                %193 = vst [vmem:[%s177 + $0x1c] sm:%s169] %v192
                %v194 = vld [vmem:[%s176 + $0x60] sm:%s169]
                %195 = vst [vmem:[%s177 + $0x20] sm:%s169] %v194
                %v196 = vld [vmem:[%s176 + $0x6c] sm:%s169]
                %197 = vst [vmem:[%s177 + $0x24] sm:%s169] %v196
                %v198 = vld [vmem:[%s176 + $0x78] sm:%s169]
                %199 = vst [vmem:[%s177 + $0x28] sm:%s169] %v198
                %v200 = vld [vmem:[%s176 + $0x84] sm:%s169]
                %201 = vst [vmem:[%s177 + $0x2c] sm:%s169] %v200
                %v202 = vld [vmem:[%s176 + $0x90] sm:%s169]
                %203 = vst [vmem:[%s177 + $0x30] sm:%s169] %v202
                %v204 = vld [vmem:[%s176 + $0x9c] sm:%s169]
                %205 = vst [vmem:[%s177 + $0x34] sm:%s169] %v204
                %v206 = vld [vmem:[%s176 + $0xa8] sm:%s169]
                %207 = vst [vmem:[%s177 + $0x38] sm:%s169] %v206
                %v208 = vld [vmem:[%s176 + $0xb4] sm:%s169]
                %209 = vst [vmem:[%s177 + $0x3c] sm:%s169] %v208
              $region45: #{transformer_lm_forward.9} parent=39 // loop_footer
                %s175 = sadd.s32 1, %s171
              $region46: #{transformer_lm_forward.9} parent=39 // loop_footer_branch
                %170 = sbr.rel target = $region42
              $region47: #{transformer_lm_forward.9} parent=39 // loop_exit
                _
            $region40: #{transformer_lm_forward.9} parent=31 // pred_fallthru
              _
          $region32: #{transformer_lm_forward.9} parent=27 // pred_fallthru
            _
          %262 = vnop
        $region28: #{transformer_lm_forward.9} parent=23 // pred_fallthru
          _
      $region24: #{transformer_lm_forward.9} parent=5 // pred_fallthru
        _
      %p263 = scmp.le.s32.totalorder 1, %s9
      %p264 = scmp.lt.s32.totalorder %s9, 4
      %p265 = pnand %p263, %p264
      %p266 = pneg %p265
      // Predicated region
      $region66: #{transformer_lm_forward.9} parent=5 // pred_check
        _
      $region67: #{transformer_lm_forward.9} parent=5 // pred_check_branch
        %268 = sbr.rel (%p265) target = $region69
      $region68: #{transformer_lm_forward.9} parent=5 // pred_region
        %s269 = ssub.s32 %s9, 1
        %s270 = sand.u32 %s81, 1
        %s271 = sand.u32 %s81, 1
        %s272 = smul.addr %s271, 64
        %s273 = scalar_lea.vmem [#allocation3], %s272
        // Predicated region
        $region70: #{transformer_lm_forward.9} parent=68 // pred_check
          %p274 = pneg %p94
        $region71: #{transformer_lm_forward.9} parent=68 // pred_check_branch
          %276 = sbr.rel (%p274) target = $region73
        $region72: #{transformer_lm_forward.9} parent=68 // pred_region
          _
        $region73: #{transformer_lm_forward.9} parent=68 // pred_fallthru
          _
        %s277 = smul.u32 4, %s18
        %p278 = scmp.lt.s32.totalorder %s277, 3
        %s279 = scalar_select %p278, %s277, 3
        %s280 = smul.addr %s279, 8
        %s281 = scalar_lea.vmem %s0, %s280
        %p282 = pneg %p47
        %p283 = pneg %p44
        %p284 = pneg %p68
        %p285 = pneg %p65
        %s286 = sand.u32 %s81, 1
        %s287 = sand.u32 %s81, 1
        %s288 = smul.addr %s287, 64
        %s289 = scalar_lea.vmem [#allocation3], %s288
        %p290 = pneg %p94
        %p291 = pneg %p91
        %p292 = pneg %p122
        %p293 = pneg %p119
        %s294 = sand.u32 %s109, 1
        %s295 = sand.u32 %s109, 1
        %s296 = smul.addr %s295, 16
        %s297 = scalar_lea.vmem [#allocation4], %s296
        %s298 = smul.u32 4, %s18
        %p299 = scmp.lt.s32.totalorder %s298, 3
        %s300 = scalar_select %p299, %s298, 3
        %s301 = smul.addr %s300, 8
        %s302 = scalar_lea.vmem %s0, %s301
        %s303 = smul.u32 4, %s18
        %s304 = smul.u32 4, %s18
        %p306 = scmp.eq.s32.totalorder %s19, 0
        // Predicated region
        $region74: #{transformer_lm_forward.9} parent=68 // pred_check
          %p307 = pneg %p306
        $region75: #{transformer_lm_forward.9} parent=68 // pred_check_branch
          %309 = sbr.rel (%p307) target = $region77
        $region76: #{transformer_lm_forward.9} parent=68 // pred_region
          %v310 = vld [vmem:[%s302] sm:$0xff]
          %v311 = vld [vmem:[%s302 + $0x8] sm:$0xff]
          %v312 = vld [vmem:[%s302 + $0x10] sm:$0xff]
          %v313 = vld [vmem:[%s302 + $0x18] sm:$0xff]
          %v314 = vmul.f32 %v310, %v310
          %v315 = vmul.f32 %v311, %v311
          %v316 = vmul.f32 %v312, %v312
          %v317 = vmul.f32 %v313, %v313
          %318 = vadd.xlane.f32.xlu0 %v314
          %v319 = vpop.xlane.xlu0 %318
          %320 = vadd.xlane.f32.xlu0 %v315
          %v321 = vpop.xlane.xlu0 %320
          %322 = vadd.xlane.f32.xlu0 %v316
          %v323 = vpop.xlane.xlu0 %322
          %324 = vadd.xlane.f32.xlu0 %v317
          %v325 = vpop.xlane.xlu0 %324
          %v326 = vrcp.pop 128.0
          %v327 = vmul.f32 %v319, %v326
          %v328 = vmul.f32 %v321, %v326
          %v329 = vmul.f32 %v323, %v326
          %v330 = vmul.f32 %v325, %v326
          %v331 = vadd.f32 %v327, 1e-05
          %v332 = vadd.f32 %v328, 1e-05
          %v333 = vadd.f32 %v329, 1e-05
          %v334 = vadd.f32 %v330, 1e-05
          %v335 = vrsqrt.pop %v331
          %v336 = vrsqrt.pop %v332
          %v337 = vrsqrt.pop %v333
          %v338 = vrsqrt.pop %v334
          %v339 = vmul.f32 %v310, %v335
          %v340 = vmul.f32 %v311, %v336
          %v341 = vmul.f32 %v312, %v337
          %v342 = vmul.f32 %v313, %v338
          %v343 = vld [vmem:[%s1] sm:$0x1]
          %v345 = vlaneseq
          %v346 = vshrl.u32 %v345, 7
          %v347 = vsub.s32 0, %v346
          %v348 = vrot.slane %v343, %v347
          %v350 = vmul.f32 %v339, %v348
          %v351 = vmul.f32 %v340, %v348
          %v352 = vmul.f32 %v341, %v348
          %v353 = vmul.f32 %v342, %v348
          %v354 = vpack.c.bf16 %v351, %v350
          %v355 = vpack.c.bf16 %v353, %v352
          %v358 = vunpack.c.l.b16 %v354
          %v359 = vunpack.c.h.b16 %v354
          %v360 = vunpack.c.l.b16 %v355
          %v361 = vunpack.c.h.b16 %v355
          %v362 = vpack.c.b16 %v358, %v358
          %v363 = vpack.c.b16 %v359, %v359
          %v364 = vpack.c.b16 %v360, %v360
          %v365 = vpack.c.b16 %v361, %v361
          %370 = vst [vmem:[#allocation2] sm:$0xf] %v362
          %371 = vst [vmem:[#allocation2 + $0x4] sm:$0xf] %v363
          %372 = vst [vmem:[#allocation2 + $0x8] sm:$0xf] %v364
          %373 = vst [vmem:[#allocation2 + $0xc] sm:$0xf] %v365
        $region77: #{transformer_lm_forward.9} parent=68 // pred_fallthru
          _
        %v374 = vld [vmem:[#allocation2] sm:$0xf]
        %v375 = vld [vmem:[#allocation2 + $0x4] sm:$0xf]
        %v376 = vld [vmem:[#allocation2 + $0x8] sm:$0xf]
        %v377 = vld [vmem:[#allocation2 + $0xc] sm:$0xf]
        %v378 = vld [vmem:[%s273] sm:$0xf]
        %v379 = vld [vmem:[%s273 + $0x4] sm:$0xf]
        %v380 = vld [vmem:[%s273 + $0x8] sm:$0xf]
        %v381 = vld [vmem:[%s273 + $0xc] sm:$0xf]
        %v382 = vld [vmem:[%s273 + $0x10] sm:$0xf]
        %v383 = vld [vmem:[%s273 + $0x14] sm:$0xf]
        %v384 = vld [vmem:[%s273 + $0x18] sm:$0xf]
        %v385 = vld [vmem:[%s273 + $0x1c] sm:$0xf]
        %v386 = vld [vmem:[%s273 + $0x20] sm:$0xf]
        %v387 = vld [vmem:[%s273 + $0x24] sm:$0xf]
        %v388 = vld [vmem:[%s273 + $0x28] sm:$0xf]
        %v389 = vld [vmem:[%s273 + $0x2c] sm:$0xf]
        %v390 = vld [vmem:[%s273 + $0x30] sm:$0xf]
        %v391 = vld [vmem:[%s273 + $0x34] sm:$0xf]
        %v392 = vld [vmem:[%s273 + $0x38] sm:$0xf]
        %v393 = vld [vmem:[%s273 + $0x3c] sm:$0xf]
        %v398 = vunpack.c.l.b16 %v374
        %v399 = vunpack.c.l.b16 %v375
        %v400 = vunpack.c.l.b16 %v376
        %v401 = vunpack.c.l.b16 %v377
        %v402 = vpack.c.b16 %v399, %v398
        %v403 = vpack.c.b16 %v401, %v400
        %v422 = vunpack.c.l.b16 %v378
        %v423 = vunpack.c.l.b16 %v379
        %v424 = vunpack.c.l.b16 %v380
        %v425 = vunpack.c.l.b16 %v381
        %v426 = vunpack.c.l.b16 %v382
        %v427 = vunpack.c.l.b16 %v383
        %v428 = vunpack.c.l.b16 %v384
        %v429 = vunpack.c.l.b16 %v385
        %v430 = vunpack.c.l.b16 %v386
        %v431 = vunpack.c.l.b16 %v387
        %v432 = vunpack.c.l.b16 %v388
        %v433 = vunpack.c.l.b16 %v389
        %v434 = vunpack.c.l.b16 %v390
        %v435 = vunpack.c.l.b16 %v391
        %v436 = vunpack.c.l.b16 %v392
        %v437 = vunpack.c.l.b16 %v393
        %v438 = vpack.c.b16 %v423, %v422
        %v439 = vpack.c.b16 %v425, %v424
        %v440 = vpack.c.b16 %v427, %v426
        %v441 = vpack.c.b16 %v429, %v428
        %v442 = vpack.c.b16 %v431, %v430
        %v443 = vpack.c.b16 %v433, %v432
        %v444 = vpack.c.b16 %v435, %v434
        %v445 = vpack.c.b16 %v437, %v436
        %454 = vmatprep.subr.bf16.mxu0 0
        %455 = vmatpush1.bf16.msra.mxu0 %v445
        %456 = vmatprep.subr.bf16.mxu0 0
        %457 = vmatpush1.bf16.msra.mxu0 %v444
        %458 = vmatprep.subr.bf16.mxu0 0
        %459 = vmatpush1.bf16.msra.mxu0 %v443
        %460 = vmatprep.subr.bf16.mxu0 0
        %461 = vmatpush1.bf16.msra.mxu0 %v442
        %462 = vmatprep.subr.bf16.mxu0 0
        %463 = vmatpush1.bf16.msra.mxu0 %v441
        %464 = vmatprep.subr.bf16.mxu0 0
        %465 = vmatpush1.bf16.msra.mxu0 %v440
        %466 = vmatprep.subr.bf16.mxu0 0
        %467 = vmatpush1.bf16.msra.mxu0 %v439
        %468 = vmatprep.subr.bf16.mxu0 0
        %469 = vmatpush1.bf16.msra.mxu0 %v438
        %470 = vmatprep.subr.bf16.mxu0 0
        %471 = vmatpush2.bf16.msra.mxu0 0
        %472 = vmatprep.subr.bf16.mxu0 0
        %473 = vmatpush2.bf16.msra.mxu0 0
        %474 = vmatprep.subr.bf16.mxu0 0
        %475 = vmatpush2.bf16.msra.mxu0 0
        %476 = vmatprep.subr.bf16.mxu0 0
        %477 = vmatpush2.bf16.msra.mxu0 0
        %478 = vmatprep.subr.bf16.mxu0 0
        %479 = vmatpush2.bf16.msra.mxu0 0
        %480 = vmatprep.subr.bf16.mxu0 0
        %481 = vmatpush2.bf16.msra.mxu0 0
        %482 = vmatprep.subr.bf16.mxu0 0
        %483 = vmatpush2.bf16.msra.mxu0 0
        %484 = vmatprep.subr.bf16.mxu0 0
        %485 = vmatpush2.bf16.msra.mxu0 0
        %486 = vmatprep.mubr.bf16.mxu0 0
        %487 = vmatmul.mubr.bf16.gmra.mxu0 %v402
        %v488 = vpop.f32.mrf.mxu0
        %v489 = vadd.f32 0.0, %v488
        %v490 = vpop.f32.mrf.mxu0
        %v491 = vpop.f32.mrf.mxu0
        %v492 = vadd.f32 0.0, %v491
        %v493 = vpop.f32.mrf.mxu0
        %494 = vmatprep.mubr.bf16.mxu0 0
        %495 = vmatmul.mubr.bf16.gmra.mxu0 %v403
        %v496 = vpop.f32.mrf.mxu0
        %v497 = vadd.f32 0.0, %v496
        %v498 = vpop.f32.mrf.mxu0
        %v499 = vpop.f32.mrf.mxu0
        %v500 = vadd.f32 0.0, %v499
        %v501 = vpop.f32.mrf.mxu0
        %502 = vdwg.mxu0
        %v503 = vpack.c.bf16 %v492, %v489
        %v504 = vpack.c.bf16 %v500, %v497
        %v507 = vunpack.c.l.b16 %v503
        %v508 = vunpack.c.h.b16 %v503
        %v509 = vunpack.c.l.b16 %v504
        %v510 = vunpack.c.h.b16 %v504
        %v511 = vpack.c.b16 %v507, %v507
        %v512 = vpack.c.b16 %v508, %v508
        %v513 = vpack.c.b16 %v509, %v509
        %v514 = vpack.c.b16 %v510, %v510
        %519 = vst [vmem:[%s297] sm:$0xf] %v511
        %520 = vst [vmem:[%s297 + $0x4] sm:$0xf] %v512
        %521 = vst [vmem:[%s297 + $0x8] sm:$0xf] %v513
        %522 = vst [vmem:[%s297 + $0xc] sm:$0xf] %v514
        %s523 = sand.u32 %s109, 1
        %s524 = sand.u32 %s109, 1
        %s525 = smul.addr %s524, 16
        %s526 = scalar_lea.vmem [#allocation4], %s525
        // Predicated region
        $region78: #{transformer_lm_forward.9} parent=68 // pred_check
          %p527 = pneg %p119
        $region79: #{transformer_lm_forward.9} parent=68 // pred_check_branch
          %529 = sbr.rel (%p527) target = $region81
        $region80: #{transformer_lm_forward.9} parent=68 // pred_region
          %s530 = smul.u32 4, %s18
          %s531 = smul.addr %s530, 3
          %s532 = sadd.s32 %s19, %s531
          %s533 = smul.addr %s532, 4
          %s534 = scalar_lea.vmem %s3, %s533
          // Predicated region
          $region82: #{transformer_lm_forward.9} parent=80 // pred_check
            _
          $region83: #{transformer_lm_forward.9} parent=80 // pred_check_branch
            %536 = sbr.rel (0) target = $region85
          $region84: #{transformer_lm_forward.9} parent=80 // pred_region
            // Predicated region
            $region86: #{transformer_lm_forward.9} parent=84 // pred_check
              _
            $region87: #{transformer_lm_forward.9} parent=84 // pred_check_branch
              %538 = sbr.rel target = $region89
            $region88: #{transformer_lm_forward.9} parent=84 // pred_region
              // Predicated region
              $region101: #{transformer_lm_forward.9} parent=88 // pred_check
                _
              $region102: #{transformer_lm_forward.9} parent=88 // pred_check_branch
                %560 = sbr.rel (0) target = $region104
              $region103: #{transformer_lm_forward.9} parent=88 // pred_region
                loop: start=0, step=1, limit=1
                $region105: #{transformer_lm_forward.9} parent=103 // loop_pre_header
                  _
                $region106: #{transformer_lm_forward.9} parent=103 // loop_header
                  %s562 = sphi 0, %s566
                  %p563 = scmp.ge.s32.totalorder %s562, 1
                  %s567 = sphi %s526, %s526
                  %s568 = sphi %s534, %s534
                $region107: #{transformer_lm_forward.9} parent=103 // loop_header_branch
                  %565 = sbr.rel (%p563) target = $region111
                $region108: #{transformer_lm_forward.9} parent=103 // loop_body
                  _
                $region109: #{transformer_lm_forward.9} parent=103 // loop_footer
                  %s566 = sadd.s32 1, %s562
                $region110: #{transformer_lm_forward.9} parent=103 // loop_footer_branch
                  %561 = sbr.rel target = $region106
                $region111: #{transformer_lm_forward.9} parent=103 // loop_exit
                  _
                %s570 = ssub.s32 16, 1
                loop: start=0, step=1, limit=1
                $region112: #{transformer_lm_forward.9} parent=103 // loop_pre_header
                  _
                $region113: #{transformer_lm_forward.9} parent=103 // loop_header
                  %s572 = sphi 0, %s576
                  %p573 = scmp.ge.s32.totalorder %s572, 1
                  %s577 = sphi %s526, %s526
                  %s578 = sphi %s534, %s534
                $region114: #{transformer_lm_forward.9} parent=103 // loop_header_branch
                  %575 = sbr.rel (%p573) target = $region118
                $region115: #{transformer_lm_forward.9} parent=103 // loop_body
                  %v579 = vld [vmem:[%s577] sm:%s570]
                  %580 = vst [vmem:[%s578] sm:%s570] %v579
                  %v581 = vld [vmem:[%s577 + $0x4] sm:%s570]
                  %582 = vst [vmem:[%s578 + $0xc] sm:%s570] %v581
                  %v583 = vld [vmem:[%s577 + $0x8] sm:%s570]
                  %584 = vst [vmem:[%s578 + $0x18] sm:%s570] %v583
                  %v585 = vld [vmem:[%s577 + $0xc] sm:%s570]
                  %586 = vst [vmem:[%s578 + $0x24] sm:%s570] %v585
                $region116: #{transformer_lm_forward.9} parent=103 // loop_footer
                  %s576 = sadd.s32 1, %s572
                $region117: #{transformer_lm_forward.9} parent=103 // loop_footer_branch
                  %571 = sbr.rel target = $region113
                $region118: #{transformer_lm_forward.9} parent=103 // loop_exit
                  _
              $region104: #{transformer_lm_forward.9} parent=88 // pred_fallthru
                _
            $region89: #{transformer_lm_forward.9} parent=84 // pred_fallthru
              _
            // Predicated region
            $region90: #{transformer_lm_forward.9} parent=84 // pred_check
              _
            $region91: #{transformer_lm_forward.9} parent=84 // pred_check_branch
              %540 = sbr.rel (0) target = $region93
            $region92: #{transformer_lm_forward.9} parent=84 // pred_region
              %s542 = ssub.s32 16, 1
              loop: start=0, step=1, limit=1
              $region94: #{transformer_lm_forward.9} parent=92 // loop_pre_header
                _
              $region95: #{transformer_lm_forward.9} parent=92 // loop_header
                %s544 = sphi 0, %s548
                %p545 = scmp.ge.s32.totalorder %s544, 1
                %s549 = sphi %s526, %s526
                %s550 = sphi %s534, %s534
              $region96: #{transformer_lm_forward.9} parent=92 // loop_header_branch
                %547 = sbr.rel (%p545) target = $region100
              $region97: #{transformer_lm_forward.9} parent=92 // loop_body
                %v551 = vld [vmem:[%s549] sm:%s542]
                %552 = vst [vmem:[%s550] sm:%s542] %v551
                %v553 = vld [vmem:[%s549 + $0x4] sm:%s542]
                %554 = vst [vmem:[%s550 + $0xc] sm:%s542] %v553
                %v555 = vld [vmem:[%s549 + $0x8] sm:%s542]
                %556 = vst [vmem:[%s550 + $0x18] sm:%s542] %v555
                %v557 = vld [vmem:[%s549 + $0xc] sm:%s542]
                %558 = vst [vmem:[%s550 + $0x24] sm:%s542] %v557
              $region98: #{transformer_lm_forward.9} parent=92 // loop_footer
                %s548 = sadd.s32 1, %s544
              $region99: #{transformer_lm_forward.9} parent=92 // loop_footer_branch
                %543 = sbr.rel target = $region95
              $region100: #{transformer_lm_forward.9} parent=92 // loop_exit
                _
            $region93: #{transformer_lm_forward.9} parent=84 // pred_fallthru
              _
          $region85: #{transformer_lm_forward.9} parent=80 // pred_fallthru
            _
          %587 = vnop
        $region81: #{transformer_lm_forward.9} parent=68 // pred_fallthru
          _
      $region69: #{transformer_lm_forward.9} parent=5 // pred_fallthru
        _
      %p588 = scmp.le.s32.totalorder 2, %s9
      // Predicated region
      $region119: #{transformer_lm_forward.9} parent=5 // pred_check
        %p589 = pneg %p588
      $region120: #{transformer_lm_forward.9} parent=5 // pred_check_branch
        %591 = sbr.rel (%p589) target = $region122
      $region121: #{transformer_lm_forward.9} parent=5 // pred_region
        %s592 = ssub.s32 %s9, 2
        // Predicated region
        $region123: #{transformer_lm_forward.9} parent=121 // pred_check
          %p593 = pneg %p125
        $region124: #{transformer_lm_forward.9} parent=121 // pred_check_branch
          %595 = sbr.rel (%p593) target = $region126
        $region125: #{transformer_lm_forward.9} parent=121 // pred_region
          %s596 = sand.u32 %s110, 1
          %s597 = sand.u32 %s110, 1
          %s598 = smul.addr %s597, 16
          %s599 = scalar_lea.vmem [#allocation4], %s598
        $region126: #{transformer_lm_forward.9} parent=121 // pred_fallthru
          _
      $region122: #{transformer_lm_forward.9} parent=5 // pred_fallthru
        _
    $region6: #{transformer_lm_forward.9} parent=1 // loop_footer
      %s13 = sadd.s32 1, %s9
    $region7: #{transformer_lm_forward.9} parent=1 // loop_footer_branch
      %8 = sbr.rel target = $region3
    $region8: #{transformer_lm_forward.9} parent=1 // loop_exit
      _

// kernel: transformer_lm_forward.11
$region0: #{transformer_lm_forward.11}
  #allocation0 [shape = 'u32[]', space=smem, size = 0x4, offset = 0x4, fixed_abs, tag = 'smem constant byte address 0x4 - core index']
  #allocation1 [shape = 'u32[144,128]{1,0:T(1,128)}', space=vmem, size = 0x12000, scoped, tag = 'internal scratch']
  %s0 = inlined_call_operand.vmem [shape: bf16[32,128], index: 0, kind: input, shape index: {}]
  %s1 = inlined_call_operand.vmem [shape: bf16[128,128], index: 1, kind: input, shape index: {}]
  %s2 = inlined_call_operand.vmem [shape: f32[32,128], index: 2, kind: input, shape index: {}]
  %s3 = inlined_call_operand.vmem [shape: f32[32,128], index: 3, kind: output, shape index: {}]
  %s4 = sld [smem:[#allocation0]]
  $region22: #{transformer_lm_forward.11} parent=0
    _
  %s6 = ssub.s32 1, %s4
  %s7 = scalar_select 0, %s6, %s4
  // Predicated region
  $region2: #{transformer_lm_forward.11} parent=0 // pred_check
    _
  $region3: #{transformer_lm_forward.11} parent=0 // pred_check_branch
    %9 = sbr.rel (0) target = $region5
  $region4: #{transformer_lm_forward.11} parent=0 // pred_region
    _
  $region5: #{transformer_lm_forward.11} parent=0 // pred_fallthru
    _
  // Predicated region
  $region6: #{transformer_lm_forward.11} parent=0 // pred_check
    _
  $region7: #{transformer_lm_forward.11} parent=0 // pred_check_branch
    %11 = sbr.rel (0) target = $region9
  $region8: #{transformer_lm_forward.11} parent=0 // pred_region
    _
  $region9: #{transformer_lm_forward.11} parent=0 // pred_fallthru
    _
  // Predicated region
  $region10: #{transformer_lm_forward.11} parent=0 // pred_check
    _
  $region11: #{transformer_lm_forward.11} parent=0 // pred_check_branch
    %13 = sbr.rel (0) target = $region13
  $region12: #{transformer_lm_forward.11} parent=0 // pred_region
    _
  $region13: #{transformer_lm_forward.11} parent=0 // pred_fallthru
    _
  %v15 = vld [vmem:[%s0] sm:$0xf]
  %v16 = vld [vmem:[%s0 + $0x4] sm:$0xf]
  %v17 = vld [vmem:[%s0 + $0x8] sm:$0xf]
  %v18 = vld [vmem:[%s0 + $0xc] sm:$0xf]
  %v19 = vld [vmem:[%s1] sm:$0xf]
  %v20 = vld [vmem:[%s1 + $0x4] sm:$0xf]
  %v21 = vld [vmem:[%s1 + $0x8] sm:$0xf]
  %v22 = vld [vmem:[%s1 + $0xc] sm:$0xf]
  %v23 = vld [vmem:[%s1 + $0x10] sm:$0xf]
  %v24 = vld [vmem:[%s1 + $0x14] sm:$0xf]
  %v25 = vld [vmem:[%s1 + $0x18] sm:$0xf]
  %v26 = vld [vmem:[%s1 + $0x1c] sm:$0xf]
  %v27 = vld [vmem:[%s1 + $0x20] sm:$0xf]
  %v28 = vld [vmem:[%s1 + $0x24] sm:$0xf]
  %v29 = vld [vmem:[%s1 + $0x28] sm:$0xf]
  %v30 = vld [vmem:[%s1 + $0x2c] sm:$0xf]
  %v31 = vld [vmem:[%s1 + $0x30] sm:$0xf]
  %v32 = vld [vmem:[%s1 + $0x34] sm:$0xf]
  %v33 = vld [vmem:[%s1 + $0x38] sm:$0xf]
  %v34 = vld [vmem:[%s1 + $0x3c] sm:$0xf]
  %v35 = vld [vmem:[%s2] sm:$0xff]
  %v36 = vld [vmem:[%s2 + $0x8] sm:$0xff]
  %v37 = vld [vmem:[%s2 + $0x10] sm:$0xff]
  %v38 = vld [vmem:[%s2 + $0x18] sm:$0xff]
  %v43 = vunpack.c.l.b16 %v15
  %v44 = vunpack.c.l.b16 %v16
  %v45 = vunpack.c.l.b16 %v17
  %v46 = vunpack.c.l.b16 %v18
  %v47 = vpack.c.b16 %v44, %v43
  %v48 = vpack.c.b16 %v46, %v45
  %v67 = vunpack.c.l.b16 %v19
  %v68 = vunpack.c.l.b16 %v20
  %v69 = vunpack.c.l.b16 %v21
  %v70 = vunpack.c.l.b16 %v22
  %v71 = vunpack.c.l.b16 %v23
  %v72 = vunpack.c.l.b16 %v24
  %v73 = vunpack.c.l.b16 %v25
  %v74 = vunpack.c.l.b16 %v26
  %v75 = vunpack.c.l.b16 %v27
  %v76 = vunpack.c.l.b16 %v28
  %v77 = vunpack.c.l.b16 %v29
  %v78 = vunpack.c.l.b16 %v30
  %v79 = vunpack.c.l.b16 %v31
  %v80 = vunpack.c.l.b16 %v32
  %v81 = vunpack.c.l.b16 %v33
  %v82 = vunpack.c.l.b16 %v34
  %v83 = vpack.c.b16 %v68, %v67
  %v84 = vpack.c.b16 %v70, %v69
  %v85 = vpack.c.b16 %v72, %v71
  %v86 = vpack.c.b16 %v74, %v73
  %v87 = vpack.c.b16 %v76, %v75
  %v88 = vpack.c.b16 %v78, %v77
  %v89 = vpack.c.b16 %v80, %v79
  %v90 = vpack.c.b16 %v82, %v81
  %99 = vmatprep.subr.bf16.mxu0 0
  %100 = vmatpush1.bf16.msra.mxu0 %v90
  %101 = vmatprep.subr.bf16.mxu0 0
  %102 = vmatpush1.bf16.msra.mxu0 %v89
  %103 = vmatprep.subr.bf16.mxu0 0
  %104 = vmatpush1.bf16.msra.mxu0 %v88
  %105 = vmatprep.subr.bf16.mxu0 0
  %106 = vmatpush1.bf16.msra.mxu0 %v87
  %107 = vmatprep.subr.bf16.mxu0 0
  %108 = vmatpush1.bf16.msra.mxu0 %v86
  %109 = vmatprep.subr.bf16.mxu0 0
  %110 = vmatpush1.bf16.msra.mxu0 %v85
  %111 = vmatprep.subr.bf16.mxu0 0
  %112 = vmatpush1.bf16.msra.mxu0 %v84
  %113 = vmatprep.subr.bf16.mxu0 0
  %114 = vmatpush1.bf16.msra.mxu0 %v83
  %115 = vmatprep.subr.bf16.mxu0 0
  %116 = vmatpush2.bf16.msra.mxu0 0
  %117 = vmatprep.subr.bf16.mxu0 0
  %118 = vmatpush2.bf16.msra.mxu0 0
  %119 = vmatprep.subr.bf16.mxu0 0
  %120 = vmatpush2.bf16.msra.mxu0 0
  %121 = vmatprep.subr.bf16.mxu0 0
  %122 = vmatpush2.bf16.msra.mxu0 0
  %123 = vmatprep.subr.bf16.mxu0 0
  %124 = vmatpush2.bf16.msra.mxu0 0
  %125 = vmatprep.subr.bf16.mxu0 0
  %126 = vmatpush2.bf16.msra.mxu0 0
  %127 = vmatprep.subr.bf16.mxu0 0
  %128 = vmatpush2.bf16.msra.mxu0 0
  %129 = vmatprep.subr.bf16.mxu0 0
  %130 = vmatpush2.bf16.msra.mxu0 0
  %131 = vmatprep.mubr.bf16.mxu0 0
  %132 = vmatmul.mubr.bf16.gmra.mxu0 %v47
  %v133 = vpop.f32.mrf.mxu0
  %v134 = vadd.f32 %v35, %v133
  %v135 = vpop.f32.mrf.mxu0
  %v136 = vpop.f32.mrf.mxu0
  %v137 = vadd.f32 %v36, %v136
  %v138 = vpop.f32.mrf.mxu0
  %139 = vmatprep.mubr.bf16.mxu0 0
  %140 = vmatmul.mubr.bf16.gmra.mxu0 %v48
  %v141 = vpop.f32.mrf.mxu0
  %v142 = vadd.f32 %v37, %v141
  %v143 = vpop.f32.mrf.mxu0
  %v144 = vpop.f32.mrf.mxu0
  %v145 = vadd.f32 %v38, %v144
  %v146 = vpop.f32.mrf.mxu0
  %147 = vdwg.mxu0
  %148 = vst [vmem:[%s3] sm:$0xff] %v134
  %149 = vst [vmem:[%s3 + $0x8] sm:$0xff] %v137
  %150 = vst [vmem:[%s3 + $0x10] sm:$0xff] %v142
  %151 = vst [vmem:[%s3 + $0x18] sm:$0xff] %v145
  // Predicated region
  $region14: #{transformer_lm_forward.11} parent=0 // pred_check
    _
  $region15: #{transformer_lm_forward.11} parent=0 // pred_check_branch
    %153 = sbr.rel (0) target = $region17
  $region16: #{transformer_lm_forward.11} parent=0 // pred_region
    _
  $region17: #{transformer_lm_forward.11} parent=0 // pred_fallthru
    _
  // Predicated region
  $region18: #{transformer_lm_forward.11} parent=0 // pred_check
    _
  $region19: #{transformer_lm_forward.11} parent=0 // pred_check_branch
    %155 = sbr.rel (0) target = $region21
  $region20: #{transformer_lm_forward.11} parent=0 // pred_region
    _
  $region21: #{transformer_lm_forward.11} parent=0 // pred_fallthru
    _

// kernel: transformer_lm_forward.10
$region0: #{transformer_lm_forward.10}
  #allocation0 [shape = 'u32[]', space=smem, size = 0x4, offset = 0x4, fixed_abs, tag = 'smem constant byte address 0x4 - core index']
  #allocation1 [shape = 'u32[144,128]{1,0:T(1,128)}', space=vmem, size = 0x12000, scoped, tag = 'internal scratch']
  #allocation2 [shape = 'bf16[2,16,64]{2,1,0:T(8,128)(2,1)}', space=vmem, size = 0x2000, scoped, tag = 'scratch operand']
  #allocation3 [shape = 'f32[2,16,1]{2,1,0:T(8,128)}', space=vmem, size = 0x4000, scoped, tag = 'scratch operand']
  #allocation4 [shape = 'f32[2,16,1]{2,1,0:T(8,128)}', space=vmem, size = 0x4000, scoped, tag = 'scratch operand']
  #allocation5 [shape = 'f32[2,16,64]{2,1,0:T(8,128)}', space=vmem, size = 0x4000, scoped, tag = 'scratch operand']
  %s0 = inlined_call_operand.vmem [shape: bf16[2,16,384], index: 0, kind: input, shape index: {}, may-alias: {0,1,2}]
  %s1 = inlined_call_operand.vmem [shape: bf16[2,16,384], index: 1, kind: input, shape index: {}, may-alias: {0,1,2}]
  %s2 = inlined_call_operand.vmem [shape: bf16[2,16,384], index: 2, kind: input, shape index: {}, may-alias: {0,1,2}]
  %s3 = inlined_call_operand.vmem [shape: f32[16,64], index: 3, kind: input, shape index: {}, may-alias: {3,5}]
  %s4 = inlined_call_operand.vmem [shape: f32[16,64], index: 4, kind: input, shape index: {}, may-alias: {4,6}]
  %s5 = inlined_call_operand.vmem [shape: f32[16,64], index: 5, kind: input, shape index: {}, may-alias: {3,5}]
  %s6 = inlined_call_operand.vmem [shape: f32[16,64], index: 6, kind: input, shape index: {}, may-alias: {4,6}]
  %s7 = inlined_call_operand.vmem [shape: bf16[2,16,128], index: 7, kind: output, shape index: {}]
  %s8 = sld [smem:[#allocation0]]
  $region196: #{transformer_lm_forward.10} parent=0
    _
  %s10 = ssub.s32 1, %s8
  %s11 = scalar_select 0, %s10, %s8
  $region1: #{transformer_lm_forward.10} parent=0
    #allocation6 [shape = 'u8[8192]{0}', space=vmem, size = 0x2000, scoped, tag = 'input window, operand 0']
    #allocation7 [shape = 'u8[8192]{0}', space=vmem, size = 0x2000, scoped, tag = 'input window, operand 1']
    #allocation8 [shape = 'u8[8192]{0}', space=vmem, size = 0x2000, scoped, tag = 'input window, operand 2']
    loop: start=0, step=1, limit=4
    $region2: #{transformer_lm_forward.10} parent=1 // loop_pre_header
      _
    $region3: #{transformer_lm_forward.10} parent=1 // loop_header
      %s13 = sphi 0, %s17
      %p14 = scmp.ge.s32.totalorder %s13, 4
      %s20 = sphi 0, %s39
      %s21 = sphi 0, %s35
      %s22 = sphi 0, %s31
      %s23 = sphi 0, %s20
      %s24 = sphi 0, %s21
      %s25 = sphi 0, %s22
      %s26 = sphi 0, %s23
      %s27 = sphi 0, %s24
      %s28 = sphi 0, %s25
      %s44 = sphi 0, %s46
      %s47 = sphi 0, %s44
      %s48 = sphi 0, %s47
      %s64 = sphi 0, %s48
      %s76 = sphi 0, %s78
      %s79 = sphi 0, %s76
      %s80 = sphi 0, %s79
      %s96 = sphi 0, %s80
      %s108 = sphi 0, %s110
      %s111 = sphi 0, %s108
      %s112 = sphi 0, %s111
      %s128 = sphi 0, %s112
      %s134 = sphi 0, %s136
      %s137 = sphi 0, %s134
      %s138 = sphi 0, %s137
      %s154 = sphi 0, %s138
      %s160 = sphi 0, %s162
      %s163 = sphi 0, %s160
      %s164 = sphi 0, %s163
      %s180 = sphi 0, %s164
      %s190 = sphi 0, %s192
      %s193 = sphi 0, %s190
      %s194 = sphi 0, %s193
      %s210 = sphi 0, %s194
      %s220 = sphi 0, %s222
      %s223 = sphi 0, %s220
      %s224 = sphi 0, %s223
      %s240 = sphi 0, %s224
      %s248 = sphi 0, %s250
      %s251 = sphi 0, %s248
      %s252 = sphi 0, %s251
      %s268 = sphi 0, %s252
    $region4: #{transformer_lm_forward.10} parent=1 // loop_header_branch
      %16 = sbr.rel (%p14) target = $region8
    $region5: #{transformer_lm_forward.10} parent=1 // loop_body
      %s18 = ssub.s32 %s13, 1
      %s19 = ssub.s32 %s13, 2
      %s29 = sadd.s32 1, %s22
      %p30 = scmp.ge.s32.totalorder %s29, 1
      %s31 = scalar_select %p30, 0, %s29
      %s32 = sadd.s32 1, %s21
      %s33 = scalar_select %p30, %s32, %s21
      %p34 = scmp.ge.s32.totalorder %s33, 1
      %s35 = scalar_select %p34, 0, %s33
      %s36 = sadd.s32 1, %s20
      %s37 = scalar_select %p34, %s36, %s20
      %p38 = scmp.ge.s32.totalorder %s37, 2
      %s39 = scalar_select %p38, 0, %s37
      %s40 = ssub.s32 %s20, %s39
      %s41 = ssub.s32 %s21, %s35
      %s42 = sor.u32 %s40, %s41
      %p43 = scmp.eq.s32.totalorder %s42, 0
      %s45 = sadd.s32 %s44, 1
      %s46 = scalar_select %p43, %s44, %s45
      %p49 = pneg %p43
      %p50 = scmp.eq.s32.totalorder %s13, 1
      %p51 = por %p49, %p50
      %p52 = scmp.ne.s32.totalorder %s44, %s47
      %p53 = scmp.eq.s32.totalorder %s13, 0
      %p54 = por %p52, %p53
      %p55 = scmp.ne.s32.totalorder %s44, %s47
      %p56 = scmp.eq.s32.totalorder %s18, 1
      %p57 = por %p55, %p56
      %p58 = scmp.ne.s32.totalorder %s47, %s48
      %p59 = scmp.eq.s32.totalorder %s18, 0
      %p60 = por %p58, %p59
      %p61 = scmp.ne.s32.totalorder %s47, %s48
      %p62 = scmp.eq.s32.totalorder %s19, 1
      %p63 = por %p61, %p62
      %p65 = scmp.ne.s32.totalorder %s48, %s64
      %p66 = scmp.eq.s32.totalorder %s19, 0
      %p67 = por %p65, %p66
      %p68 = scmp.lt.s32.totalorder %s21, %s22
      %s69 = scalar_select %p68, %s21, %s22
      %p70 = scmp.lt.s32.totalorder %s35, %s31
      %s71 = scalar_select %p70, %s35, %s31
      %s72 = ssub.s32 %s20, %s39
      %s73 = ssub.s32 %s69, %s71
      %s74 = sor.u32 %s72, %s73
      %p75 = scmp.eq.s32.totalorder %s74, 0
      %s77 = sadd.s32 %s76, 1
      %s78 = scalar_select %p75, %s76, %s77
      %p81 = pneg %p75
      %p82 = scmp.eq.s32.totalorder %s13, 1
      %p83 = por %p81, %p82
      %p84 = scmp.ne.s32.totalorder %s76, %s79
      %p85 = scmp.eq.s32.totalorder %s13, 0
      %p86 = por %p84, %p85
      %p87 = scmp.ne.s32.totalorder %s76, %s79
      %p88 = scmp.eq.s32.totalorder %s18, 1
      %p89 = por %p87, %p88
      %p90 = scmp.ne.s32.totalorder %s79, %s80
      %p91 = scmp.eq.s32.totalorder %s18, 0
      %p92 = por %p90, %p91
      %p93 = scmp.ne.s32.totalorder %s79, %s80
      %p94 = scmp.eq.s32.totalorder %s19, 1
      %p95 = por %p93, %p94
      %p97 = scmp.ne.s32.totalorder %s80, %s96
      %p98 = scmp.eq.s32.totalorder %s19, 0
      %p99 = por %p97, %p98
      %p100 = scmp.lt.s32.totalorder %s21, %s22
      %s101 = scalar_select %p100, %s21, %s22
      %p102 = scmp.lt.s32.totalorder %s35, %s31
      %s103 = scalar_select %p102, %s35, %s31
      %s104 = ssub.s32 %s20, %s39
      %s105 = ssub.s32 %s101, %s103
      %s106 = sor.u32 %s104, %s105
      %p107 = scmp.eq.s32.totalorder %s106, 0
      %s109 = sadd.s32 %s108, 1
      %s110 = scalar_select %p107, %s108, %s109
      %p113 = pneg %p107
      %p114 = scmp.eq.s32.totalorder %s13, 1
      %p115 = por %p113, %p114
      %p116 = scmp.ne.s32.totalorder %s108, %s111
      %p117 = scmp.eq.s32.totalorder %s13, 0
      %p118 = por %p116, %p117
      %p119 = scmp.ne.s32.totalorder %s108, %s111
      %p120 = scmp.eq.s32.totalorder %s18, 1
      %p121 = por %p119, %p120
      %p122 = scmp.ne.s32.totalorder %s111, %s112
      %p123 = scmp.eq.s32.totalorder %s18, 0
      %p124 = por %p122, %p123
      %p125 = scmp.ne.s32.totalorder %s111, %s112
      %p126 = scmp.eq.s32.totalorder %s19, 1
      %p127 = por %p125, %p126
      %p129 = scmp.ne.s32.totalorder %s112, %s128
      %p130 = scmp.eq.s32.totalorder %s19, 0
      %p131 = por %p129, %p130
      %s132 = ssub.s32 %s21, %s35
      %p133 = scmp.eq.s32.totalorder %s132, 0
      %s135 = sadd.s32 %s134, 1
      %s136 = scalar_select %p133, %s134, %s135
      %p139 = pneg %p133
      %p140 = scmp.eq.s32.totalorder %s13, 1
      %p141 = por %p139, %p140
      %p142 = scmp.ne.s32.totalorder %s134, %s137
      %p143 = scmp.eq.s32.totalorder %s13, 0
      %p144 = por %p142, %p143
      %p145 = scmp.ne.s32.totalorder %s134, %s137
      %p146 = scmp.eq.s32.totalorder %s18, 1
      %p147 = por %p145, %p146
      %p148 = scmp.ne.s32.totalorder %s137, %s138
      %p149 = scmp.eq.s32.totalorder %s18, 0
      %p150 = por %p148, %p149
      %p151 = scmp.ne.s32.totalorder %s137, %s138
      %p152 = scmp.eq.s32.totalorder %s19, 1
      %p153 = por %p151, %p152
      %p155 = scmp.ne.s32.totalorder %s138, %s154
      %p156 = scmp.eq.s32.totalorder %s19, 0
      %p157 = por %p155, %p156
      %s158 = ssub.s32 %s21, %s35
      %p159 = scmp.eq.s32.totalorder %s158, 0
      %s161 = sadd.s32 %s160, 1
      %s162 = scalar_select %p159, %s160, %s161
      %p165 = pneg %p159
      %p166 = scmp.eq.s32.totalorder %s13, 1
      %p167 = por %p165, %p166
      %p168 = scmp.ne.s32.totalorder %s160, %s163
      %p169 = scmp.eq.s32.totalorder %s13, 0
      %p170 = por %p168, %p169
      %p171 = scmp.ne.s32.totalorder %s160, %s163
      %p172 = scmp.eq.s32.totalorder %s18, 1
      %p173 = por %p171, %p172
      %p174 = scmp.ne.s32.totalorder %s163, %s164
      %p175 = scmp.eq.s32.totalorder %s18, 0
      %p176 = por %p174, %p175
      %p177 = scmp.ne.s32.totalorder %s163, %s164
      %p178 = scmp.eq.s32.totalorder %s19, 1
      %p179 = por %p177, %p178
      %p181 = scmp.ne.s32.totalorder %s164, %s180
      %p182 = scmp.eq.s32.totalorder %s19, 0
      %p183 = por %p181, %p182
      %p184 = scmp.lt.s32.totalorder %s21, %s22
      %s185 = scalar_select %p184, %s21, %s22
      %p186 = scmp.lt.s32.totalorder %s35, %s31
      %s187 = scalar_select %p186, %s35, %s31
      %s188 = ssub.s32 %s185, %s187
      %p189 = scmp.eq.s32.totalorder %s188, 0
      %s191 = sadd.s32 %s190, 1
      %s192 = scalar_select %p189, %s190, %s191
      %p195 = pneg %p189
      %p196 = scmp.eq.s32.totalorder %s13, 1
      %p197 = por %p195, %p196
      %p198 = scmp.ne.s32.totalorder %s190, %s193
      %p199 = scmp.eq.s32.totalorder %s13, 0
      %p200 = por %p198, %p199
      %p201 = scmp.ne.s32.totalorder %s190, %s193
      %p202 = scmp.eq.s32.totalorder %s18, 1
      %p203 = por %p201, %p202
      %p204 = scmp.ne.s32.totalorder %s193, %s194
      %p205 = scmp.eq.s32.totalorder %s18, 0
      %p206 = por %p204, %p205
      %p207 = scmp.ne.s32.totalorder %s193, %s194
      %p208 = scmp.eq.s32.totalorder %s19, 1
      %p209 = por %p207, %p208
      %p211 = scmp.ne.s32.totalorder %s194, %s210
      %p212 = scmp.eq.s32.totalorder %s19, 0
      %p213 = por %p211, %p212
      %p214 = scmp.lt.s32.totalorder %s21, %s22
      %s215 = scalar_select %p214, %s21, %s22
      %p216 = scmp.lt.s32.totalorder %s35, %s31
      %s217 = scalar_select %p216, %s35, %s31
      %s218 = ssub.s32 %s215, %s217
      %p219 = scmp.eq.s32.totalorder %s218, 0
      %s221 = sadd.s32 %s220, 1
      %s222 = scalar_select %p219, %s220, %s221
      %p225 = pneg %p219
      %p226 = scmp.eq.s32.totalorder %s13, 1
      %p227 = por %p225, %p226
      %p228 = scmp.ne.s32.totalorder %s220, %s223
      %p229 = scmp.eq.s32.totalorder %s13, 0
      %p230 = por %p228, %p229
      %p231 = scmp.ne.s32.totalorder %s220, %s223
      %p232 = scmp.eq.s32.totalorder %s18, 1
      %p233 = por %p231, %p232
      %p234 = scmp.ne.s32.totalorder %s223, %s224
      %p235 = scmp.eq.s32.totalorder %s18, 0
      %p236 = por %p234, %p235
      %p237 = scmp.ne.s32.totalorder %s223, %s224
      %p238 = scmp.eq.s32.totalorder %s19, 1
      %p239 = por %p237, %p238
      %p241 = scmp.ne.s32.totalorder %s224, %s240
      %p242 = scmp.eq.s32.totalorder %s19, 0
      %p243 = por %p241, %p242
      %s244 = ssub.s32 %s20, %s39
      %s245 = ssub.s32 %s21, %s35
      %s246 = sor.u32 %s244, %s245
      %p247 = scmp.eq.s32.totalorder %s246, 0
      %s249 = sadd.s32 %s248, 1
      %s250 = scalar_select %p247, %s248, %s249
      %p253 = pneg %p247
      %p254 = scmp.eq.s32.totalorder %s13, 1
      %p255 = por %p253, %p254
      %p256 = scmp.ne.s32.totalorder %s248, %s251
      %p257 = scmp.eq.s32.totalorder %s13, 0
      %p258 = por %p256, %p257
      %p259 = scmp.ne.s32.totalorder %s248, %s251
      %p260 = scmp.eq.s32.totalorder %s18, 1
      %p261 = por %p259, %p260
      %p262 = scmp.ne.s32.totalorder %s251, %s252
      %p263 = scmp.eq.s32.totalorder %s18, 0
      %p264 = por %p262, %p263
      %p265 = scmp.ne.s32.totalorder %s251, %s252
      %p266 = scmp.eq.s32.totalorder %s19, 1
      %p267 = por %p265, %p266
      %p269 = scmp.ne.s32.totalorder %s252, %s268
      %p270 = scmp.eq.s32.totalorder %s19, 0
      %p271 = por %p269, %p270
      %p272 = scmp.le.s32.totalorder 1, %s13
      %p273 = scmp.lt.s32.totalorder %s13, 3
      %p274 = pnand %p272, %p273
      %p275 = pneg %p274
      // Predicated region
      $region9: #{transformer_lm_forward.10} parent=5 // pred_check
        _
      $region10: #{transformer_lm_forward.10} parent=5 // pred_check_branch
        %277 = sbr.rel (%p274) target = $region12
      $region11: #{transformer_lm_forward.10} parent=5 // pred_region
        %s278 = ssub.s32 %s13, 1
        // Predicated region
        $region13: #{transformer_lm_forward.10} parent=11 // pred_check
          %p279 = pneg %p150
        $region14: #{transformer_lm_forward.10} parent=11 // pred_check_branch
          %281 = sbr.rel (%p279) target = $region16
        $region15: #{transformer_lm_forward.10} parent=11 // pred_region
          %s282 = smul.u32 2, %s24
          %p283 = scmp.lt.s32.totalorder %s282, 1
          %s284 = scalar_select %p283, %s282, 1
          %s285 = smul.addr %s284, 8
          %s286 = scalar_lea.vmem %s3, %s285
          %s287 = smul.u32 2, %s24
        $region16: #{transformer_lm_forward.10} parent=11 // pred_fallthru
          _
        // Predicated region
        $region17: #{transformer_lm_forward.10} parent=11 // pred_check
          %p288 = pneg %p176
        $region18: #{transformer_lm_forward.10} parent=11 // pred_check_branch
          %290 = sbr.rel (%p288) target = $region20
        $region19: #{transformer_lm_forward.10} parent=11 // pred_region
          %s291 = smul.u32 2, %s24
          %p292 = scmp.lt.s32.totalorder %s291, 1
          %s293 = scalar_select %p292, %s291, 1
          %s294 = smul.addr %s293, 8
          %s295 = scalar_lea.vmem %s4, %s294
          %s296 = smul.u32 2, %s24
        $region20: #{transformer_lm_forward.10} parent=11 // pred_fallthru
          _
        // Predicated region
        $region21: #{transformer_lm_forward.10} parent=11 // pred_check
          %p297 = pneg %p206
        $region22: #{transformer_lm_forward.10} parent=11 // pred_check_branch
          %299 = sbr.rel (%p297) target = $region24
        $region23: #{transformer_lm_forward.10} parent=11 // pred_region
          %p300 = scmp.lt.s32.totalorder %s24, %s25
          %s301 = scalar_select %p300, %s24, %s25
          %s302 = smul.u32 2, %s301
          %p303 = scmp.lt.s32.totalorder %s302, 1
          %s304 = scalar_select %p303, %s302, 1
          %s305 = smul.addr %s304, 8
          %s306 = scalar_lea.vmem %s5, %s305
          %p307 = scmp.lt.s32.totalorder %s24, %s25
          %s308 = scalar_select %p307, %s24, %s25
          %s309 = smul.u32 2, %s308
        $region24: #{transformer_lm_forward.10} parent=11 // pred_fallthru
          _
        // Predicated region
        $region25: #{transformer_lm_forward.10} parent=11 // pred_check
          %p310 = pneg %p236
        $region26: #{transformer_lm_forward.10} parent=11 // pred_check_branch
          %312 = sbr.rel (%p310) target = $region28
        $region27: #{transformer_lm_forward.10} parent=11 // pred_region
          %p313 = scmp.lt.s32.totalorder %s24, %s25
          %s314 = scalar_select %p313, %s24, %s25
          %s315 = smul.u32 2, %s314
          %p316 = scmp.lt.s32.totalorder %s315, 1
          %s317 = scalar_select %p316, %s315, 1
          %s318 = smul.addr %s317, 8
          %s319 = scalar_lea.vmem %s6, %s318
          %p320 = scmp.lt.s32.totalorder %s24, %s25
          %s321 = scalar_select %p320, %s24, %s25
          %s322 = smul.u32 2, %s321
        $region28: #{transformer_lm_forward.10} parent=11 // pred_fallthru
          _
      $region12: #{transformer_lm_forward.10} parent=5 // pred_fallthru
        _
      %p323 = scmp.lt.s32.totalorder %s13, 2
      // Predicated region
      $region29: #{transformer_lm_forward.10} parent=5 // pred_check
        %p324 = pneg %p323
      $region30: #{transformer_lm_forward.10} parent=5 // pred_check_branch
        %326 = sbr.rel (%p324) target = $region32
      $region31: #{transformer_lm_forward.10} parent=5 // pred_region
        // Predicated region
        $region33: #{transformer_lm_forward.10} parent=31 // pred_check
          %p327 = pneg %p54
        $region34: #{transformer_lm_forward.10} parent=31 // pred_check_branch
          %329 = sbr.rel (%p327) target = $region36
        $region35: #{transformer_lm_forward.10} parent=31 // pred_region
          %s330 = sand.u32 %s44, 1
          %s331 = sand.u32 %s44, 1
          %s332 = smul.addr %s331, 8
          %s333 = scalar_lea.vmem [#allocation6], %s332
          %s334 = smul.u32 2, %s21
          %s335 = smul.addr %s334, 3
          %s336 = smul.addr %s20, 6
          %s337 = sadd.s32 %s335, %s336
          %s338 = smul.addr %s337, 4
          %s339 = scalar_lea.vmem %s0, %s338
          // Predicated region
          $region37: #{transformer_lm_forward.10} parent=35 // pred_check
            _
          $region38: #{transformer_lm_forward.10} parent=35 // pred_check_branch
            %341 = sbr.rel (0) target = $region40
          $region39: #{transformer_lm_forward.10} parent=35 // pred_region
            // Predicated region
            $region41: #{transformer_lm_forward.10} parent=39 // pred_check
              _
            $region42: #{transformer_lm_forward.10} parent=39 // pred_check_branch
              %343 = sbr.rel target = $region44
            $region43: #{transformer_lm_forward.10} parent=39 // pred_region
              // Predicated region
              $region56: #{transformer_lm_forward.10} parent=43 // pred_check
                _
              $region57: #{transformer_lm_forward.10} parent=43 // pred_check_branch
                %361 = sbr.rel (0) target = $region59
              $region58: #{transformer_lm_forward.10} parent=43 // pred_region
                loop: start=0, step=1, limit=1
                $region60: #{transformer_lm_forward.10} parent=58 // loop_pre_header
                  _
                $region61: #{transformer_lm_forward.10} parent=58 // loop_header
                  %s363 = sphi 0, %s367
                  %p364 = scmp.ge.s32.totalorder %s363, 1
                  %s368 = sphi %s339, %s339
                  %s369 = sphi %s333, %s333
                $region62: #{transformer_lm_forward.10} parent=58 // loop_header_branch
                  %366 = sbr.rel (%p364) target = $region66
                $region63: #{transformer_lm_forward.10} parent=58 // loop_body
                  _
                $region64: #{transformer_lm_forward.10} parent=58 // loop_footer
                  %s367 = sadd.s32 1, %s363
                $region65: #{transformer_lm_forward.10} parent=58 // loop_footer_branch
                  %362 = sbr.rel target = $region61
                $region66: #{transformer_lm_forward.10} parent=58 // loop_exit
                  _
                %s371 = ssub.s32 16, 1
                loop: start=0, step=1, limit=1
                $region67: #{transformer_lm_forward.10} parent=58 // loop_pre_header
                  _
                $region68: #{transformer_lm_forward.10} parent=58 // loop_header
                  %s373 = sphi 0, %s377
                  %p374 = scmp.ge.s32.totalorder %s373, 1
                  %s378 = sphi %s339, %s339
                  %s379 = sphi %s333, %s333
                $region69: #{transformer_lm_forward.10} parent=58 // loop_header_branch
                  %376 = sbr.rel (%p374) target = $region73
                $region70: #{transformer_lm_forward.10} parent=58 // loop_body
                  %v380 = vld [vmem:[%s378] sm:%s371]
                  %381 = vst [vmem:[%s379] sm:%s371] %v380
                  %v382 = vld [vmem:[%s378 + $0xc] sm:%s371]
                  %383 = vst [vmem:[%s379 + $0x4] sm:%s371] %v382
                $region71: #{transformer_lm_forward.10} parent=58 // loop_footer
                  %s377 = sadd.s32 1, %s373
                $region72: #{transformer_lm_forward.10} parent=58 // loop_footer_branch
                  %372 = sbr.rel target = $region68
                $region73: #{transformer_lm_forward.10} parent=58 // loop_exit
                  _
              $region59: #{transformer_lm_forward.10} parent=43 // pred_fallthru
                _
            $region44: #{transformer_lm_forward.10} parent=39 // pred_fallthru
              _
            // Predicated region
            $region45: #{transformer_lm_forward.10} parent=39 // pred_check
              _
            $region46: #{transformer_lm_forward.10} parent=39 // pred_check_branch
              %345 = sbr.rel (0) target = $region48
            $region47: #{transformer_lm_forward.10} parent=39 // pred_region
              %s347 = ssub.s32 16, 1
              loop: start=0, step=1, limit=1
              $region49: #{transformer_lm_forward.10} parent=47 // loop_pre_header
                _
              $region50: #{transformer_lm_forward.10} parent=47 // loop_header
                %s349 = sphi 0, %s353
                %p350 = scmp.ge.s32.totalorder %s349, 1
                %s354 = sphi %s339, %s339
                %s355 = sphi %s333, %s333
              $region51: #{transformer_lm_forward.10} parent=47 // loop_header_branch
                %352 = sbr.rel (%p350) target = $region55
              $region52: #{transformer_lm_forward.10} parent=47 // loop_body
                %v356 = vld [vmem:[%s354] sm:%s347]
                %357 = vst [vmem:[%s355] sm:%s347] %v356
                %v358 = vld [vmem:[%s354 + $0xc] sm:%s347]
                %359 = vst [vmem:[%s355 + $0x4] sm:%s347] %v358
              $region53: #{transformer_lm_forward.10} parent=47 // loop_footer
                %s353 = sadd.s32 1, %s349
              $region54: #{transformer_lm_forward.10} parent=47 // loop_footer_branch
                %348 = sbr.rel target = $region50
              $region55: #{transformer_lm_forward.10} parent=47 // loop_exit
                _
            $region48: #{transformer_lm_forward.10} parent=39 // pred_fallthru
              _
          $region40: #{transformer_lm_forward.10} parent=35 // pred_fallthru
            _
          %384 = vnop
        $region36: #{transformer_lm_forward.10} parent=31 // pred_fallthru
          _
        // Predicated region
        $region74: #{transformer_lm_forward.10} parent=31 // pred_check
          %p385 = pneg %p86
        $region75: #{transformer_lm_forward.10} parent=31 // pred_check_branch
          %387 = sbr.rel (%p385) target = $region77
        $region76: #{transformer_lm_forward.10} parent=31 // pred_region
          %s388 = sand.u32 %s76, 1
          %s389 = sand.u32 %s76, 1
          %s390 = smul.addr %s389, 8
          %s391 = scalar_lea.vmem [#allocation7], %s390
          %p392 = scmp.lt.s32.totalorder %s21, %s22
          %s393 = scalar_select %p392, %s21, %s22
          %s394 = smul.u32 2, %s393
          %s395 = smul.addr %s394, 3
          %s396 = sadd.s32 1, %s395
          %s397 = smul.addr %s20, 6
          %s398 = sadd.s32 %s396, %s397
          %s399 = smul.addr %s398, 4
          %s400 = scalar_lea.vmem %s1, %s399
          // Predicated region
          $region78: #{transformer_lm_forward.10} parent=76 // pred_check
            _
          $region79: #{transformer_lm_forward.10} parent=76 // pred_check_branch
            %402 = sbr.rel (0) target = $region81
          $region80: #{transformer_lm_forward.10} parent=76 // pred_region
            // Predicated region
            $region82: #{transformer_lm_forward.10} parent=80 // pred_check
              _
            $region83: #{transformer_lm_forward.10} parent=80 // pred_check_branch
              %404 = sbr.rel target = $region85
            $region84: #{transformer_lm_forward.10} parent=80 // pred_region
              // Predicated region
              $region97: #{transformer_lm_forward.10} parent=84 // pred_check
                _
              $region98: #{transformer_lm_forward.10} parent=84 // pred_check_branch
                %422 = sbr.rel (0) target = $region100
              $region99: #{transformer_lm_forward.10} parent=84 // pred_region
                loop: start=0, step=1, limit=1
                $region101: #{transformer_lm_forward.10} parent=99 // loop_pre_header
                  _
                $region102: #{transformer_lm_forward.10} parent=99 // loop_header
                  %s424 = sphi 0, %s428
                  %p425 = scmp.ge.s32.totalorder %s424, 1
                  %s429 = sphi %s400, %s400
                  %s430 = sphi %s391, %s391
                $region103: #{transformer_lm_forward.10} parent=99 // loop_header_branch
                  %427 = sbr.rel (%p425) target = $region107
                $region104: #{transformer_lm_forward.10} parent=99 // loop_body
                  _
                $region105: #{transformer_lm_forward.10} parent=99 // loop_footer
                  %s428 = sadd.s32 1, %s424
                $region106: #{transformer_lm_forward.10} parent=99 // loop_footer_branch
                  %423 = sbr.rel target = $region102
                $region107: #{transformer_lm_forward.10} parent=99 // loop_exit
                  _
                %s432 = ssub.s32 16, 1
                loop: start=0, step=1, limit=1
                $region108: #{transformer_lm_forward.10} parent=99 // loop_pre_header
                  _
                $region109: #{transformer_lm_forward.10} parent=99 // loop_header
                  %s434 = sphi 0, %s438
                  %p435 = scmp.ge.s32.totalorder %s434, 1
                  %s439 = sphi %s400, %s400
                  %s440 = sphi %s391, %s391
                $region110: #{transformer_lm_forward.10} parent=99 // loop_header_branch
                  %437 = sbr.rel (%p435) target = $region114
                $region111: #{transformer_lm_forward.10} parent=99 // loop_body
                  %v441 = vld [vmem:[%s439] sm:%s432]
                  %442 = vst [vmem:[%s440] sm:%s432] %v441
                  %v443 = vld [vmem:[%s439 + $0xc] sm:%s432]
                  %444 = vst [vmem:[%s440 + $0x4] sm:%s432] %v443
                $region112: #{transformer_lm_forward.10} parent=99 // loop_footer
                  %s438 = sadd.s32 1, %s434
                $region113: #{transformer_lm_forward.10} parent=99 // loop_footer_branch
                  %433 = sbr.rel target = $region109
                $region114: #{transformer_lm_forward.10} parent=99 // loop_exit
                  _
              $region100: #{transformer_lm_forward.10} parent=84 // pred_fallthru
                _
            $region85: #{transformer_lm_forward.10} parent=80 // pred_fallthru
              _
            // Predicated region
            $region86: #{transformer_lm_forward.10} parent=80 // pred_check
              _
            $region87: #{transformer_lm_forward.10} parent=80 // pred_check_branch
              %406 = sbr.rel (0) target = $region89
            $region88: #{transformer_lm_forward.10} parent=80 // pred_region
              %s408 = ssub.s32 16, 1
              loop: start=0, step=1, limit=1
              $region90: #{transformer_lm_forward.10} parent=88 // loop_pre_header
                _
              $region91: #{transformer_lm_forward.10} parent=88 // loop_header
                %s410 = sphi 0, %s414
                %p411 = scmp.ge.s32.totalorder %s410, 1
                %s415 = sphi %s400, %s400
                %s416 = sphi %s391, %s391
              $region92: #{transformer_lm_forward.10} parent=88 // loop_header_branch
                %413 = sbr.rel (%p411) target = $region96
              $region93: #{transformer_lm_forward.10} parent=88 // loop_body
                %v417 = vld [vmem:[%s415] sm:%s408]
                %418 = vst [vmem:[%s416] sm:%s408] %v417
                %v419 = vld [vmem:[%s415 + $0xc] sm:%s408]
                %420 = vst [vmem:[%s416 + $0x4] sm:%s408] %v419
              $region94: #{transformer_lm_forward.10} parent=88 // loop_footer
                %s414 = sadd.s32 1, %s410
              $region95: #{transformer_lm_forward.10} parent=88 // loop_footer_branch
                %409 = sbr.rel target = $region91
              $region96: #{transformer_lm_forward.10} parent=88 // loop_exit
                _
            $region89: #{transformer_lm_forward.10} parent=80 // pred_fallthru
              _
          $region81: #{transformer_lm_forward.10} parent=76 // pred_fallthru
            _
          %445 = vnop
        $region77: #{transformer_lm_forward.10} parent=31 // pred_fallthru
          _
        // Predicated region
        $region115: #{transformer_lm_forward.10} parent=31 // pred_check
          %p446 = pneg %p118
        $region116: #{transformer_lm_forward.10} parent=31 // pred_check_branch
          %448 = sbr.rel (%p446) target = $region118
        $region117: #{transformer_lm_forward.10} parent=31 // pred_region
          %s449 = sand.u32 %s108, 1
          %s450 = sand.u32 %s108, 1
          %s451 = smul.addr %s450, 8
          %s452 = scalar_lea.vmem [#allocation8], %s451
          %p453 = scmp.lt.s32.totalorder %s21, %s22
          %s454 = scalar_select %p453, %s21, %s22
          %s455 = smul.u32 2, %s454
          %s456 = smul.addr %s455, 3
          %s457 = sadd.s32 2, %s456
          %s458 = smul.addr %s20, 6
          %s459 = sadd.s32 %s457, %s458
          %s460 = smul.addr %s459, 4
          %s461 = scalar_lea.vmem %s2, %s460
          // Predicated region
          $region119: #{transformer_lm_forward.10} parent=117 // pred_check
            _
          $region120: #{transformer_lm_forward.10} parent=117 // pred_check_branch
            %463 = sbr.rel (0) target = $region122
          $region121: #{transformer_lm_forward.10} parent=117 // pred_region
            // Predicated region
            $region123: #{transformer_lm_forward.10} parent=121 // pred_check
              _
            $region124: #{transformer_lm_forward.10} parent=121 // pred_check_branch
              %465 = sbr.rel target = $region126
            $region125: #{transformer_lm_forward.10} parent=121 // pred_region
              // Predicated region
              $region138: #{transformer_lm_forward.10} parent=125 // pred_check
                _
              $region139: #{transformer_lm_forward.10} parent=125 // pred_check_branch
                %483 = sbr.rel (0) target = $region141
              $region140: #{transformer_lm_forward.10} parent=125 // pred_region
                loop: start=0, step=1, limit=1
                $region142: #{transformer_lm_forward.10} parent=140 // loop_pre_header
                  _
                $region143: #{transformer_lm_forward.10} parent=140 // loop_header
                  %s485 = sphi 0, %s489
                  %p486 = scmp.ge.s32.totalorder %s485, 1
                  %s490 = sphi %s461, %s461
                  %s491 = sphi %s452, %s452
                $region144: #{transformer_lm_forward.10} parent=140 // loop_header_branch
                  %488 = sbr.rel (%p486) target = $region148
                $region145: #{transformer_lm_forward.10} parent=140 // loop_body
                  _
                $region146: #{transformer_lm_forward.10} parent=140 // loop_footer
                  %s489 = sadd.s32 1, %s485
                $region147: #{transformer_lm_forward.10} parent=140 // loop_footer_branch
                  %484 = sbr.rel target = $region143
                $region148: #{transformer_lm_forward.10} parent=140 // loop_exit
                  _
                %s493 = ssub.s32 16, 1
                loop: start=0, step=1, limit=1
                $region149: #{transformer_lm_forward.10} parent=140 // loop_pre_header
                  _
                $region150: #{transformer_lm_forward.10} parent=140 // loop_header
                  %s495 = sphi 0, %s499
                  %p496 = scmp.ge.s32.totalorder %s495, 1
                  %s500 = sphi %s461, %s461
                  %s501 = sphi %s452, %s452
                $region151: #{transformer_lm_forward.10} parent=140 // loop_header_branch
                  %498 = sbr.rel (%p496) target = $region155
                $region152: #{transformer_lm_forward.10} parent=140 // loop_body
                  %v502 = vld [vmem:[%s500] sm:%s493]
                  %503 = vst [vmem:[%s501] sm:%s493] %v502
                  %v504 = vld [vmem:[%s500 + $0xc] sm:%s493]
                  %505 = vst [vmem:[%s501 + $0x4] sm:%s493] %v504
                $region153: #{transformer_lm_forward.10} parent=140 // loop_footer
                  %s499 = sadd.s32 1, %s495
                $region154: #{transformer_lm_forward.10} parent=140 // loop_footer_branch
                  %494 = sbr.rel target = $region150
                $region155: #{transformer_lm_forward.10} parent=140 // loop_exit
                  _
              $region141: #{transformer_lm_forward.10} parent=125 // pred_fallthru
                _
            $region126: #{transformer_lm_forward.10} parent=121 // pred_fallthru
              _
            // Predicated region
            $region127: #{transformer_lm_forward.10} parent=121 // pred_check
              _
            $region128: #{transformer_lm_forward.10} parent=121 // pred_check_branch
              %467 = sbr.rel (0) target = $region130
            $region129: #{transformer_lm_forward.10} parent=121 // pred_region
              %s469 = ssub.s32 16, 1
              loop: start=0, step=1, limit=1
              $region131: #{transformer_lm_forward.10} parent=129 // loop_pre_header
                _
              $region132: #{transformer_lm_forward.10} parent=129 // loop_header
                %s471 = sphi 0, %s475
                %p472 = scmp.ge.s32.totalorder %s471, 1
                %s476 = sphi %s461, %s461
                %s477 = sphi %s452, %s452
              $region133: #{transformer_lm_forward.10} parent=129 // loop_header_branch
                %474 = sbr.rel (%p472) target = $region137
              $region134: #{transformer_lm_forward.10} parent=129 // loop_body
                %v478 = vld [vmem:[%s476] sm:%s469]
                %479 = vst [vmem:[%s477] sm:%s469] %v478
                %v480 = vld [vmem:[%s476 + $0xc] sm:%s469]
                %481 = vst [vmem:[%s477 + $0x4] sm:%s469] %v480
              $region135: #{transformer_lm_forward.10} parent=129 // loop_footer
                %s475 = sadd.s32 1, %s471
              $region136: #{transformer_lm_forward.10} parent=129 // loop_footer_branch
                %470 = sbr.rel target = $region132
              $region137: #{transformer_lm_forward.10} parent=129 // loop_exit
                _
            $region130: #{transformer_lm_forward.10} parent=121 // pred_fallthru
              _
          $region122: #{transformer_lm_forward.10} parent=117 // pred_fallthru
            _
          %506 = vnop
        $region118: #{transformer_lm_forward.10} parent=31 // pred_fallthru
          _
      $region32: #{transformer_lm_forward.10} parent=5 // pred_fallthru
        _
      %p507 = scmp.le.s32.totalorder 1, %s13
      %p508 = scmp.lt.s32.totalorder %s13, 3
      %p509 = pnand %p507, %p508
      %p510 = pneg %p509
      // Predicated region
      $region156: #{transformer_lm_forward.10} parent=5 // pred_check
        _
      $region157: #{transformer_lm_forward.10} parent=5 // pred_check_branch
        %512 = sbr.rel (%p509) target = $region159
      $region158: #{transformer_lm_forward.10} parent=5 // pred_region
        %s513 = ssub.s32 %s13, 1
        %s514 = sand.u32 %s47, 1
        %s515 = sand.u32 %s47, 1
        %s516 = smul.addr %s515, 8
        %s517 = scalar_lea.vmem [#allocation6], %s516
        // Predicated region
        $region160: #{transformer_lm_forward.10} parent=158 // pred_check
          %p518 = pneg %p60
        $region161: #{transformer_lm_forward.10} parent=158 // pred_check_branch
          %520 = sbr.rel (%p518) target = $region163
        $region162: #{transformer_lm_forward.10} parent=158 // pred_region
          _
        $region163: #{transformer_lm_forward.10} parent=158 // pred_fallthru
          _
        %s521 = sand.u32 %s79, 1
        %s522 = sand.u32 %s79, 1
        %s523 = smul.addr %s522, 8
        %s524 = scalar_lea.vmem [#allocation7], %s523
        // Predicated region
        $region164: #{transformer_lm_forward.10} parent=158 // pred_check
          %p525 = pneg %p92
        $region165: #{transformer_lm_forward.10} parent=158 // pred_check_branch
          %527 = sbr.rel (%p525) target = $region167
        $region166: #{transformer_lm_forward.10} parent=158 // pred_region
          _
        $region167: #{transformer_lm_forward.10} parent=158 // pred_fallthru
          _
        %s528 = sand.u32 %s111, 1
        %s529 = sand.u32 %s111, 1
        %s530 = smul.addr %s529, 8
        %s531 = scalar_lea.vmem [#allocation8], %s530
        // Predicated region
        $region168: #{transformer_lm_forward.10} parent=158 // pred_check
          %p532 = pneg %p124
        $region169: #{transformer_lm_forward.10} parent=158 // pred_check_branch
          %534 = sbr.rel (%p532) target = $region171
        $region170: #{transformer_lm_forward.10} parent=158 // pred_region
          _
        $region171: #{transformer_lm_forward.10} parent=158 // pred_fallthru
          _
        %s535 = sand.u32 %s47, 1
        %s536 = sand.u32 %s47, 1
        %s537 = smul.addr %s536, 8
        %s538 = scalar_lea.vmem [#allocation6], %s537
        %p539 = pneg %p60
        %p540 = pneg %p57
        %s541 = sand.u32 %s79, 1
        %s542 = sand.u32 %s79, 1
        %s543 = smul.addr %s542, 8
        %s544 = scalar_lea.vmem [#allocation7], %s543
        %p545 = pneg %p92
        %p546 = pneg %p89
        %s547 = sand.u32 %s111, 1
        %s548 = sand.u32 %s111, 1
        %s549 = smul.addr %s548, 8
        %s550 = scalar_lea.vmem [#allocation8], %s549
        %p551 = pneg %p124
        %p552 = pneg %p121
        %s553 = smul.u32 2, %s24
        %p554 = scmp.lt.s32.totalorder %s553, 1
        %s555 = scalar_select %p554, %s553, 1
        %s556 = smul.addr %s555, 8
        %s557 = scalar_lea.vmem %s3, %s556
        %p558 = pneg %p150
        %p559 = pneg %p147
        %s560 = smul.u32 2, %s24
        %p561 = scmp.lt.s32.totalorder %s560, 1
        %s562 = scalar_select %p561, %s560, 1
        %s563 = smul.addr %s562, 8
        %s564 = scalar_lea.vmem %s4, %s563
        %p565 = pneg %p176
        %p566 = pneg %p173
        %p567 = scmp.lt.s32.totalorder %s24, %s25
        %s568 = scalar_select %p567, %s24, %s25
        %s569 = smul.u32 2, %s568
        %p570 = scmp.lt.s32.totalorder %s569, 1
        %s571 = scalar_select %p570, %s569, 1
        %s572 = smul.addr %s571, 8
        %s573 = scalar_lea.vmem %s5, %s572
        %p574 = pneg %p206
        %p575 = pneg %p203
        %p576 = scmp.lt.s32.totalorder %s24, %s25
        %s577 = scalar_select %p576, %s24, %s25
        %s578 = smul.u32 2, %s577
        %p579 = scmp.lt.s32.totalorder %s578, 1
        %s580 = scalar_select %p579, %s578, 1
        %s581 = smul.addr %s580, 8
        %s582 = scalar_lea.vmem %s6, %s581
        %p583 = pneg %p236
        %p584 = pneg %p233
        %p585 = pneg %p264
        %p586 = pneg %p261
        %s587 = smul.u32 2, %s24
        %p588 = scmp.lt.s32.totalorder %s23, 1
        %s589 = scalar_select %p588, %s23, 1
        %p590 = scmp.lt.s32.totalorder %s587, 1
        %s591 = scalar_select %p590, %s587, 1
        %s592 = smul.addr %s589, 2
        %s593 = sadd.s32 %s591, %s592
        %s594 = smul.addr %s593, 4
        %s595 = scalar_lea.vmem %s7, %s594
        %s596 = smul.u32 2, %s24
        %p597 = scmp.lt.s32.totalorder %s24, %s25
        %s598 = scalar_select %p597, %s24, %s25
        %s599 = smul.u32 2, %s598
        %p600 = scmp.lt.s32.totalorder %s24, %s25
        %s601 = scalar_select %p600, %s24, %s25
        %s602 = smul.u32 2, %s601
        %s603 = smul.u32 2, %s24
        %p604 = scmp.lt.s32.totalorder %s603, 1
        %s605 = scalar_select %p604, %s603, 1
        %s606 = smul.addr %s605, 8
        %s607 = scalar_lea.vmem %s3, %s606
        %s608 = smul.u32 2, %s24
        %s609 = smul.u32 2, %s24
        %p610 = scmp.lt.s32.totalorder %s609, 1
        %s611 = scalar_select %p610, %s609, 1
        %s612 = smul.addr %s611, 8
        %s613 = scalar_lea.vmem %s4, %s612
        %s614 = smul.u32 2, %s24
        %p615 = scmp.lt.s32.totalorder %s24, %s25
        %s616 = scalar_select %p615, %s24, %s25
        %s617 = smul.u32 2, %s616
        %p618 = scmp.lt.s32.totalorder %s617, 1
        %s619 = scalar_select %p618, %s617, 1
        %s620 = smul.addr %s619, 8
        %s621 = scalar_lea.vmem %s5, %s620
        %p622 = scmp.lt.s32.totalorder %s24, %s25
        %s623 = scalar_select %p622, %s24, %s25
        %s624 = smul.u32 2, %s623
        %p625 = scmp.lt.s32.totalorder %s24, %s25
        %s626 = scalar_select %p625, %s24, %s25
        %s627 = smul.u32 2, %s626
        %p628 = scmp.lt.s32.totalorder %s627, 1
        %s629 = scalar_select %p628, %s627, 1
        %s630 = smul.addr %s629, 8
        %s631 = scalar_lea.vmem %s6, %s630
        %p632 = scmp.lt.s32.totalorder %s24, %s25
        %s633 = scalar_select %p632, %s24, %s25
        %s634 = smul.u32 2, %s633
        %s635 = smul.u32 2, %s24
        %p636 = scmp.lt.s32.totalorder %s23, 1
        %s637 = scalar_select %p636, %s23, 1
        %p638 = scmp.lt.s32.totalorder %s635, 1
        %s639 = scalar_select %p638, %s635, 1
        %s640 = smul.addr %s637, 2
        %s641 = sadd.s32 %s639, %s640
        %s642 = smul.addr %s641, 4
        %s643 = scalar_lea.vmem %s7, %s642
        %s644 = smul.u32 2, %s24
        %p646 = scmp.eq.s32.totalorder %s25, 0
        // Predicated region
        $region172: #{transformer_lm_forward.10} parent=158 // pred_check
          %p647 = pneg %p646
        $region173: #{transformer_lm_forward.10} parent=158 // pred_check_branch
          %649 = sbr.rel (%p647) target = $region175
        $region174: #{transformer_lm_forward.10} parent=158 // pred_region
          %vm650 = vcmask 7168
          %651 = vst.msk [vmem:[#allocation3] sm:$0xff] %vm650, -inf
          %652 = vst.msk [vmem:[#allocation3 + $0x8] sm:$0xff] %vm650, -inf
          %653 = vst.msk [vmem:[#allocation3 + $0x10] sm:$0xff] %vm650, -inf
          %654 = vst.msk [vmem:[#allocation3 + $0x18] sm:$0xff] %vm650, -inf
          %655 = vst.msk [vmem:[#allocation4] sm:$0xff] %vm650, 0.0
          %656 = vst.msk [vmem:[#allocation4 + $0x8] sm:$0xff] %vm650, 0.0
          %657 = vst.msk [vmem:[#allocation4 + $0x10] sm:$0xff] %vm650, 0.0
          %658 = vst.msk [vmem:[#allocation4 + $0x18] sm:$0xff] %vm650, 0.0
          %vm659 = vcmask 523264
          %660 = vst.msk [vmem:[#allocation5] sm:$0xff] %vm659, 0.0
          %661 = vst.msk [vmem:[#allocation5 + $0x8] sm:$0xff] %vm659, 0.0
          %662 = vst.msk [vmem:[#allocation5 + $0x10] sm:$0xff] %vm659, 0.0
          %663 = vst.msk [vmem:[#allocation5 + $0x18] sm:$0xff] %vm659, 0.0
          %v664 = vld [vmem:[%s607] sm:$0xff]
          %v665 = vld [vmem:[%s607 + $0x8] sm:$0xff]
          %v666 = vld [vmem:[%s613] sm:$0xff]
          %v667 = vld [vmem:[%s613 + $0x8] sm:$0xff]
          %v668 = vld [vmem:[%s517] sm:$0xf]
          %v669 = vld [vmem:[%s517 + $0x4] sm:$0xf]
          %v670 = vunpack.c.l.bf16 %v668
          %v671 = vunpack.c.l.bf16 %v669
          %vm672 = vcmask 1048064
          %673 = vrot.lane.b32.xlu0 %v670, 64
          %v674 = vpop.permute.xlu0 %673
          %v675 = vsel %vm672, %v674, %v670
          %676 = vrot.lane.b32.xlu0 %v671, 64
          %v677 = vpop.permute.xlu0 %676
          %v678 = vsel %vm672, %v677, %v671
          %679 = vrot.lane.b32.xlu0 %v675, 64
          %v680 = vpop.permute.xlu0 %679
          %681 = vrot.lane.b32.xlu0 %v678, 64
          %v682 = vpop.permute.xlu0 %681
          %v683 = vsel %vm672, %v680, %v670
          %v684 = vsel %vm672, %v682, %v671
          %v685 = vmul.f32 %v670, %v666
          %v686 = vmul.f32 %v671, %v667
          %689 = vrot.lane.b32.xlu0 %v664, 32
          %v690 = vpop.permute.xlu0 %689
          %691 = vrot.lane.b32.xlu0 %v665, 32
          %v692 = vpop.permute.xlu0 %691
          %v695 = vmul.f32 %v683, %v690
          %v696 = vmul.f32 %v684, %v692
          %699 = vrot.lane.b32.xlu0 %v695, 96
          %v700 = vpop.permute.xlu0 %699
          %701 = vrot.lane.b32.xlu0 %v696, 96
          %v702 = vpop.permute.xlu0 %701
          %v705 = vadd.f32 %v685, %v700
          %v706 = vadd.f32 %v686, %v702
          %v707 = vpack.c.bf16 %v706, %v705
          %v709 = vunpack.c.l.b16 %v707
          %v710 = vunpack.c.h.b16 %v707
          %v711 = vpack.c.b16 %v709, %v709
          %v712 = vpack.c.b16 %v710, %v710
          %vm715 = vcmask 519168
          %716 = vst.msk [vmem:[#allocation2] sm:$0xf] %vm715, %v711
          %717 = vst.msk [vmem:[#allocation2 + $0x4] sm:$0xf] %vm715, %v712
          %v718 = vld [vmem:[%s517] sm:$0xf]
          %v719 = vld [vmem:[%s517 + $0x4] sm:$0xf]
          %v720 = vunpack.c.l.bf16 %v718
          %v721 = vunpack.c.l.bf16 %v719
          %724 = vrot.lane.b32.xlu0 %v720, 64
          %v725 = vpop.permute.xlu0 %724
          %726 = vrot.lane.b32.xlu0 %v721, 64
          %v727 = vpop.permute.xlu0 %726
          %730 = vrot.lane.b32.xlu0 %v725, 64
          %v731 = vpop.permute.xlu0 %730
          %v732 = vsel %vm672, %v731, %v725
          %733 = vrot.lane.b32.xlu0 %v727, 64
          %v734 = vpop.permute.xlu0 %733
          %v735 = vsel %vm672, %v734, %v727
          %736 = vrot.lane.b32.xlu0 %v732, 64
          %v737 = vpop.permute.xlu0 %736
          %738 = vrot.lane.b32.xlu0 %v735, 64
          %v739 = vpop.permute.xlu0 %738
          %v740 = vsel %vm672, %v737, %v725
          %v741 = vsel %vm672, %v739, %v727
          %744 = vrot.lane.b32.xlu0 %v666, 64
          %v745 = vpop.permute.xlu0 %744
          %746 = vrot.lane.b32.xlu0 %v667, 64
          %v747 = vpop.permute.xlu0 %746
          %v750 = vmul.f32 %v720, %v745
          %v751 = vmul.f32 %v721, %v747
          %v752 = vmul.f32 %v740, %v690
          %v753 = vmul.f32 %v741, %v692
          %756 = vrot.lane.b32.xlu0 %v752, 32
          %v757 = vpop.permute.xlu0 %756
          %758 = vrot.lane.b32.xlu0 %v753, 32
          %v759 = vpop.permute.xlu0 %758
          %v762 = vadd.f32 %v750, %v757
          %v763 = vadd.f32 %v751, %v759
          %v764 = vpack.c.bf16 %v763, %v762
          %v766 = vunpack.c.l.b16 %v764
          %v767 = vunpack.c.h.b16 %v764
          %v768 = vpack.c.b16 %v766, %v766
          %v769 = vpack.c.b16 %v767, %v767
          %770 = vrot.lane.b32.xlu0 %v768, 64
          %v771 = vpop.permute.xlu0 %770
          %772 = vrot.lane.b32.xlu0 %v769, 64
          %v773 = vpop.permute.xlu0 %772
          %s776 = scalar_lea.vmem [#allocation2], 8
          %777 = vst.msk [vmem:[%s776] sm:$0xf] %vm715, %v771
          %778 = vst.msk [vmem:[%s776 + $0x4] sm:$0xf] %vm715, %v773
        $region175: #{transformer_lm_forward.10} parent=158 // pred_fallthru
          _
        %p779 = scmp.le.s32.totalorder %s25, %s24
        // Predicated region
        $region176: #{transformer_lm_forward.10} parent=158 // pred_check
          %p780 = pneg %p779
        $region177: #{transformer_lm_forward.10} parent=158 // pred_check_branch
          %782 = sbr.rel (%p780) target = $region179
        $region178: #{transformer_lm_forward.10} parent=158 // pred_region
          %s783 = smul.u32 %s24, 16
          %v784 = vlaneseq
          %v785 = vshrl.u32 %v784, 7
          %v786 = vadd.s32 %v785, 8
          %v787 = vstv %s783
          %v788 = vadd.s32 %v787, %v785
          %v789 = vadd.s32 %v787, %v786
          %s790 = smul.u32 %s25, 16
          %v791 = vlaneseq
          %v792 = vand.u32 %v791, 127
          %v793 = vstv %s790
          %v794 = vadd.s32 %v793, %v792
          %vm795 = vcmp.le.s32.totalorder %v794, %v788
          %vm796 = vcmp.le.s32.totalorder %v794, %v789
          %v797 = vld [vmem:[%s621] sm:$0xff]
          %v798 = vld [vmem:[%s621 + $0x8] sm:$0xff]
          %v799 = vld [vmem:[%s631] sm:$0xff]
          %v800 = vld [vmem:[%s631 + $0x8] sm:$0xff]
          %v801 = vld [vmem:[%s524] sm:$0xf]
          %v802 = vld [vmem:[%s524 + $0x4] sm:$0xf]
          %v803 = vunpack.c.l.bf16 %v801
          %v804 = vunpack.c.l.bf16 %v802
          %vm805 = vcmask 1048064
          %806 = vrot.lane.b32.xlu0 %v803, 64
          %v807 = vpop.permute.xlu0 %806
          %v808 = vsel %vm805, %v807, %v803
          %809 = vrot.lane.b32.xlu0 %v804, 64
          %v810 = vpop.permute.xlu0 %809
          %v811 = vsel %vm805, %v810, %v804
          %812 = vrot.lane.b32.xlu0 %v808, 64
          %v813 = vpop.permute.xlu0 %812
          %814 = vrot.lane.b32.xlu0 %v811, 64
          %v815 = vpop.permute.xlu0 %814
          %v816 = vsel %vm805, %v813, %v803
          %v817 = vsel %vm805, %v815, %v804
          %v818 = vmul.f32 %v803, %v799
          %v819 = vmul.f32 %v804, %v800
          %822 = vrot.lane.b32.xlu0 %v797, 32
          %v823 = vpop.permute.xlu0 %822
          %824 = vrot.lane.b32.xlu0 %v798, 32
          %v825 = vpop.permute.xlu0 %824
          %v828 = vmul.f32 %v816, %v823
          %v829 = vmul.f32 %v817, %v825
          %832 = vrot.lane.b32.xlu0 %v828, 96
          %v833 = vpop.permute.xlu0 %832
          %834 = vrot.lane.b32.xlu0 %v829, 96
          %v835 = vpop.permute.xlu0 %834
          %v838 = vadd.f32 %v818, %v833
          %v839 = vadd.f32 %v819, %v835
          %v840 = vpack.c.bf16 %v839, %v838
          %v841 = vld [vmem:[#allocation2] sm:$0xf]
          %v842 = vld [vmem:[#allocation2 + $0x4] sm:$0xf]
          %v845 = vunpack.c.l.b16 %v841
          %v846 = vunpack.c.l.b16 %v842
          %v847 = vpack.c.b16 %v846, %v845
          %vm848 = vcmask 523264
          %v850 = vsel %vm848, %v847, 0
          %v853 = vsel %vm848, %v840, 0
          %855 = vmatprep.subr.bf16.mxu0 0
          %856 = vmatpush1.bf16.xpose.msra.mxu0 0
          %857 = vmatprep.subr.bf16.mxu0 0
          %858 = vmatpush1.bf16.xpose.msra.mxu0 0
          %859 = vmatprep.subr.bf16.mxu0 0
          %860 = vmatpush1.bf16.xpose.msra.mxu0 0
          %861 = vmatprep.subr.bf16.mxu0 0
          %862 = vmatpush1.bf16.xpose.msra.mxu0 0
          %863 = vmatprep.subr.bf16.mxu0 0
          %864 = vmatpush1.bf16.xpose.msra.mxu0 0
          %865 = vmatprep.subr.bf16.mxu0 0
          %866 = vmatpush1.bf16.xpose.msra.mxu0 0
          %867 = vmatprep.subr.bf16.mxu0 0
          %868 = vmatpush1.bf16.xpose.msra.mxu0 0
          %869 = vmatprep.subr.bf16.mxu0 0
          %870 = vmatpush1.bf16.xpose.msra.mxu0 %v853
          %871 = vmatprep.subr.bf16.mxu0 0
          %872 = vmatpush2.bf16.xpose.msra.mxu0 0
          %873 = vmatprep.subr.bf16.mxu0 0
          %874 = vmatpush2.bf16.xpose.msra.mxu0 0
          %875 = vmatprep.subr.bf16.mxu0 0
          %876 = vmatpush2.bf16.xpose.msra.mxu0 0
          %877 = vmatprep.subr.bf16.mxu0 0
          %878 = vmatpush2.bf16.xpose.msra.mxu0 0
          %879 = vmatprep.subr.bf16.mxu0 0
          %880 = vmatpush2.bf16.xpose.msra.mxu0 0
          %881 = vmatprep.subr.bf16.mxu0 0
          %882 = vmatpush2.bf16.xpose.msra.mxu0 0
          %883 = vmatprep.subr.bf16.mxu0 0
          %884 = vmatpush2.bf16.xpose.msra.mxu0 0
          %885 = vmatprep.subr.bf16.mxu0 0
          %886 = vmatpush2.bf16.xpose.msra.mxu0 0
          %887 = vmatprep.mubr.bf16.mxu0 0
          %888 = vmatmul.mubr.bf16.gmra.mxu0 %v850
          %v889 = vpop.f32.mrf.mxu0
          %v890 = vadd.f32 0.0, %v889
          %v891 = vpop.f32.mrf.mxu0
          %v892 = vpop.f32.mrf.mxu0
          %v893 = vadd.f32 0.0, %v892
          %v894 = vpop.f32.mrf.mxu0
          %895 = vdwg.mxu0
          %v896 = vsel %vm795, %v890, -1e+30
          %v897 = vsel %vm796, %v893, -1e+30
          %v898 = vld [vmem:[#allocation3] sm:$0xff]
          %v899 = vld [vmem:[#allocation3 + $0x8] sm:$0xff]
          %vm900 = vcmask 130048
          %v901 = vsel %vm900, %v896, -inf
          %902 = vmax.xlane.f32.xlu0 %v901
          %v903 = vpop.xlane.xlu0 %902
          %v904 = vsel %vm900, %v897, -inf
          %905 = vmax.xlane.f32.xlu0 %v904
          %v906 = vpop.xlane.xlu0 %905
          %v907 = vmax.f32 %v898, %v903
          %v908 = vmax.f32 %v899, %v906
          %v909 = vsub.f32 %v898, %v907
          %v910 = vsub.f32 %v899, %v908
          %v911 = vmul.f32 %v909, 1.442695
          %v912 = vpow.pop %v911
          %v913 = vmul.f32 %v910, 1.442695
          %v914 = vpow.pop %v913
          %916 = vset.pattern.permute.xlu0 0
          %917 = vperm.xlu0 %916, %v907
          %v918 = vpop.permute.xlu0 %917
          %921 = vset.pattern.permute.xlu0 0
          %922 = vperm.xlu0 %921, %v908
          %v923 = vpop.permute.xlu0 %922
          %v925 = vsub.f32 %v896, %v918
          %v926 = vsub.f32 %v897, %v923
          %v927 = vmul.f32 %v925, 1.442695
          %v928 = vpow.pop %v927
          %v929 = vmul.f32 %v926, 1.442695
          %v930 = vpow.pop %v929
          %v931 = vld [vmem:[#allocation4] sm:$0xff]
          %v932 = vld [vmem:[#allocation4 + $0x8] sm:$0xff]
          %v933 = vmul.f32 %v912, %v931
          %v934 = vmul.f32 %v914, %v932
          %v935 = vsel %vm900, %v928, 0.0
          %936 = vadd.xlane.f32.xlu0 %v935
          %v937 = vpop.xlane.xlu0 %936
          %v938 = vsel %vm900, %v930, 0.0
          %939 = vadd.xlane.f32.xlu0 %v938
          %v940 = vpop.xlane.xlu0 %939
          %v941 = vadd.f32 %v933, %v937
          %v942 = vadd.f32 %v934, %v940
          %vm943 = vcmask 7168
          %944 = vst.msk [vmem:[#allocation4] sm:$0xff] %vm943, %v941
          %945 = vst.msk [vmem:[#allocation4 + $0x8] sm:$0xff] %vm943, %v942
          %v946 = vld [vmem:[#allocation5] sm:$0xff]
          %v947 = vld [vmem:[#allocation5 + $0x8] sm:$0xff]
          %949 = vset.pattern.permute.xlu0 0
          %950 = vperm.xlu0 %949, %v912
          %v951 = vpop.permute.xlu0 %950
          %954 = vset.pattern.permute.xlu0 0
          %955 = vperm.xlu0 %954, %v914
          %v956 = vpop.permute.xlu0 %955
          %v958 = vmul.f32 %v951, %v946
          %v959 = vmul.f32 %v956, %v947
          %v960 = vpack.c.bf16 %v930, %v928
          %v961 = vld [vmem:[%s531] sm:$0xf]
          %v962 = vld [vmem:[%s531 + $0x4] sm:$0xf]
          %v965 = vunpack.c.l.b16 %v961
          %v966 = vunpack.c.l.b16 %v962
          %v967 = vpack.c.b16 %v966, %v965
          %v970 = vsel %vm900, %v960, 0
          %972 = vmatprep.subr.bf16.mxu0 0
          %973 = vmatpush1.bf16.msra.mxu0 0
          %974 = vmatprep.subr.bf16.mxu0 0
          %975 = vmatpush1.bf16.msra.mxu0 0
          %976 = vmatprep.subr.bf16.mxu0 0
          %977 = vmatpush1.bf16.msra.mxu0 0
          %978 = vmatprep.subr.bf16.mxu0 0
          %979 = vmatpush1.bf16.msra.mxu0 0
          %980 = vmatprep.subr.bf16.mxu0 0
          %981 = vmatpush1.bf16.msra.mxu0 0
          %982 = vmatprep.subr.bf16.mxu0 0
          %983 = vmatpush1.bf16.msra.mxu0 0
          %984 = vmatprep.subr.bf16.mxu0 0
          %985 = vmatpush1.bf16.msra.mxu0 0
          %986 = vmatprep.subr.bf16.mxu0 0
          %987 = vmatpush1.bf16.msra.mxu0 %v967
          %988 = vmatprep.subr.bf16.mxu0 0
          %989 = vmatpush2.bf16.msra.mxu0 0
          %990 = vmatprep.subr.bf16.mxu0 0
          %991 = vmatpush2.bf16.msra.mxu0 0
          %992 = vmatprep.subr.bf16.mxu0 0
          %993 = vmatpush2.bf16.msra.mxu0 0
          %994 = vmatprep.subr.bf16.mxu0 0
          %995 = vmatpush2.bf16.msra.mxu0 0
          %996 = vmatprep.subr.bf16.mxu0 0
          %997 = vmatpush2.bf16.msra.mxu0 0
          %998 = vmatprep.subr.bf16.mxu0 0
          %999 = vmatpush2.bf16.msra.mxu0 0
          %1000 = vmatprep.subr.bf16.mxu0 0
          %1001 = vmatpush2.bf16.msra.mxu0 0
          %1002 = vmatprep.subr.bf16.mxu0 0
          %1003 = vmatpush2.bf16.msra.mxu0 0
          %1004 = vmatprep.mubr.bf16.mxu0 0
          %1005 = vmatmul.mubr.bf16.gmra.mxu0 %v970
          %v1006 = vpop.f32.mrf.mxu0
          %v1007 = vadd.f32 0.0, %v1006
          %v1008 = vpop.f32.mrf.mxu0
          %v1009 = vpop.f32.mrf.mxu0
          %v1010 = vadd.f32 0.0, %v1009
          %v1011 = vpop.f32.mrf.mxu0
          %1012 = vdwg.mxu0
          %v1013 = vadd.f32 %v958, %v1007
          %v1014 = vadd.f32 %v959, %v1010
          %1015 = vst.msk [vmem:[#allocation5] sm:$0xff] %vm848, %v1013
          %1016 = vst.msk [vmem:[#allocation5 + $0x8] sm:$0xff] %vm848, %v1014
          %1017 = vst.msk [vmem:[#allocation3] sm:$0xff] %vm943, %v907
          %1018 = vst.msk [vmem:[#allocation3 + $0x8] sm:$0xff] %vm943, %v908
          %v1019 = vld [vmem:[%s524] sm:$0xf]
          %v1020 = vld [vmem:[%s524 + $0x4] sm:$0xf]
          %v1021 = vunpack.c.l.bf16 %v1019
          %v1022 = vunpack.c.l.bf16 %v1020
          %1025 = vrot.lane.b32.xlu0 %v1021, 64
          %v1026 = vpop.permute.xlu0 %1025
          %1027 = vrot.lane.b32.xlu0 %v1022, 64
          %v1028 = vpop.permute.xlu0 %1027
          %1031 = vrot.lane.b32.xlu0 %v1026, 64
          %v1032 = vpop.permute.xlu0 %1031
          %v1033 = vsel %vm805, %v1032, %v1026
          %1034 = vrot.lane.b32.xlu0 %v1028, 64
          %v1035 = vpop.permute.xlu0 %1034
          %v1036 = vsel %vm805, %v1035, %v1028
          %1037 = vrot.lane.b32.xlu0 %v1033, 64
          %v1038 = vpop.permute.xlu0 %1037
          %1039 = vrot.lane.b32.xlu0 %v1036, 64
          %v1040 = vpop.permute.xlu0 %1039
          %v1041 = vsel %vm805, %v1038, %v1026
          %v1042 = vsel %vm805, %v1040, %v1028
          %1045 = vrot.lane.b32.xlu0 %v799, 64
          %v1046 = vpop.permute.xlu0 %1045
          %1047 = vrot.lane.b32.xlu0 %v800, 64
          %v1048 = vpop.permute.xlu0 %1047
          %v1051 = vmul.f32 %v1021, %v1046
          %v1052 = vmul.f32 %v1022, %v1048
          %v1053 = vmul.f32 %v1041, %v823
          %v1054 = vmul.f32 %v1042, %v825
          %1057 = vrot.lane.b32.xlu0 %v1053, 32
          %v1058 = vpop.permute.xlu0 %1057
          %1059 = vrot.lane.b32.xlu0 %v1054, 32
          %v1060 = vpop.permute.xlu0 %1059
          %v1063 = vadd.f32 %v1051, %v1058
          %v1064 = vadd.f32 %v1052, %v1060
          %v1065 = vpack.c.bf16 %v1064, %v1063
          %s1066 = scalar_lea.vmem [#allocation2], 8
          %v1067 = vld [vmem:[%s1066] sm:$0xf]
          %v1068 = vld [vmem:[%s1066 + $0x4] sm:$0xf]
          %v1071 = vunpack.c.l.b16 %v1067
          %v1072 = vunpack.c.l.b16 %v1068
          %v1073 = vpack.c.b16 %v1072, %v1071
          %1075 = vrot.lane.b32.xlu0 %v1065, 64
          %v1076 = vpop.permute.xlu0 %1075
          %v1078 = vsel %vm848, %v1073, 0
          %v1081 = vsel %vm848, %v1076, 0
          %1083 = vmatprep.subr.bf16.mxu0 0
          %1084 = vmatpush1.bf16.xpose.msra.mxu0 0
          %1085 = vmatprep.subr.bf16.mxu0 0
          %1086 = vmatpush1.bf16.xpose.msra.mxu0 0
          %1087 = vmatprep.subr.bf16.mxu0 0
          %1088 = vmatpush1.bf16.xpose.msra.mxu0 0
          %1089 = vmatprep.subr.bf16.mxu0 0
          %1090 = vmatpush1.bf16.xpose.msra.mxu0 0
          %1091 = vmatprep.subr.bf16.mxu0 0
          %1092 = vmatpush1.bf16.xpose.msra.mxu0 0
          %1093 = vmatprep.subr.bf16.mxu0 0
          %1094 = vmatpush1.bf16.xpose.msra.mxu0 0
          %1095 = vmatprep.subr.bf16.mxu0 0
          %1096 = vmatpush1.bf16.xpose.msra.mxu0 0
          %1097 = vmatprep.subr.bf16.mxu0 0
          %1098 = vmatpush1.bf16.xpose.msra.mxu0 %v1081
          %1099 = vmatprep.subr.bf16.mxu0 0
          %1100 = vmatpush2.bf16.xpose.msra.mxu0 0
          %1101 = vmatprep.subr.bf16.mxu0 0
          %1102 = vmatpush2.bf16.xpose.msra.mxu0 0
          %1103 = vmatprep.subr.bf16.mxu0 0
          %1104 = vmatpush2.bf16.xpose.msra.mxu0 0
          %1105 = vmatprep.subr.bf16.mxu0 0
          %1106 = vmatpush2.bf16.xpose.msra.mxu0 0
          %1107 = vmatprep.subr.bf16.mxu0 0
          %1108 = vmatpush2.bf16.xpose.msra.mxu0 0
          %1109 = vmatprep.subr.bf16.mxu0 0
          %1110 = vmatpush2.bf16.xpose.msra.mxu0 0
          %1111 = vmatprep.subr.bf16.mxu0 0
          %1112 = vmatpush2.bf16.xpose.msra.mxu0 0
          %1113 = vmatprep.subr.bf16.mxu0 0
          %1114 = vmatpush2.bf16.xpose.msra.mxu0 0
          %1115 = vmatprep.mubr.bf16.mxu0 0
          %1116 = vmatmul.mubr.bf16.gmra.mxu0 %v1078
          %v1117 = vpop.f32.mrf.mxu0
          %v1118 = vadd.f32 0.0, %v1117
          %v1119 = vpop.f32.mrf.mxu0
          %v1120 = vpop.f32.mrf.mxu0
          %v1121 = vadd.f32 0.0, %v1120
          %v1122 = vpop.f32.mrf.mxu0
          %1123 = vdwg.mxu0
          %v1124 = vsel %vm795, %v1118, -1e+30
          %v1125 = vsel %vm796, %v1121, -1e+30
          %s1126 = scalar_lea.vmem [#allocation3], 16
          %v1127 = vld [vmem:[%s1126] sm:$0xff]
          %v1128 = vld [vmem:[%s1126 + $0x8] sm:$0xff]
          %v1129 = vsel %vm900, %v1124, -inf
          %1130 = vmax.xlane.f32.xlu0 %v1129
          %v1131 = vpop.xlane.xlu0 %1130
          %v1132 = vsel %vm900, %v1125, -inf
          %1133 = vmax.xlane.f32.xlu0 %v1132
          %v1134 = vpop.xlane.xlu0 %1133
          %v1135 = vmax.f32 %v1127, %v1131
          %v1136 = vmax.f32 %v1128, %v1134
          %v1137 = vsub.f32 %v1127, %v1135
          %v1138 = vsub.f32 %v1128, %v1136
          %v1139 = vmul.f32 %v1137, 1.442695
          %v1140 = vpow.pop %v1139
          %v1141 = vmul.f32 %v1138, 1.442695
          %v1142 = vpow.pop %v1141
          %1144 = vset.pattern.permute.xlu0 0
          %1145 = vperm.xlu0 %1144, %v1135
          %v1146 = vpop.permute.xlu0 %1145
          %1149 = vset.pattern.permute.xlu0 0
          %1150 = vperm.xlu0 %1149, %v1136
          %v1151 = vpop.permute.xlu0 %1150
          %v1153 = vsub.f32 %v1124, %v1146
          %v1154 = vsub.f32 %v1125, %v1151
          %v1155 = vmul.f32 %v1153, 1.442695
          %v1156 = vpow.pop %v1155
          %v1157 = vmul.f32 %v1154, 1.442695
          %v1158 = vpow.pop %v1157
          %s1159 = scalar_lea.vmem [#allocation4], 16
          %v1160 = vld [vmem:[%s1159] sm:$0xff]
          %v1161 = vld [vmem:[%s1159 + $0x8] sm:$0xff]
          %v1162 = vmul.f32 %v1140, %v1160
          %v1163 = vmul.f32 %v1142, %v1161
          %v1164 = vsel %vm900, %v1156, 0.0
          %1165 = vadd.xlane.f32.xlu0 %v1164
          %v1166 = vpop.xlane.xlu0 %1165
          %v1167 = vsel %vm900, %v1158, 0.0
          %1168 = vadd.xlane.f32.xlu0 %v1167
          %v1169 = vpop.xlane.xlu0 %1168
          %v1170 = vadd.f32 %v1162, %v1166
          %v1171 = vadd.f32 %v1163, %v1169
          %1172 = vst.msk [vmem:[%s1159] sm:$0xff] %vm943, %v1170
          %1173 = vst.msk [vmem:[%s1159 + $0x8] sm:$0xff] %vm943, %v1171
          %s1174 = scalar_lea.vmem [#allocation5], 16
          %v1175 = vld [vmem:[%s1174] sm:$0xff]
          %v1176 = vld [vmem:[%s1174 + $0x8] sm:$0xff]
          %1178 = vset.pattern.permute.xlu0 0
          %1179 = vperm.xlu0 %1178, %v1140
          %v1180 = vpop.permute.xlu0 %1179
          %1183 = vset.pattern.permute.xlu0 0
          %1184 = vperm.xlu0 %1183, %v1142
          %v1185 = vpop.permute.xlu0 %1184
          %v1187 = vmul.f32 %v1180, %v1175
          %v1188 = vmul.f32 %v1185, %v1176
          %v1189 = vpack.c.bf16 %v1158, %v1156
          %v1190 = vld [vmem:[%s531] sm:$0xf]
          %v1191 = vld [vmem:[%s531 + $0x4] sm:$0xf]
          %v1194 = vunpack.c.l.b16 %v1190
          %v1195 = vunpack.c.l.b16 %v1191
          %v1196 = vpack.c.b16 %v1195, %v1194
          %1197 = vrot.lane.b32.xlu0 %v1196, 64
          %v1198 = vpop.permute.xlu0 %1197
          %v1201 = vsel %vm900, %v1189, 0
          %1203 = vmatprep.subr.bf16.mxu0 0
          %1204 = vmatpush1.bf16.msra.mxu0 0
          %1205 = vmatprep.subr.bf16.mxu0 0
          %1206 = vmatpush1.bf16.msra.mxu0 0
          %1207 = vmatprep.subr.bf16.mxu0 0
          %1208 = vmatpush1.bf16.msra.mxu0 0
          %1209 = vmatprep.subr.bf16.mxu0 0
          %1210 = vmatpush1.bf16.msra.mxu0 0
          %1211 = vmatprep.subr.bf16.mxu0 0
          %1212 = vmatpush1.bf16.msra.mxu0 0
          %1213 = vmatprep.subr.bf16.mxu0 0
          %1214 = vmatpush1.bf16.msra.mxu0 0
          %1215 = vmatprep.subr.bf16.mxu0 0
          %1216 = vmatpush1.bf16.msra.mxu0 0
          %1217 = vmatprep.subr.bf16.mxu0 0
          %1218 = vmatpush1.bf16.msra.mxu0 %v1198
          %1219 = vmatprep.subr.bf16.mxu0 0
          %1220 = vmatpush2.bf16.msra.mxu0 0
          %1221 = vmatprep.subr.bf16.mxu0 0
          %1222 = vmatpush2.bf16.msra.mxu0 0
          %1223 = vmatprep.subr.bf16.mxu0 0
          %1224 = vmatpush2.bf16.msra.mxu0 0
          %1225 = vmatprep.subr.bf16.mxu0 0
          %1226 = vmatpush2.bf16.msra.mxu0 0
          %1227 = vmatprep.subr.bf16.mxu0 0
          %1228 = vmatpush2.bf16.msra.mxu0 0
          %1229 = vmatprep.subr.bf16.mxu0 0
          %1230 = vmatpush2.bf16.msra.mxu0 0
          %1231 = vmatprep.subr.bf16.mxu0 0
          %1232 = vmatpush2.bf16.msra.mxu0 0
          %1233 = vmatprep.subr.bf16.mxu0 0
          %1234 = vmatpush2.bf16.msra.mxu0 0
          %1235 = vmatprep.mubr.bf16.mxu0 0
          %1236 = vmatmul.mubr.bf16.gmra.mxu0 %v1201
          %v1237 = vpop.f32.mrf.mxu0
          %v1238 = vadd.f32 0.0, %v1237
          %v1239 = vpop.f32.mrf.mxu0
          %v1240 = vpop.f32.mrf.mxu0
          %v1241 = vadd.f32 0.0, %v1240
          %v1242 = vpop.f32.mrf.mxu0
          %1243 = vdwg.mxu0
          %v1244 = vadd.f32 %v1187, %v1238
          %v1245 = vadd.f32 %v1188, %v1241
          %1246 = vst.msk [vmem:[%s1174] sm:$0xff] %vm848, %v1244
          %1247 = vst.msk [vmem:[%s1174 + $0x8] sm:$0xff] %vm848, %v1245
          %1248 = vst.msk [vmem:[%s1126] sm:$0xff] %vm943, %v1135
          %1249 = vst.msk [vmem:[%s1126 + $0x8] sm:$0xff] %vm943, %v1136
        $region179: #{transformer_lm_forward.10} parent=158 // pred_fallthru
          _
        // Predicated region
        $region180: #{transformer_lm_forward.10} parent=158 // pred_check
          %p1250 = pneg %p646
        $region181: #{transformer_lm_forward.10} parent=158 // pred_check_branch
          %1252 = sbr.rel (%p1250) target = $region183
        $region182: #{transformer_lm_forward.10} parent=158 // pred_region
          %v1253 = vld [vmem:[#allocation4] sm:$0xff]
          %v1254 = vld [vmem:[#allocation4 + $0x8] sm:$0xff]
          %v1255 = vrcp.pop %v1253
          %v1256 = vrcp.pop %v1254
          %v1257 = vld [vmem:[#allocation5] sm:$0xff]
          %v1258 = vld [vmem:[#allocation5 + $0x8] sm:$0xff]
          %1260 = vset.pattern.permute.xlu0 0
          %1261 = vperm.xlu0 %1260, %v1255
          %v1262 = vpop.permute.xlu0 %1261
          %1265 = vset.pattern.permute.xlu0 0
          %1266 = vperm.xlu0 %1265, %v1256
          %v1267 = vpop.permute.xlu0 %1266
          %v1269 = vmul.f32 %v1257, %v1262
          %v1270 = vmul.f32 %v1258, %v1267
          %v1271 = vpack.c.bf16 %v1270, %v1269
          %v1273 = vunpack.c.l.b16 %v1271
          %v1274 = vunpack.c.h.b16 %v1271
          %v1275 = vpack.c.b16 %v1273, %v1273
          %v1276 = vpack.c.b16 %v1274, %v1274
          %vm1279 = vcmask 519168
          %1280 = vst.msk [vmem:[%s643] sm:$0xf] %vm1279, %v1275
          %1281 = vst.msk [vmem:[%s643 + $0x4] sm:$0xf] %vm1279, %v1276
          %s1282 = scalar_lea.vmem [#allocation4], 16
          %v1283 = vld [vmem:[%s1282] sm:$0xff]
          %v1284 = vld [vmem:[%s1282 + $0x8] sm:$0xff]
          %v1285 = vrcp.pop %v1283
          %v1286 = vrcp.pop %v1284
          %s1287 = scalar_lea.vmem [#allocation5], 16
          %v1288 = vld [vmem:[%s1287] sm:$0xff]
          %v1289 = vld [vmem:[%s1287 + $0x8] sm:$0xff]
          %1291 = vset.pattern.permute.xlu0 0
          %1292 = vperm.xlu0 %1291, %v1285
          %v1293 = vpop.permute.xlu0 %1292
          %1296 = vset.pattern.permute.xlu0 0
          %1297 = vperm.xlu0 %1296, %v1286
          %v1298 = vpop.permute.xlu0 %1297
          %v1300 = vmul.f32 %v1288, %v1293
          %v1301 = vmul.f32 %v1289, %v1298
          %v1302 = vpack.c.bf16 %v1301, %v1300
          %v1304 = vunpack.c.l.b16 %v1302
          %v1305 = vunpack.c.h.b16 %v1302
          %v1306 = vpack.c.b16 %v1304, %v1304
          %v1307 = vpack.c.b16 %v1305, %v1305
          %1308 = vrot.lane.b32.xlu0 %v1306, 64
          %v1309 = vpop.permute.xlu0 %1308
          %1310 = vrot.lane.b32.xlu0 %v1307, 64
          %v1311 = vpop.permute.xlu0 %1310
          %vm1314 = vcmask 1043968
          %1315 = vst.msk [vmem:[%s643] sm:$0xf] %vm1314, %v1309
          %1316 = vst.msk [vmem:[%s643 + $0x4] sm:$0xf] %vm1314, %v1311
        $region183: #{transformer_lm_forward.10} parent=158 // pred_fallthru
          _
        %s1317 = smul.u32 2, %s24
        %p1318 = scmp.lt.s32.totalorder %s23, 1
        %s1319 = scalar_select %p1318, %s23, 1
        %p1320 = scmp.lt.s32.totalorder %s1317, 1
        %s1321 = scalar_select %p1320, %s1317, 1
        %s1322 = smul.addr %s1319, 2
        %s1323 = sadd.s32 %s1321, %s1322
        %s1324 = smul.addr %s1323, 4
        %s1325 = scalar_lea.vmem %s7, %s1324
        // Predicated region
        $region184: #{transformer_lm_forward.10} parent=158 // pred_check
          %p1326 = pneg %p261
        $region185: #{transformer_lm_forward.10} parent=158 // pred_check_branch
          %1328 = sbr.rel (%p1326) target = $region187
        $region186: #{transformer_lm_forward.10} parent=158 // pred_region
          %s1329 = smul.u32 2, %s24
        $region187: #{transformer_lm_forward.10} parent=158 // pred_fallthru
          _
      $region159: #{transformer_lm_forward.10} parent=5 // pred_fallthru
        _
      %p1330 = scmp.le.s32.totalorder 2, %s13
      // Predicated region
      $region188: #{transformer_lm_forward.10} parent=5 // pred_check
        %p1331 = pneg %p1330
      $region189: #{transformer_lm_forward.10} parent=5 // pred_check_branch
        %1333 = sbr.rel (%p1331) target = $region191
      $region190: #{transformer_lm_forward.10} parent=5 // pred_region
        %s1334 = ssub.s32 %s13, 2
        // Predicated region
        $region192: #{transformer_lm_forward.10} parent=190 // pred_check
          %p1335 = pneg %p267
        $region193: #{transformer_lm_forward.10} parent=190 // pred_check_branch
          %1337 = sbr.rel (%p1335) target = $region195
        $region194: #{transformer_lm_forward.10} parent=190 // pred_region
          %s1338 = smul.u32 2, %s27
          %p1339 = scmp.lt.s32.totalorder %s26, 1
          %s1340 = scalar_select %p1339, %s26, 1
          %p1341 = scmp.lt.s32.totalorder %s1338, 1
          %s1342 = scalar_select %p1341, %s1338, 1
          %s1343 = smul.addr %s1340, 2
          %s1344 = sadd.s32 %s1342, %s1343
          %s1345 = smul.addr %s1344, 4
          %s1346 = scalar_lea.vmem %s7, %s1345
        $region195: #{transformer_lm_forward.10} parent=190 // pred_fallthru
          _
      $region191: #{transformer_lm_forward.10} parent=5 // pred_fallthru
        _
    $region6: #{transformer_lm_forward.10} parent=1 // loop_footer
      %s17 = sadd.s32 1, %s13
    $region7: #{transformer_lm_forward.10} parent=1 // loop_footer_branch
      %12 = sbr.rel target = $region3
    $region8: #{transformer_lm_forward.10} parent=1 // loop_exit
      _

// kernel: transformer_lm_forward.12
$region0: #{transformer_lm_forward.12}
  #allocation0 [shape = 'u32[]', space=smem, size = 0x4, offset = 0x4, fixed_abs, tag = 'smem constant byte address 0x4 - core index']
  #allocation1 [shape = 'u32[144,128]{1,0:T(1,128)}', space=vmem, size = 0x12000, scoped, tag = 'internal scratch']
  #allocation2 [shape = 'f32[32,128]{1,0:T(8,128)}', space=vmem, size = 0x4000, scoped, tag = 'scratch operand']
  #allocation3 [shape = 'bf16[32,128]{1,0:T(8,128)(2,1)}', space=vmem, size = 0x2000, scoped, tag = 'scratch operand']
  %s0 = inlined_call_operand.vmem [shape: f32[32,128], index: 0, kind: input, shape index: {}]
  %s1 = inlined_call_operand.vmem [shape: f32[1,128], index: 1, kind: input, shape index: {}]
  %s2 = inlined_call_operand.vmem [shape: bf16[128,256], index: 2, kind: input, shape index: {}]
  %s3 = inlined_call_operand.vmem [shape: bf16[128,256], index: 3, kind: input, shape index: {}]
  %s4 = inlined_call_operand.vmem [shape: bf16[256,128], index: 4, kind: input, shape index: {}]
  %s5 = inlined_call_operand.vmem [shape: f32[32,128], index: 5, kind: output, shape index: {}]
  %s6 = sld [smem:[#allocation0]]
  $region38: #{transformer_lm_forward.12} parent=0
    _
  %s8 = ssub.s32 1, %s6
  %s9 = scalar_select 0, %s8, %s6
  // Predicated region
  $region2: #{transformer_lm_forward.12} parent=0 // pred_check
    _
  $region3: #{transformer_lm_forward.12} parent=0 // pred_check_branch
    %11 = sbr.rel (0) target = $region5
  $region4: #{transformer_lm_forward.12} parent=0 // pred_region
    _
  $region5: #{transformer_lm_forward.12} parent=0 // pred_fallthru
    _
  // Predicated region
  $region6: #{transformer_lm_forward.12} parent=0 // pred_check
    _
  $region7: #{transformer_lm_forward.12} parent=0 // pred_check_branch
    %13 = sbr.rel (0) target = $region9
  $region8: #{transformer_lm_forward.12} parent=0 // pred_region
    _
  $region9: #{transformer_lm_forward.12} parent=0 // pred_fallthru
    _
  // Predicated region
  $region10: #{transformer_lm_forward.12} parent=0 // pred_check
    _
  $region11: #{transformer_lm_forward.12} parent=0 // pred_check_branch
    %15 = sbr.rel (0) target = $region13
  $region12: #{transformer_lm_forward.12} parent=0 // pred_region
    _
  $region13: #{transformer_lm_forward.12} parent=0 // pred_fallthru
    _
  // Predicated region
  $region14: #{transformer_lm_forward.12} parent=0 // pred_check
    _
  $region15: #{transformer_lm_forward.12} parent=0 // pred_check_branch
    %17 = sbr.rel (0) target = $region17
  $region16: #{transformer_lm_forward.12} parent=0 // pred_region
    _
  $region17: #{transformer_lm_forward.12} parent=0 // pred_fallthru
    _
  // Predicated region
  $region18: #{transformer_lm_forward.12} parent=0 // pred_check
    _
  $region19: #{transformer_lm_forward.12} parent=0 // pred_check_branch
    %19 = sbr.rel (0) target = $region21
  $region20: #{transformer_lm_forward.12} parent=0 // pred_region
    _
  $region21: #{transformer_lm_forward.12} parent=0 // pred_fallthru
    _
  %p21 = scmp.eq.s32.totalorder 0, 0
  // Predicated region
  $region22: #{transformer_lm_forward.12} parent=0 // pred_check
    %p22 = pneg %p21
  $region23: #{transformer_lm_forward.12} parent=0 // pred_check_branch
    %24 = sbr.rel (%p22) target = $region25
  $region24: #{transformer_lm_forward.12} parent=0 // pred_region
    %v25 = vld [vmem:[%s0] sm:$0xff]
    %v26 = vld [vmem:[%s0 + $0x8] sm:$0xff]
    %v27 = vld [vmem:[%s0 + $0x10] sm:$0xff]
    %v28 = vld [vmem:[%s0 + $0x18] sm:$0xff]
    %v29 = vmul.f32 %v25, %v25
    %v30 = vmul.f32 %v26, %v26
    %v31 = vmul.f32 %v27, %v27
    %v32 = vmul.f32 %v28, %v28
    %33 = vadd.xlane.f32.xlu0 %v29
    %v34 = vpop.xlane.xlu0 %33
    %35 = vadd.xlane.f32.xlu0 %v30
    %v36 = vpop.xlane.xlu0 %35
    %37 = vadd.xlane.f32.xlu0 %v31
    %v38 = vpop.xlane.xlu0 %37
    %39 = vadd.xlane.f32.xlu0 %v32
    %v40 = vpop.xlane.xlu0 %39
    %v41 = vrcp.pop 128.0
    %v42 = vmul.f32 %v34, %v41
    %v43 = vmul.f32 %v36, %v41
    %v44 = vmul.f32 %v38, %v41
    %v45 = vmul.f32 %v40, %v41
    %v46 = vadd.f32 %v42, 1e-05
    %v47 = vadd.f32 %v43, 1e-05
    %v48 = vadd.f32 %v44, 1e-05
    %v49 = vadd.f32 %v45, 1e-05
    %v50 = vrsqrt.pop %v46
    %v51 = vrsqrt.pop %v47
    %v52 = vrsqrt.pop %v48
    %v53 = vrsqrt.pop %v49
    %v54 = vmul.f32 %v25, %v50
    %v55 = vmul.f32 %v26, %v51
    %v56 = vmul.f32 %v27, %v52
    %v57 = vmul.f32 %v28, %v53
    %v58 = vld [vmem:[%s1] sm:$0x1]
    %v60 = vlaneseq
    %v61 = vshrl.u32 %v60, 7
    %v62 = vsub.s32 0, %v61
    %v63 = vrot.slane %v58, %v62
    %v65 = vmul.f32 %v54, %v63
    %v66 = vmul.f32 %v55, %v63
    %v67 = vmul.f32 %v56, %v63
    %v68 = vmul.f32 %v57, %v63
    %v69 = vpack.c.bf16 %v66, %v65
    %v70 = vpack.c.bf16 %v68, %v67
    %v73 = vunpack.c.l.b16 %v69
    %v74 = vunpack.c.h.b16 %v69
    %v75 = vunpack.c.l.b16 %v70
    %v76 = vunpack.c.h.b16 %v70
    %v77 = vpack.c.b16 %v73, %v73
    %v78 = vpack.c.b16 %v74, %v74
    %v79 = vpack.c.b16 %v75, %v75
    %v80 = vpack.c.b16 %v76, %v76
    %85 = vst [vmem:[#allocation3] sm:$0xf] %v77
    %86 = vst [vmem:[#allocation3 + $0x4] sm:$0xf] %v78
    %87 = vst [vmem:[#allocation3 + $0x8] sm:$0xf] %v79
    %88 = vst [vmem:[#allocation3 + $0xc] sm:$0xf] %v80
    %89 = vst [vmem:[#allocation2] sm:$0xff] 0.0
    %90 = vst [vmem:[#allocation2 + $0x8] sm:$0xff] 0.0
    %91 = vst [vmem:[#allocation2 + $0x10] sm:$0xff] 0.0
    %92 = vst [vmem:[#allocation2 + $0x18] sm:$0xff] 0.0
  $region25: #{transformer_lm_forward.12} parent=0 // pred_fallthru
    _
  %v93 = vld [vmem:[#allocation3] sm:$0xf]
  %v94 = vld [vmem:[#allocation3 + $0x4] sm:$0xf]
  %v95 = vld [vmem:[#allocation3 + $0x8] sm:$0xf]
  %v96 = vld [vmem:[#allocation3 + $0xc] sm:$0xf]
  %v97 = vld [vmem:[%s2] sm:$0xff]
  %v98 = vld [vmem:[%s2 + $0x8] sm:$0xff]
  %v99 = vld [vmem:[%s2 + $0x10] sm:$0xff]
  %v100 = vld [vmem:[%s2 + $0x18] sm:$0xff]
  %v101 = vld [vmem:[%s2 + $0x20] sm:$0xff]
  %v102 = vld [vmem:[%s2 + $0x28] sm:$0xff]
  %v103 = vld [vmem:[%s2 + $0x30] sm:$0xff]
  %v104 = vld [vmem:[%s2 + $0x38] sm:$0xff]
  %v105 = vld [vmem:[%s2 + $0x40] sm:$0xff]
  %v106 = vld [vmem:[%s2 + $0x48] sm:$0xff]
  %v107 = vld [vmem:[%s2 + $0x50] sm:$0xff]
  %v108 = vld [vmem:[%s2 + $0x58] sm:$0xff]
  %v109 = vld [vmem:[%s2 + $0x60] sm:$0xff]
  %v110 = vld [vmem:[%s2 + $0x68] sm:$0xff]
  %v111 = vld [vmem:[%s2 + $0x70] sm:$0xff]
  %v112 = vld [vmem:[%s2 + $0x78] sm:$0xff]
  %v117 = vunpack.c.l.b16 %v93
  %v118 = vunpack.c.l.b16 %v94
  %v119 = vunpack.c.l.b16 %v95
  %v120 = vunpack.c.l.b16 %v96
  %v121 = vpack.c.b16 %v118, %v117
  %v122 = vpack.c.b16 %v120, %v119
  %v141 = vunpack.c.l.b16 %v97
  %v142 = vunpack.c.h.b16 %v97
  %v143 = vunpack.c.l.b16 %v98
  %v144 = vunpack.c.h.b16 %v98
  %v145 = vunpack.c.l.b16 %v99
  %v146 = vunpack.c.h.b16 %v99
  %v147 = vunpack.c.l.b16 %v100
  %v148 = vunpack.c.h.b16 %v100
  %v149 = vunpack.c.l.b16 %v101
  %v150 = vunpack.c.h.b16 %v101
  %v151 = vunpack.c.l.b16 %v102
  %v152 = vunpack.c.h.b16 %v102
  %v153 = vunpack.c.l.b16 %v103
  %v154 = vunpack.c.h.b16 %v103
  %v155 = vunpack.c.l.b16 %v104
  %v156 = vunpack.c.h.b16 %v104
  %v157 = vunpack.c.l.b16 %v105
  %v158 = vunpack.c.h.b16 %v105
  %v159 = vunpack.c.l.b16 %v106
  %v160 = vunpack.c.h.b16 %v106
  %v161 = vunpack.c.l.b16 %v107
  %v162 = vunpack.c.h.b16 %v107
  %v163 = vunpack.c.l.b16 %v108
  %v164 = vunpack.c.h.b16 %v108
  %v165 = vunpack.c.l.b16 %v109
  %v166 = vunpack.c.h.b16 %v109
  %v167 = vunpack.c.l.b16 %v110
  %v168 = vunpack.c.h.b16 %v110
  %v169 = vunpack.c.l.b16 %v111
  %v170 = vunpack.c.h.b16 %v111
  %v171 = vunpack.c.l.b16 %v112
  %v172 = vunpack.c.h.b16 %v112
  %v173 = vpack.c.b16 %v143, %v141
  %v174 = vpack.c.b16 %v144, %v142
  %v175 = vpack.c.b16 %v147, %v145
  %v176 = vpack.c.b16 %v148, %v146
  %v177 = vpack.c.b16 %v151, %v149
  %v178 = vpack.c.b16 %v152, %v150
  %v179 = vpack.c.b16 %v155, %v153
  %v180 = vpack.c.b16 %v156, %v154
  %v181 = vpack.c.b16 %v159, %v157
  %v182 = vpack.c.b16 %v160, %v158
  %v183 = vpack.c.b16 %v163, %v161
  %v184 = vpack.c.b16 %v164, %v162
  %v185 = vpack.c.b16 %v167, %v165
  %v186 = vpack.c.b16 %v168, %v166
  %v187 = vpack.c.b16 %v171, %v169
  %v188 = vpack.c.b16 %v172, %v170
  %205 = vmatprep.subr.bf16.mxu0 %v188
  %206 = vmatpush1.bf16.msra.mxu0 %v187
  %207 = vmatprep.subr.bf16.mxu0 %v186
  %208 = vmatpush1.bf16.msra.mxu0 %v185
  %209 = vmatprep.subr.bf16.mxu0 %v184
  %210 = vmatpush1.bf16.msra.mxu0 %v183
  %211 = vmatprep.subr.bf16.mxu0 %v182
  %212 = vmatpush1.bf16.msra.mxu0 %v181
  %213 = vmatprep.subr.bf16.mxu0 %v180
  %214 = vmatpush1.bf16.msra.mxu0 %v179
  %215 = vmatprep.subr.bf16.mxu0 %v178
  %216 = vmatpush1.bf16.msra.mxu0 %v177
  %217 = vmatprep.subr.bf16.mxu0 %v176
  %218 = vmatpush1.bf16.msra.mxu0 %v175
  %219 = vmatprep.subr.bf16.mxu0 %v174
  %220 = vmatpush1.bf16.msra.mxu0 %v173
  %221 = vmatprep.subr.bf16.mxu0 0
  %222 = vmatpush2.bf16.msra.mxu0 0
  %223 = vmatprep.subr.bf16.mxu0 0
  %224 = vmatpush2.bf16.msra.mxu0 0
  %225 = vmatprep.subr.bf16.mxu0 0
  %226 = vmatpush2.bf16.msra.mxu0 0
  %227 = vmatprep.subr.bf16.mxu0 0
  %228 = vmatpush2.bf16.msra.mxu0 0
  %229 = vmatprep.subr.bf16.mxu0 0
  %230 = vmatpush2.bf16.msra.mxu0 0
  %231 = vmatprep.subr.bf16.mxu0 0
  %232 = vmatpush2.bf16.msra.mxu0 0
  %233 = vmatprep.subr.bf16.mxu0 0
  %234 = vmatpush2.bf16.msra.mxu0 0
  %235 = vmatprep.subr.bf16.mxu0 0
  %236 = vmatpush2.bf16.msra.mxu0 0
  %237 = vmatprep.mubr.bf16.mxu0 0
  %238 = vmatmul.mubr.bf16.gmra.mxu0 %v121
  %v239 = vpop.f32.mrf.mxu0
  %v240 = vadd.f32 0.0, %v239
  %v241 = vpop.f32.mrf.mxu0
  %v242 = vadd.f32 0.0, %v241
  %v243 = vpop.f32.mrf.mxu0
  %v244 = vadd.f32 0.0, %v243
  %v245 = vpop.f32.mrf.mxu0
  %v246 = vadd.f32 0.0, %v245
  %247 = vmatprep.mubr.bf16.mxu0 0
  %248 = vmatmul.mubr.bf16.gmra.mxu0 %v122
  %v249 = vpop.f32.mrf.mxu0
  %v250 = vadd.f32 0.0, %v249
  %v251 = vpop.f32.mrf.mxu0
  %v252 = vadd.f32 0.0, %v251
  %v253 = vpop.f32.mrf.mxu0
  %v254 = vadd.f32 0.0, %v253
  %v255 = vpop.f32.mrf.mxu0
  %v256 = vadd.f32 0.0, %v255
  %257 = vdwg.mxu0
  %v258 = vld [vmem:[%s3] sm:$0xff]
  %v259 = vld [vmem:[%s3 + $0x8] sm:$0xff]
  %v260 = vld [vmem:[%s3 + $0x10] sm:$0xff]
  %v261 = vld [vmem:[%s3 + $0x18] sm:$0xff]
  %v262 = vld [vmem:[%s3 + $0x20] sm:$0xff]
  %v263 = vld [vmem:[%s3 + $0x28] sm:$0xff]
  %v264 = vld [vmem:[%s3 + $0x30] sm:$0xff]
  %v265 = vld [vmem:[%s3 + $0x38] sm:$0xff]
  %v266 = vld [vmem:[%s3 + $0x40] sm:$0xff]
  %v267 = vld [vmem:[%s3 + $0x48] sm:$0xff]
  %v268 = vld [vmem:[%s3 + $0x50] sm:$0xff]
  %v269 = vld [vmem:[%s3 + $0x58] sm:$0xff]
  %v270 = vld [vmem:[%s3 + $0x60] sm:$0xff]
  %v271 = vld [vmem:[%s3 + $0x68] sm:$0xff]
  %v272 = vld [vmem:[%s3 + $0x70] sm:$0xff]
  %v273 = vld [vmem:[%s3 + $0x78] sm:$0xff]
  %v290 = vunpack.c.l.b16 %v258
  %v291 = vunpack.c.h.b16 %v258
  %v292 = vunpack.c.l.b16 %v259
  %v293 = vunpack.c.h.b16 %v259
  %v294 = vunpack.c.l.b16 %v260
  %v295 = vunpack.c.h.b16 %v260
  %v296 = vunpack.c.l.b16 %v261
  %v297 = vunpack.c.h.b16 %v261
  %v298 = vunpack.c.l.b16 %v262
  %v299 = vunpack.c.h.b16 %v262
  %v300 = vunpack.c.l.b16 %v263
  %v301 = vunpack.c.h.b16 %v263
  %v302 = vunpack.c.l.b16 %v264
  %v303 = vunpack.c.h.b16 %v264
  %v304 = vunpack.c.l.b16 %v265
  %v305 = vunpack.c.h.b16 %v265
  %v306 = vunpack.c.l.b16 %v266
  %v307 = vunpack.c.h.b16 %v266
  %v308 = vunpack.c.l.b16 %v267
  %v309 = vunpack.c.h.b16 %v267
  %v310 = vunpack.c.l.b16 %v268
  %v311 = vunpack.c.h.b16 %v268
  %v312 = vunpack.c.l.b16 %v269
  %v313 = vunpack.c.h.b16 %v269
  %v314 = vunpack.c.l.b16 %v270
  %v315 = vunpack.c.h.b16 %v270
  %v316 = vunpack.c.l.b16 %v271
  %v317 = vunpack.c.h.b16 %v271
  %v318 = vunpack.c.l.b16 %v272
  %v319 = vunpack.c.h.b16 %v272
  %v320 = vunpack.c.l.b16 %v273
  %v321 = vunpack.c.h.b16 %v273
  %v322 = vpack.c.b16 %v292, %v290
  %v323 = vpack.c.b16 %v293, %v291
  %v324 = vpack.c.b16 %v296, %v294
  %v325 = vpack.c.b16 %v297, %v295
  %v326 = vpack.c.b16 %v300, %v298
  %v327 = vpack.c.b16 %v301, %v299
  %v328 = vpack.c.b16 %v304, %v302
  %v329 = vpack.c.b16 %v305, %v303
  %v330 = vpack.c.b16 %v308, %v306
  %v331 = vpack.c.b16 %v309, %v307
  %v332 = vpack.c.b16 %v312, %v310
  %v333 = vpack.c.b16 %v313, %v311
  %v334 = vpack.c.b16 %v316, %v314
  %v335 = vpack.c.b16 %v317, %v315
  %v336 = vpack.c.b16 %v320, %v318
  %v337 = vpack.c.b16 %v321, %v319
  %354 = vmatprep.subr.bf16.mxu0 %v337
  %355 = vmatpush1.bf16.msra.mxu0 %v336
  %356 = vmatprep.subr.bf16.mxu0 %v335
  %357 = vmatpush1.bf16.msra.mxu0 %v334
  %358 = vmatprep.subr.bf16.mxu0 %v333
  %359 = vmatpush1.bf16.msra.mxu0 %v332
  %360 = vmatprep.subr.bf16.mxu0 %v331
  %361 = vmatpush1.bf16.msra.mxu0 %v330
  %362 = vmatprep.subr.bf16.mxu0 %v329
  %363 = vmatpush1.bf16.msra.mxu0 %v328
  %364 = vmatprep.subr.bf16.mxu0 %v327
  %365 = vmatpush1.bf16.msra.mxu0 %v326
  %366 = vmatprep.subr.bf16.mxu0 %v325
  %367 = vmatpush1.bf16.msra.mxu0 %v324
  %368 = vmatprep.subr.bf16.mxu0 %v323
  %369 = vmatpush1.bf16.msra.mxu0 %v322
  %370 = vmatprep.subr.bf16.mxu0 0
  %371 = vmatpush2.bf16.msra.mxu0 0
  %372 = vmatprep.subr.bf16.mxu0 0
  %373 = vmatpush2.bf16.msra.mxu0 0
  %374 = vmatprep.subr.bf16.mxu0 0
  %375 = vmatpush2.bf16.msra.mxu0 0
  %376 = vmatprep.subr.bf16.mxu0 0
  %377 = vmatpush2.bf16.msra.mxu0 0
  %378 = vmatprep.subr.bf16.mxu0 0
  %379 = vmatpush2.bf16.msra.mxu0 0
  %380 = vmatprep.subr.bf16.mxu0 0
  %381 = vmatpush2.bf16.msra.mxu0 0
  %382 = vmatprep.subr.bf16.mxu0 0
  %383 = vmatpush2.bf16.msra.mxu0 0
  %384 = vmatprep.subr.bf16.mxu0 0
  %385 = vmatpush2.bf16.msra.mxu0 0
  %386 = vmatprep.mubr.bf16.mxu0 0
  %387 = vmatmul.mubr.bf16.gmra.mxu0 %v121
  %v388 = vpop.f32.mrf.mxu0
  %v389 = vadd.f32 0.0, %v388
  %v390 = vpop.f32.mrf.mxu0
  %v391 = vadd.f32 0.0, %v390
  %v392 = vpop.f32.mrf.mxu0
  %v393 = vadd.f32 0.0, %v392
  %v394 = vpop.f32.mrf.mxu0
  %v395 = vadd.f32 0.0, %v394
  %396 = vmatprep.mubr.bf16.mxu0 0
  %397 = vmatmul.mubr.bf16.gmra.mxu0 %v122
  %v398 = vpop.f32.mrf.mxu0
  %v399 = vadd.f32 0.0, %v398
  %v400 = vpop.f32.mrf.mxu0
  %v401 = vadd.f32 0.0, %v400
  %v402 = vpop.f32.mrf.mxu0
  %v403 = vadd.f32 0.0, %v402
  %v404 = vpop.f32.mrf.mxu0
  %v405 = vadd.f32 0.0, %v404
  %406 = vdwg.mxu0
  %v407 = vxor.u32 %v240, 2147483648
  %v408 = vxor.u32 %v242, 2147483648
  %v409 = vxor.u32 %v244, 2147483648
  %v410 = vxor.u32 %v246, 2147483648
  %v411 = vxor.u32 %v250, 2147483648
  %v412 = vxor.u32 %v252, 2147483648
  %v413 = vxor.u32 %v254, 2147483648
  %v414 = vxor.u32 %v256, 2147483648
  %v415 = vmul.f32 %v407, 1.442695
  %v416 = vpow.pop %v415
  %v417 = vmul.f32 %v408, 1.442695
  %v418 = vpow.pop %v417
  %v419 = vmul.f32 %v409, 1.442695
  %v420 = vpow.pop %v419
  %v421 = vmul.f32 %v410, 1.442695
  %v422 = vpow.pop %v421
  %v423 = vmul.f32 %v411, 1.442695
  %v424 = vpow.pop %v423
  %v425 = vmul.f32 %v412, 1.442695
  %v426 = vpow.pop %v425
  %v427 = vmul.f32 %v413, 1.442695
  %v428 = vpow.pop %v427
  %v429 = vmul.f32 %v414, 1.442695
  %v430 = vpow.pop %v429
  %v431 = vadd.f32 %v416, 1.0
  %v432 = vadd.f32 %v418, 1.0
  %v433 = vadd.f32 %v420, 1.0
  %v434 = vadd.f32 %v422, 1.0
  %v435 = vadd.f32 %v424, 1.0
  %v436 = vadd.f32 %v426, 1.0
  %v437 = vadd.f32 %v428, 1.0
  %v438 = vadd.f32 %v430, 1.0
  %v439 = vrcp.pop %v431
  %v440 = vmul.f32 1.0, %v439
  %v441 = vrcp.pop %v432
  %v442 = vmul.f32 1.0, %v441
  %v443 = vrcp.pop %v433
  %v444 = vmul.f32 1.0, %v443
  %v445 = vrcp.pop %v434
  %v446 = vmul.f32 1.0, %v445
  %v447 = vrcp.pop %v435
  %v448 = vmul.f32 1.0, %v447
  %v449 = vrcp.pop %v436
  %v450 = vmul.f32 1.0, %v449
  %v451 = vrcp.pop %v437
  %v452 = vmul.f32 1.0, %v451
  %v453 = vrcp.pop %v438
  %v454 = vmul.f32 1.0, %v453
  %v455 = vmul.f32 %v240, %v440
  %v456 = vmul.f32 %v242, %v442
  %v457 = vmul.f32 %v244, %v444
  %v458 = vmul.f32 %v246, %v446
  %v459 = vmul.f32 %v250, %v448
  %v460 = vmul.f32 %v252, %v450
  %v461 = vmul.f32 %v254, %v452
  %v462 = vmul.f32 %v256, %v454
  %v463 = vmul.f32 %v455, %v389
  %v464 = vmul.f32 %v456, %v391
  %v465 = vmul.f32 %v457, %v393
  %v466 = vmul.f32 %v458, %v395
  %v467 = vmul.f32 %v459, %v399
  %v468 = vmul.f32 %v460, %v401
  %v469 = vmul.f32 %v461, %v403
  %v470 = vmul.f32 %v462, %v405
  %v471 = vld [vmem:[#allocation2] sm:$0xff]
  %v472 = vld [vmem:[#allocation2 + $0x8] sm:$0xff]
  %v473 = vld [vmem:[#allocation2 + $0x10] sm:$0xff]
  %v474 = vld [vmem:[#allocation2 + $0x18] sm:$0xff]
  %v475 = vpack.c.bf16 %v465, %v463
  %v476 = vpack.c.bf16 %v466, %v464
  %v477 = vpack.c.bf16 %v469, %v467
  %v478 = vpack.c.bf16 %v470, %v468
  %v479 = vld [vmem:[%s4] sm:$0xf]
  %v480 = vld [vmem:[%s4 + $0x4] sm:$0xf]
  %v481 = vld [vmem:[%s4 + $0x8] sm:$0xf]
  %v482 = vld [vmem:[%s4 + $0xc] sm:$0xf]
  %v483 = vld [vmem:[%s4 + $0x10] sm:$0xf]
  %v484 = vld [vmem:[%s4 + $0x14] sm:$0xf]
  %v485 = vld [vmem:[%s4 + $0x18] sm:$0xf]
  %v486 = vld [vmem:[%s4 + $0x1c] sm:$0xf]
  %v487 = vld [vmem:[%s4 + $0x20] sm:$0xf]
  %v488 = vld [vmem:[%s4 + $0x24] sm:$0xf]
  %v489 = vld [vmem:[%s4 + $0x28] sm:$0xf]
  %v490 = vld [vmem:[%s4 + $0x2c] sm:$0xf]
  %v491 = vld [vmem:[%s4 + $0x30] sm:$0xf]
  %v492 = vld [vmem:[%s4 + $0x34] sm:$0xf]
  %v493 = vld [vmem:[%s4 + $0x38] sm:$0xf]
  %v494 = vld [vmem:[%s4 + $0x3c] sm:$0xf]
  %v495 = vld [vmem:[%s4 + $0x40] sm:$0xf]
  %v496 = vld [vmem:[%s4 + $0x44] sm:$0xf]
  %v497 = vld [vmem:[%s4 + $0x48] sm:$0xf]
  %v498 = vld [vmem:[%s4 + $0x4c] sm:$0xf]
  %v499 = vld [vmem:[%s4 + $0x50] sm:$0xf]
  %v500 = vld [vmem:[%s4 + $0x54] sm:$0xf]
  %v501 = vld [vmem:[%s4 + $0x58] sm:$0xf]
  %v502 = vld [vmem:[%s4 + $0x5c] sm:$0xf]
  %v503 = vld [vmem:[%s4 + $0x60] sm:$0xf]
  %v504 = vld [vmem:[%s4 + $0x64] sm:$0xf]
  %v505 = vld [vmem:[%s4 + $0x68] sm:$0xf]
  %v506 = vld [vmem:[%s4 + $0x6c] sm:$0xf]
  %v507 = vld [vmem:[%s4 + $0x70] sm:$0xf]
  %v508 = vld [vmem:[%s4 + $0x74] sm:$0xf]
  %v509 = vld [vmem:[%s4 + $0x78] sm:$0xf]
  %v510 = vld [vmem:[%s4 + $0x7c] sm:$0xf]
  %v543 = vunpack.c.l.b16 %v479
  %v544 = vunpack.c.l.b16 %v480
  %v545 = vunpack.c.l.b16 %v481
  %v546 = vunpack.c.l.b16 %v482
  %v547 = vunpack.c.l.b16 %v483
  %v548 = vunpack.c.l.b16 %v484
  %v549 = vunpack.c.l.b16 %v485
  %v550 = vunpack.c.l.b16 %v486
  %v551 = vunpack.c.l.b16 %v487
  %v552 = vunpack.c.l.b16 %v488
  %v553 = vunpack.c.l.b16 %v489
  %v554 = vunpack.c.l.b16 %v490
  %v555 = vunpack.c.l.b16 %v491
  %v556 = vunpack.c.l.b16 %v492
  %v557 = vunpack.c.l.b16 %v493
  %v558 = vunpack.c.l.b16 %v494
  %v559 = vunpack.c.l.b16 %v495
  %v560 = vunpack.c.l.b16 %v496
  %v561 = vunpack.c.l.b16 %v497
  %v562 = vunpack.c.l.b16 %v498
  %v563 = vunpack.c.l.b16 %v499
  %v564 = vunpack.c.l.b16 %v500
  %v565 = vunpack.c.l.b16 %v501
  %v566 = vunpack.c.l.b16 %v502
  %v567 = vunpack.c.l.b16 %v503
  %v568 = vunpack.c.l.b16 %v504
  %v569 = vunpack.c.l.b16 %v505
  %v570 = vunpack.c.l.b16 %v506
  %v571 = vunpack.c.l.b16 %v507
  %v572 = vunpack.c.l.b16 %v508
  %v573 = vunpack.c.l.b16 %v509
  %v574 = vunpack.c.l.b16 %v510
  %v575 = vpack.c.b16 %v544, %v543
  %v576 = vpack.c.b16 %v546, %v545
  %v577 = vpack.c.b16 %v548, %v547
  %v578 = vpack.c.b16 %v550, %v549
  %v579 = vpack.c.b16 %v552, %v551
  %v580 = vpack.c.b16 %v554, %v553
  %v581 = vpack.c.b16 %v556, %v555
  %v582 = vpack.c.b16 %v558, %v557
  %v583 = vpack.c.b16 %v560, %v559
  %v584 = vpack.c.b16 %v562, %v561
  %v585 = vpack.c.b16 %v564, %v563
  %v586 = vpack.c.b16 %v566, %v565
  %v587 = vpack.c.b16 %v568, %v567
  %v588 = vpack.c.b16 %v570, %v569
  %v589 = vpack.c.b16 %v572, %v571
  %v590 = vpack.c.b16 %v574, %v573
  %607 = vmatprep.subr.bf16.mxu0 0
  %608 = vmatpush1.bf16.msra.mxu0 %v582
  %609 = vmatprep.subr.bf16.mxu0 0
  %610 = vmatpush1.bf16.msra.mxu0 %v581
  %611 = vmatprep.subr.bf16.mxu0 0
  %612 = vmatpush1.bf16.msra.mxu0 %v580
  %613 = vmatprep.subr.bf16.mxu0 0
  %614 = vmatpush1.bf16.msra.mxu0 %v579
  %615 = vmatprep.subr.bf16.mxu0 0
  %616 = vmatpush1.bf16.msra.mxu0 %v578
  %617 = vmatprep.subr.bf16.mxu0 0
  %618 = vmatpush1.bf16.msra.mxu0 %v577
  %619 = vmatprep.subr.bf16.mxu0 0
  %620 = vmatpush1.bf16.msra.mxu0 %v576
  %621 = vmatprep.subr.bf16.mxu0 0
  %622 = vmatpush1.bf16.msra.mxu0 %v575
  %623 = vmatprep.subr.bf16.mxu0 0
  %624 = vmatpush2.bf16.msra.mxu0 %v590
  %625 = vmatprep.subr.bf16.mxu0 0
  %626 = vmatpush2.bf16.msra.mxu0 %v589
  %627 = vmatprep.subr.bf16.mxu0 0
  %628 = vmatpush2.bf16.msra.mxu0 %v588
  %629 = vmatprep.subr.bf16.mxu0 0
  %630 = vmatpush2.bf16.msra.mxu0 %v587
  %631 = vmatprep.subr.bf16.mxu0 0
  %632 = vmatpush2.bf16.msra.mxu0 %v586
  %633 = vmatprep.subr.bf16.mxu0 0
  %634 = vmatpush2.bf16.msra.mxu0 %v585
  %635 = vmatprep.subr.bf16.mxu0 0
  %636 = vmatpush2.bf16.msra.mxu0 %v584
  %637 = vmatprep.subr.bf16.mxu0 0
  %638 = vmatpush2.bf16.msra.mxu0 %v583
  %639 = vmatprep.mubr.bf16.mxu0 %v476
  %640 = vmatmul.mubr.bf16.gmra.mxu0 %v475
  %v641 = vpop.f32.mrf.mxu0
  %v642 = vadd.f32 0.0, %v641
  %v643 = vpop.f32.mrf.mxu0
  %v644 = vpop.f32.mrf.mxu0
  %v645 = vadd.f32 0.0, %v644
  %v646 = vpop.f32.mrf.mxu0
  %647 = vmatprep.mubr.bf16.mxu0 %v478
  %648 = vmatmul.mubr.bf16.gmra.mxu0 %v477
  %v649 = vpop.f32.mrf.mxu0
  %v650 = vadd.f32 0.0, %v649
  %v651 = vpop.f32.mrf.mxu0
  %v652 = vpop.f32.mrf.mxu0
  %v653 = vadd.f32 0.0, %v652
  %v654 = vpop.f32.mrf.mxu0
  %655 = vdwg.mxu0
  %v656 = vadd.f32 %v471, %v642
  %v657 = vadd.f32 %v472, %v645
  %v658 = vadd.f32 %v473, %v650
  %v659 = vadd.f32 %v474, %v653
  %660 = vst [vmem:[#allocation2] sm:$0xff] %v656
  %661 = vst [vmem:[#allocation2 + $0x8] sm:$0xff] %v657
  %662 = vst [vmem:[#allocation2 + $0x10] sm:$0xff] %v658
  %663 = vst [vmem:[#allocation2 + $0x18] sm:$0xff] %v659
  // Predicated region
  $region26: #{transformer_lm_forward.12} parent=0 // pred_check
    %p664 = pneg %p21
  $region27: #{transformer_lm_forward.12} parent=0 // pred_check_branch
    %666 = sbr.rel (%p664) target = $region29
  $region28: #{transformer_lm_forward.12} parent=0 // pred_region
    %v667 = vld [vmem:[%s0] sm:$0xff]
    %v668 = vld [vmem:[%s0 + $0x8] sm:$0xff]
    %v669 = vld [vmem:[%s0 + $0x10] sm:$0xff]
    %v670 = vld [vmem:[%s0 + $0x18] sm:$0xff]
    %v671 = vld [vmem:[#allocation2] sm:$0xff]
    %v672 = vld [vmem:[#allocation2 + $0x8] sm:$0xff]
    %v673 = vld [vmem:[#allocation2 + $0x10] sm:$0xff]
    %v674 = vld [vmem:[#allocation2 + $0x18] sm:$0xff]
    %v675 = vadd.f32 %v667, %v671
    %v676 = vadd.f32 %v668, %v672
    %v677 = vadd.f32 %v669, %v673
    %v678 = vadd.f32 %v670, %v674
    %679 = vst [vmem:[%s5] sm:$0xff] %v675
    %680 = vst [vmem:[%s5 + $0x8] sm:$0xff] %v676
    %681 = vst [vmem:[%s5 + $0x10] sm:$0xff] %v677
    %682 = vst [vmem:[%s5 + $0x18] sm:$0xff] %v678
  $region29: #{transformer_lm_forward.12} parent=0 // pred_fallthru
    _
  // Predicated region
  $region30: #{transformer_lm_forward.12} parent=0 // pred_check
    _
  $region31: #{transformer_lm_forward.12} parent=0 // pred_check_branch
    %684 = sbr.rel (0) target = $region33
  $region32: #{transformer_lm_forward.12} parent=0 // pred_region
    _
  $region33: #{transformer_lm_forward.12} parent=0 // pred_fallthru
    _
  // Predicated region
  $region34: #{transformer_lm_forward.12} parent=0 // pred_check
    _
  $region35: #{transformer_lm_forward.12} parent=0 // pred_check_branch
    %686 = sbr.rel (0) target = $region37
  $region36: #{transformer_lm_forward.12} parent=0 // pred_region
    _
  $region37: #{transformer_lm_forward.12} parent=0 // pred_fallthru
    _

// kernel: transformer_lm_forward.17
$region0: #{transformer_lm_forward.17}
  #allocation0 [shape = 'u32[]', space=smem, size = 0x4, offset = 0x4, fixed_abs, tag = 'smem constant byte address 0x4 - core index']
  #allocation1 [shape = 'u32[144,128]{1,0:T(1,128)}', space=vmem, size = 0x12000, scoped, tag = 'internal scratch']
  #allocation2 [shape = 'bf16[32,128]{1,0:T(8,128)(2,1)}', space=vmem, size = 0x2000, scoped, tag = 'scratch operand']
  %s0 = inlined_call_operand.vmem [shape: f32[32,128], index: 0, kind: input, shape index: {}]
  %s1 = inlined_call_operand.vmem [shape: f32[1,128], index: 1, kind: input, shape index: {}]
  %s2 = inlined_call_operand.vmem [shape: bf16[128,256], index: 2, kind: input, shape index: {}]
  %s3 = inlined_call_operand.hbm [shape: f32[32,256], index: 3, kind: output, shape index: {}]
  %s4 = sld [smem:[#allocation0]]
  $region26: #{transformer_lm_forward.17} parent=0
    _
  %s6 = ssub.s32 1, %s4
  %s7 = scalar_select 0, %s6, %s4
  $region1: #{transformer_lm_forward.17} parent=0
    #allocation3 [shape = 'u8[32768]{0}', space=vmem, size = 0x8000, scoped, tag = 'output window, operand 0, single buffered']
    #allocation4 [shape = 's32[1]{0}', space=sflag, size = 0x4, scoped, tag = 'scoped memory for transformer_lm_forward.17']
    %8 = vsyncpa [#allocation4], 0
    // Predicated region
    $region2: #{transformer_lm_forward.17} parent=1 // pred_check
      _
    $region3: #{transformer_lm_forward.17} parent=1 // pred_check_branch
      %10 = sbr.rel (0) target = $region5
    $region4: #{transformer_lm_forward.17} parent=1 // pred_region
      _
    $region5: #{transformer_lm_forward.17} parent=1 // pred_fallthru
      _
    // Predicated region
    $region6: #{transformer_lm_forward.17} parent=1 // pred_check
      _
    $region7: #{transformer_lm_forward.17} parent=1 // pred_check_branch
      %12 = sbr.rel (0) target = $region9
    $region8: #{transformer_lm_forward.17} parent=1 // pred_region
      _
    $region9: #{transformer_lm_forward.17} parent=1 // pred_fallthru
      _
    // Predicated region
    $region10: #{transformer_lm_forward.17} parent=1 // pred_check
      _
    $region11: #{transformer_lm_forward.17} parent=1 // pred_check_branch
      %14 = sbr.rel (0) target = $region13
    $region12: #{transformer_lm_forward.17} parent=1 // pred_region
      _
    $region13: #{transformer_lm_forward.17} parent=1 // pred_fallthru
      _
    %p16 = scmp.eq.s32.totalorder 0, 0
    // Predicated region
    $region14: #{transformer_lm_forward.17} parent=1 // pred_check
      %p17 = pneg %p16
    $region15: #{transformer_lm_forward.17} parent=1 // pred_check_branch
      %19 = sbr.rel (%p17) target = $region17
    $region16: #{transformer_lm_forward.17} parent=1 // pred_region
      %v20 = vld [vmem:[%s0] sm:$0xff]
      %v21 = vld [vmem:[%s0 + $0x8] sm:$0xff]
      %v22 = vld [vmem:[%s0 + $0x10] sm:$0xff]
      %v23 = vld [vmem:[%s0 + $0x18] sm:$0xff]
      %v24 = vmul.f32 %v20, %v20
      %v25 = vmul.f32 %v21, %v21
      %v26 = vmul.f32 %v22, %v22
      %v27 = vmul.f32 %v23, %v23
      %28 = vadd.xlane.f32.xlu0 %v24
      %v29 = vpop.xlane.xlu0 %28
      %30 = vadd.xlane.f32.xlu0 %v25
      %v31 = vpop.xlane.xlu0 %30
      %32 = vadd.xlane.f32.xlu0 %v26
      %v33 = vpop.xlane.xlu0 %32
      %34 = vadd.xlane.f32.xlu0 %v27
      %v35 = vpop.xlane.xlu0 %34
      %v36 = vrcp.pop 128.0
      %v37 = vmul.f32 %v29, %v36
      %v38 = vmul.f32 %v31, %v36
      %v39 = vmul.f32 %v33, %v36
      %v40 = vmul.f32 %v35, %v36
      %v41 = vadd.f32 %v37, 1e-05
      %v42 = vadd.f32 %v38, 1e-05
      %v43 = vadd.f32 %v39, 1e-05
      %v44 = vadd.f32 %v40, 1e-05
      %v45 = vrsqrt.pop %v41
      %v46 = vrsqrt.pop %v42
      %v47 = vrsqrt.pop %v43
      %v48 = vrsqrt.pop %v44
      %v49 = vmul.f32 %v20, %v45
      %v50 = vmul.f32 %v21, %v46
      %v51 = vmul.f32 %v22, %v47
      %v52 = vmul.f32 %v23, %v48
      %v53 = vld [vmem:[%s1] sm:$0x1]
      %v55 = vlaneseq
      %v56 = vshrl.u32 %v55, 7
      %v57 = vsub.s32 0, %v56
      %v58 = vrot.slane %v53, %v57
      %v60 = vmul.f32 %v49, %v58
      %v61 = vmul.f32 %v50, %v58
      %v62 = vmul.f32 %v51, %v58
      %v63 = vmul.f32 %v52, %v58
      %v64 = vpack.c.bf16 %v61, %v60
      %v65 = vpack.c.bf16 %v63, %v62
      %v68 = vunpack.c.l.b16 %v64
      %v69 = vunpack.c.h.b16 %v64
      %v70 = vunpack.c.l.b16 %v65
      %v71 = vunpack.c.h.b16 %v65
      %v72 = vpack.c.b16 %v68, %v68
      %v73 = vpack.c.b16 %v69, %v69
      %v74 = vpack.c.b16 %v70, %v70
      %v75 = vpack.c.b16 %v71, %v71
      %80 = vst [vmem:[#allocation2] sm:$0xf] %v72
      %81 = vst [vmem:[#allocation2 + $0x4] sm:$0xf] %v73
      %82 = vst [vmem:[#allocation2 + $0x8] sm:$0xf] %v74
      %83 = vst [vmem:[#allocation2 + $0xc] sm:$0xf] %v75
    $region17: #{transformer_lm_forward.17} parent=1 // pred_fallthru
      _
    %v84 = vld [vmem:[#allocation2] sm:$0xf]
    %v85 = vld [vmem:[#allocation2 + $0x4] sm:$0xf]
    %v86 = vld [vmem:[#allocation2 + $0x8] sm:$0xf]
    %v87 = vld [vmem:[#allocation2 + $0xc] sm:$0xf]
    %v88 = vld [vmem:[%s2] sm:$0xff]
    %v89 = vld [vmem:[%s2 + $0x8] sm:$0xff]
    %v90 = vld [vmem:[%s2 + $0x10] sm:$0xff]
    %v91 = vld [vmem:[%s2 + $0x18] sm:$0xff]
    %v92 = vld [vmem:[%s2 + $0x20] sm:$0xff]
    %v93 = vld [vmem:[%s2 + $0x28] sm:$0xff]
    %v94 = vld [vmem:[%s2 + $0x30] sm:$0xff]
    %v95 = vld [vmem:[%s2 + $0x38] sm:$0xff]
    %v96 = vld [vmem:[%s2 + $0x40] sm:$0xff]
    %v97 = vld [vmem:[%s2 + $0x48] sm:$0xff]
    %v98 = vld [vmem:[%s2 + $0x50] sm:$0xff]
    %v99 = vld [vmem:[%s2 + $0x58] sm:$0xff]
    %v100 = vld [vmem:[%s2 + $0x60] sm:$0xff]
    %v101 = vld [vmem:[%s2 + $0x68] sm:$0xff]
    %v102 = vld [vmem:[%s2 + $0x70] sm:$0xff]
    %v103 = vld [vmem:[%s2 + $0x78] sm:$0xff]
    %v108 = vunpack.c.l.b16 %v84
    %v109 = vunpack.c.l.b16 %v85
    %v110 = vunpack.c.l.b16 %v86
    %v111 = vunpack.c.l.b16 %v87
    %v112 = vpack.c.b16 %v109, %v108
    %v113 = vpack.c.b16 %v111, %v110
    %v132 = vunpack.c.l.b16 %v88
    %v133 = vunpack.c.h.b16 %v88
    %v134 = vunpack.c.l.b16 %v89
    %v135 = vunpack.c.h.b16 %v89
    %v136 = vunpack.c.l.b16 %v90
    %v137 = vunpack.c.h.b16 %v90
    %v138 = vunpack.c.l.b16 %v91
    %v139 = vunpack.c.h.b16 %v91
    %v140 = vunpack.c.l.b16 %v92
    %v141 = vunpack.c.h.b16 %v92
    %v142 = vunpack.c.l.b16 %v93
    %v143 = vunpack.c.h.b16 %v93
    %v144 = vunpack.c.l.b16 %v94
    %v145 = vunpack.c.h.b16 %v94
    %v146 = vunpack.c.l.b16 %v95
    %v147 = vunpack.c.h.b16 %v95
    %v148 = vunpack.c.l.b16 %v96
    %v149 = vunpack.c.h.b16 %v96
    %v150 = vunpack.c.l.b16 %v97
    %v151 = vunpack.c.h.b16 %v97
    %v152 = vunpack.c.l.b16 %v98
    %v153 = vunpack.c.h.b16 %v98
    %v154 = vunpack.c.l.b16 %v99
    %v155 = vunpack.c.h.b16 %v99
    %v156 = vunpack.c.l.b16 %v100
    %v157 = vunpack.c.h.b16 %v100
    %v158 = vunpack.c.l.b16 %v101
    %v159 = vunpack.c.h.b16 %v101
    %v160 = vunpack.c.l.b16 %v102
    %v161 = vunpack.c.h.b16 %v102
    %v162 = vunpack.c.l.b16 %v103
    %v163 = vunpack.c.h.b16 %v103
    %v164 = vpack.c.b16 %v134, %v132
    %v165 = vpack.c.b16 %v135, %v133
    %v166 = vpack.c.b16 %v138, %v136
    %v167 = vpack.c.b16 %v139, %v137
    %v168 = vpack.c.b16 %v142, %v140
    %v169 = vpack.c.b16 %v143, %v141
    %v170 = vpack.c.b16 %v146, %v144
    %v171 = vpack.c.b16 %v147, %v145
    %v172 = vpack.c.b16 %v150, %v148
    %v173 = vpack.c.b16 %v151, %v149
    %v174 = vpack.c.b16 %v154, %v152
    %v175 = vpack.c.b16 %v155, %v153
    %v176 = vpack.c.b16 %v158, %v156
    %v177 = vpack.c.b16 %v159, %v157
    %v178 = vpack.c.b16 %v162, %v160
    %v179 = vpack.c.b16 %v163, %v161
    %196 = vmatprep.subr.bf16.mxu0 %v179
    %197 = vmatpush1.bf16.msra.mxu0 %v178
    %198 = vmatprep.subr.bf16.mxu0 %v177
    %199 = vmatpush1.bf16.msra.mxu0 %v176
    %200 = vmatprep.subr.bf16.mxu0 %v175
    %201 = vmatpush1.bf16.msra.mxu0 %v174
    %202 = vmatprep.subr.bf16.mxu0 %v173
    %203 = vmatpush1.bf16.msra.mxu0 %v172
    %204 = vmatprep.subr.bf16.mxu0 %v171
    %205 = vmatpush1.bf16.msra.mxu0 %v170
    %206 = vmatprep.subr.bf16.mxu0 %v169
    %207 = vmatpush1.bf16.msra.mxu0 %v168
    %208 = vmatprep.subr.bf16.mxu0 %v167
    %209 = vmatpush1.bf16.msra.mxu0 %v166
    %210 = vmatprep.subr.bf16.mxu0 %v165
    %211 = vmatpush1.bf16.msra.mxu0 %v164
    %212 = vmatprep.subr.bf16.mxu0 0
    %213 = vmatpush2.bf16.msra.mxu0 0
    %214 = vmatprep.subr.bf16.mxu0 0
    %215 = vmatpush2.bf16.msra.mxu0 0
    %216 = vmatprep.subr.bf16.mxu0 0
    %217 = vmatpush2.bf16.msra.mxu0 0
    %218 = vmatprep.subr.bf16.mxu0 0
    %219 = vmatpush2.bf16.msra.mxu0 0
    %220 = vmatprep.subr.bf16.mxu0 0
    %221 = vmatpush2.bf16.msra.mxu0 0
    %222 = vmatprep.subr.bf16.mxu0 0
    %223 = vmatpush2.bf16.msra.mxu0 0
    %224 = vmatprep.subr.bf16.mxu0 0
    %225 = vmatpush2.bf16.msra.mxu0 0
    %226 = vmatprep.subr.bf16.mxu0 0
    %227 = vmatpush2.bf16.msra.mxu0 0
    %228 = vmatprep.mubr.bf16.mxu0 0
    %229 = vmatmul.mubr.bf16.gmra.mxu0 %v112
    %v230 = vpop.f32.mrf.mxu0
    %v231 = vadd.f32 0.0, %v230
    %v232 = vpop.f32.mrf.mxu0
    %v233 = vadd.f32 0.0, %v232
    %v234 = vpop.f32.mrf.mxu0
    %v235 = vadd.f32 0.0, %v234
    %v236 = vpop.f32.mrf.mxu0
    %v237 = vadd.f32 0.0, %v236
    %238 = vmatprep.mubr.bf16.mxu0 0
    %239 = vmatmul.mubr.bf16.gmra.mxu0 %v113
    %v240 = vpop.f32.mrf.mxu0
    %v241 = vadd.f32 0.0, %v240
    %v242 = vpop.f32.mrf.mxu0
    %v243 = vadd.f32 0.0, %v242
    %v244 = vpop.f32.mrf.mxu0
    %v245 = vadd.f32 0.0, %v244
    %v246 = vpop.f32.mrf.mxu0
    %v247 = vadd.f32 0.0, %v246
    %248 = vdwg.mxu0
    %249 = vst [vmem:[#allocation3] sm:$0xff] %v231
    %250 = vst [vmem:[#allocation3 + $0x8] sm:$0xff] %v233
    %251 = vst [vmem:[#allocation3 + $0x10] sm:$0xff] %v235
    %252 = vst [vmem:[#allocation3 + $0x18] sm:$0xff] %v237
    %253 = vst [vmem:[#allocation3 + $0x20] sm:$0xff] %v241
    %254 = vst [vmem:[#allocation3 + $0x28] sm:$0xff] %v243
    %255 = vst [vmem:[#allocation3 + $0x30] sm:$0xff] %v245
    %256 = vst [vmem:[#allocation3 + $0x38] sm:$0xff] %v247
    // Predicated region
    $region18: #{transformer_lm_forward.17} parent=1 // pred_check
      _
    $region19: #{transformer_lm_forward.17} parent=1 // pred_check_branch
      %258 = sbr.rel (0) target = $region21
    $region20: #{transformer_lm_forward.17} parent=1 // pred_region
      %s260 = ssub.s32 1024, 1024
      %261 = vsyncadd [#allocation4], %s260
      %s262 = sshll.u32 [#allocation3], 4
      %s263 = int_to_ptr.vmem [resolvable:$true] %s262
      %268 = dma.vmem_to_hbm [thread:$0]  %s263, 1024, %s3, [#allocation4], 256, 256, 16
    $region21: #{transformer_lm_forward.17} parent=1 // pred_fallthru
      _
    // Predicated region
    $region22: #{transformer_lm_forward.17} parent=1 // pred_check
      _
    $region23: #{transformer_lm_forward.17} parent=1 // pred_check_branch
      %270 = sbr.rel (0) target = $region25
    $region24: #{transformer_lm_forward.17} parent=1 // pred_region
      %271 = dma.done [#allocation4], 1024
    $region25: #{transformer_lm_forward.17} parent=1 // pred_fallthru
      _
    %272 = vsyncpa [#allocation4], 1

</llo_original>
